<compile_context>
chip_gen: v7x
topology: tpu7x:2x2x1
jax: 0.10.0
libtpu: 0.0.40
codegen_flags: <defaults>
</compile_context>

<pallas_src>
import functools
import math

import jax
import jax.numpy as jnp
from jax import lax
from jax.experimental import pallas as pl
from jax.experimental.pallas import tpu as pltpu


def attention_lstm_kernel(x_ref, a_ref, wx_ref, whx_ref, b_ref, hn_ref,
                          pre_act_ref, *, l_real, t_unroll):
    T, NB, D = x_ref.shape
    H = a_ref.shape[1]
    Lp = a_ref.shape[2]
    cdt = wx_ref.dtype                               # MXU operand dtype (bf16 default)
    inv_sqrt_h = jnp.float32(1.0 / math.sqrt(H))

    # ---------------- hoisted (once per batch tile) ----------------
    # h0 = c0 = mean over the L real spatial locations (pad columns are zero).
    h0 = jnp.sum(a_ref[...], axis=2) * jnp.float32(1.0 / l_real)     # (NB, H) f32
    c0 = h0

    # Hoisted input projection for all timesteps: one bulk (T*NB, D) @ (D, 4H)
    # MXU matmul (x is time-major, so the flatten is a leading-dim merge), bias
    # folded in, stored straight into VMEM scratch instead of living in vregs.
    pa = jnp.dot(x_ref[...].reshape(T * NB, D), wx_ref[...],
                 preferred_element_type=jnp.float32)
    pre_act_ref[...] = pa + b_ref[...]                               # (T*NB, 4H) f32

    # Lane-padding mask for the spatial axis: a single (1, Lp) row broadcast in
    # the add (keeps vreg pressure independent of the batch tile size).
    if Lp > l_real:
        col = lax.broadcasted_iota(jnp.int32, (1, Lp), 1)
        score_mask = jnp.where(col < l_real, jnp.float32(0.0), jnp.float32(-1e30))
    else:
        score_mask = None

    # ---------------- recurrence ----------------
    def step(t, carry):
        h, c = carry                                 # f32 (NB, H)

        # Re-read A from VMEM every step (3 vld slots/cycle) rather than keeping
        # NB*H*Lp elements live in vregs across the whole serial recurrence.
        A = a_ref[...]                               # (NB, H, Lp) f32

        # Scaled dot-product attention on the VPU/XLU.  These per-sample
        # contractions are matrix-vector (M=1 for scores, N=1 for attn), so the
        # MXU would run at ~1/128 occupancy and serialize NB tiny push/pops;
        # elementwise multiply + cross-lane/sublane reduce keeps the MXU slot
        # free for the recurrent matmul below.
        h_s = h * inv_sqrt_h
        scores = jnp.sum(h_s[:, :, None] * A, axis=1)                # (NB, Lp)
        if score_mask is not None:
            scores = scores + score_mask
        m = jnp.max(scores, axis=1, keepdims=True)
        e = jnp.exp(scores - m)
        denom = jnp.sum(e, axis=1, keepdims=True)
        w = e * pl.reciprocal(denom, approx=True)                    # softmax (NB, Lp)
        attn = jnp.sum(A * w[:, None, :], axis=2)                    # (NB, H)

        # Fused recurrent matmul: h @ Wh + attn @ Wattn == [h, attn] @ [Wh; Wattn]
        # (one MXU push per step; f32 accumulation).
        hz = jnp.concatenate([h, attn], axis=1).astype(cdt)          # (NB, 2H)
        start = pl.multiple_of(t * NB, NB)
        act = pre_act_ref[pl.ds(start, NB), :] + jnp.dot(
            hz, whx_ref[...], preferred_element_type=jnp.float32)    # (NB, 4H)

        gates = jax.nn.sigmoid(act[:, :3 * H])       # i, f, o gates in one EUP pass
        g = jnp.tanh(act[:, 3 * H:])
        i_g = gates[:, :H]
        f_g = gates[:, H:2 * H]
        o_g = gates[:, 2 * H:]
        c_new = f_g * c + i_g * g
        h_new = o_g * jnp.tanh(c_new)

        # Direct time-major store of the hidden state (no h_all scratch, no
        # writeback epilogue; each h is stored exactly once).
        # TODO(synk): for production H not a multiple of 128, pad H to 128 lanes
        # (and slice in the wrapper) so this store is fully unmasked.
        hn_ref[t] = h_new
        return h_new, c_new

    lax.fori_loop(0, T, step, (h0, c0), unroll=t_unroll)


def _vmem_limit_bytes():
    """Generation-aware scoped-VMEM limit (~3/4 of physical, capped at 100 MiB)."""
    cap = 64 * 1024 * 1024                           # conservative fallback (v7x-safe)
    try:
        cap = int(pltpu.get_tpu_info().vmem_capacity_bytes)
    except Exception:
        pass
    return int(min((cap * 3) // 4, 100 * 1024 * 1024))


def _pick_batch_block(N, T, D, H, Lp, mxu_itemsize, vmem_budget):
    """Largest batch tile (multiple of 8, <= 256) that fits the VMEM budget,
    keeping >= 2 grid steps when N allows so both v7x TensorCores get work."""
    def tile_bytes(nb):
        x_b = 2 * nb * T * D * mxu_itemsize          # double-buffered x tile
        a_b = 2 * nb * H * Lp * 4                    # double-buffered A tile (f32)
        out_b = 2 * T * nb * H * 4                   # double-buffered output tile
        pre_b = T * nb * 4 * H * 4                   # pre-activation scratch
        w_b = 2 * (D + 2 * H + 1) * 4 * H * mxu_itemsize   # resident weights
        return x_b + a_b + out_b + pre_b + w_b

    nb = 256
    while nb > 8 and tile_bytes(nb) > vmem_budget:
        nb //= 2
    if N >= 16:
        half = (((N + 1) // 2) + 7) // 8 * 8         # ~N/2 rounded up to sublane tile
        nb = max(8, min(nb, half))
    return min(nb, N)


def attention_lstm_forward(x, A, Wx, Wh, Wattn, b, *,
                           mxu_dtype=jnp.bfloat16, batch_block=None):
    """x: (N, T, D), A: (N, H, Da, Da)  -> hn: (N, T, H)  (PyTorch conventions)."""
    N, T, D = x.shape
    H = A.shape[1]
    L = A.shape[2] * A.shape[3]
    Lp = pl.cdiv(L, 128) * 128                       # lane-dense spatial axis

    cdt = jnp.dtype(mxu_dtype)
    # A only feeds VPU elementwise ops now (attention moved off the MXU), so it
    # stays f32: no per-step upcasts and no bf16 compounding on A itself.
    A_flat = A.reshape(N, H, L).astype(jnp.float32)
    if Lp > L:
        A_flat = jnp.pad(A_flat, ((0, 0), (0, 0), (0, Lp - L)))
    # Time-major x so the hoisted projection / per-step reads are contiguous
    # leading-dim slabs (HBM-level layout plumbing; effectively free).
    x_tm = jnp.swapaxes(x, 0, 1).astype(cdt)         # (T, N, D)
    Wx_c = Wx.astype(cdt)
    Whx = jnp.concatenate([Wh, Wattn], axis=0).astype(cdt)   # (2H, 4H)
    b2 = b.reshape(1, 4 * H).astype(jnp.float32)

    vmem_limit = _vmem_limit_bytes()
    if batch_block is None:
        nb = _pick_batch_block(N, T, D, H, Lp, cdt.itemsize,
                               vmem_budget=(vmem_limit * 7) // 8)
    else:
        nb = min(batch_block, N)
    grid = (pl.cdiv(N, nb),)

    kernel = functools.partial(attention_lstm_kernel, l_real=L,
                               t_unroll=(True if T <= 16 else 4))

    hn_tm = pl.pallas_call(
        kernel,
        out_shape=jax.ShapeDtypeStruct((T, N, H), jnp.float32),
        grid_spec=pltpu.PrefetchScalarGridSpec(
            num_scalar_prefetch=0,
            grid=grid,
            in_specs=[
                pl.BlockSpec((T, nb, D), lambda i: (0, i, 0)),      # x tile (time-major)
                pl.BlockSpec((nb, H, Lp), lambda i: (i, 0, 0)),     # A tile (f32)
                pl.BlockSpec((D, 4 * H), lambda i: (0, 0)),         # Wx (resident)
                pl.BlockSpec((2 * H, 4 * H), lambda i: (0, 0)),     # [Wh; Wattn] (resident)
                pl.BlockSpec((1, 4 * H), lambda i: (0, 0)),         # bias (resident)
            ],
            out_specs=pl.BlockSpec((T, nb, H), lambda i: (0, i, 0)),
            scratch_shapes=[
                pltpu.VMEM((T * nb, 4 * H), jnp.float32),           # hoisted pre-activations
            ],
        ),
        compiler_params=pltpu.CompilerParams(
            dimension_semantics=("parallel",),       # 2-TC sharding on v7x
            vmem_limit_bytes=vmem_limit,
        ),
    )(x_tm, A_flat, Wx_c, Whx, b2)

    return jnp.swapaxes(hn_tm, 0, 1)                 # back to (N, T, H)


def attention_lstm_reference(x, A, Wx, Wh, Wattn, b):
    """Pure-JAX reference mirroring the PyTorch module."""
    N, T, D = x.shape
    H = A.shape[1]
    A_flat = A.reshape(N, H, -1)
    h = jnp.mean(A_flat, axis=2)
    c = h
    hs = []
    for t in range(T):
        xt = x[:, t, :]
        scores = jnp.einsum("nh,nhl->nl", h, A_flat) / jnp.sqrt(jnp.float32(H))
        w = jax.nn.softmax(scores, axis=1)
        attn = jnp.einsum("nhl,nl->nh", A_flat, w)
        act = xt @ Wx + h @ Wh + attn @ Wattn + b
        i_g = jax.nn.sigmoid(act[:, 0 * H:1 * H])
        f_g = jax.nn.sigmoid(act[:, 1 * H:2 * H])
        o_g = jax.nn.sigmoid(act[:, 2 * H:3 * H])
        g_g = jnp.tanh(act[:, 3 * H:4 * H])
        c = f_g * c + i_g * g_g
        h = o_g * jnp.tanh(c)
        hs.append(h)
    return jnp.stack(hs, axis=1)


if __name__ == "__main__":
    N, T, D, H, Da = 2, 8, 32, 32, 4

    key = jax.random.PRNGKey(0)
    kx, ka, kwx, kwh, kwa = jax.random.split(key, 5)

    x = jax.random.normal(kx, (N, T, D), dtype=jnp.float32)
    A = jax.random.normal(ka, (N, H, Da, Da), dtype=jnp.float32)

    # Deterministic parameter init matching the module's __init__ shapes/scales.
    Wx = jax.random.normal(kwx, (D, 4 * H), dtype=jnp.float32) / math.sqrt(D)
    Wh = jax.random.normal(kwh, (H, 4 * H), dtype=jnp.float32) / math.sqrt(H)
    Wattn = jax.random.normal(kwa, (H, 4 * H), dtype=jnp.float32) / math.sqrt(H)
    b = jnp.zeros((4 * H,), dtype=jnp.float32)

    hn_ref = attention_lstm_reference(x, A, Wx, Wh, Wattn, b)

    # Default path: bf16 MXU operands on all generations, f32 gate math.
    hn_bf16 = jax.block_until_ready(attention_lstm_forward(x, A, Wx, Wh, Wattn, b))
    assert hn_bf16.shape == (N, T, H)
    max_err = float(jnp.max(jnp.abs(hn_bf16 - hn_ref)))
    assert max_err < 0.15, f"bf16 kernel max abs error too large: {max_err}"

    # Exact-operand path for a tighter correctness check.
    hn_f32 = jax.block_until_ready(
        attention_lstm_forward(x, A, Wx, Wh, Wattn, b, mxu_dtype=jnp.float32))
    assert jnp.allclose(hn_f32, hn_ref, rtol=5e-3, atol=5e-3), "f32 kernel mismatch vs reference"

    print("KERNEL_OK")
</pallas_src>

<mosaic_0001>
module attributes {stable_mosaic.version = 11 : i64} {
  func.func @attention_lstm_kernel(%arg0: i32, %arg1: memref<8x2x32xbf16, #tpu.memory_space<vmem>>, %arg2: memref<2x32x128xf32, #tpu.memory_space<vmem>>, %arg3: memref<32x128xbf16, #tpu.memory_space<vmem>>, %arg4: memref<64x128xbf16, #tpu.memory_space<vmem>>, %arg5: memref<1x128xf32, #tpu.memory_space<vmem>>, %arg6: memref<8x2x32xf32, #tpu.memory_space<vmem>>, %arg7: memref<16x128xf32, #tpu.memory_space<vmem>>) attributes {dimension_semantics = [#tpu.dimension_semantics<parallel>], iteration_bounds = array<i64: 1>, scalar_prefetch = 0 : i64, scratch_operands = 1 : i64, tpu.core_type = #tpu.core_type<tc>, window_params = [{transform_indices = @transform_0, window_bounds = array<i64: 8, 2, 32>}, {transform_indices = @transform_1, window_bounds = array<i64: 2, 32, 128>}, {pipeline_mode = #tpu.pipeline_mode<synchronous>, transform_indices = @transform_2, window_bounds = array<i64: 32, 128>}, {pipeline_mode = #tpu.pipeline_mode<synchronous>, transform_indices = @transform_3, window_bounds = array<i64: 64, 128>}, {pipeline_mode = #tpu.pipeline_mode<synchronous>, transform_indices = @transform_4, window_bounds = array<i64: 1, 128>}, {transform_indices = @transform_5, window_bounds = array<i64: 8, 2, 32>}]} {
    %c0 = arith.constant 0 : index
    %c0_0 = arith.constant 0 : index
    %c0_1 = arith.constant 0 : index
    %0 = vector.load %arg2[%c0, %c0_0, %c0_1] : memref<2x32x128xf32, #tpu.memory_space<vmem>>, vector<2x32x128xf32>
    %cst = arith.constant dense<0.000000e+00> : vector<2x32xf32>
    %1 = vector.multi_reduction <add>, %0, %cst [2] : vector<2x32x128xf32> to vector<2x32xf32>
    %cst_2 = arith.constant 6.250000e-02 : f32
    %2 = vector.broadcast %cst_2 : f32 to vector<2x32xf32>
    %3 = arith.mulf %1, %2 : vector<2x32xf32>
    %c0_3 = arith.constant 0 : index
    %c0_4 = arith.constant 0 : index
    %c0_5 = arith.constant 0 : index
    %4 = vector.load %arg1[%c0_3, %c0_4, %c0_5] : memref<8x2x32xbf16, #tpu.memory_space<vmem>>, vector<8x2x32xbf16>
    %5 = vector.shape_cast %4 : vector<8x2x32xbf16> to vector<16x32xbf16>
    %c0_6 = arith.constant 0 : index
    %c0_7 = arith.constant 0 : index
    %6 = vector.load %arg3[%c0_6, %c0_7] : memref<32x128xbf16, #tpu.memory_space<vmem>>, vector<32x128xbf16>
    %cst_8 = arith.constant dense<0.000000e+00> : vector<16x128xf32>
    %7 = tpu.matmul %5, %6, %cst_8 {dimension_numbers = #tpu.dot_dimension_numbers<[1], [0], [0], [1], [0, 0, 1, 1], [], []>} : vector<16x32xbf16>, vector<32x128xbf16>, vector<16x128xf32> -> vector<16x128xf32>
    %c0_9 = arith.constant 0 : index
    %c0_10 = arith.constant 0 : index
    %8 = vector.load %arg5[%c0_9, %c0_10] : memref<1x128xf32, #tpu.memory_space<vmem>>, vector<1x128xf32>
    %9 = vector.broadcast %8 : vector<1x128xf32> to vector<16x128xf32>
    %10 = arith.addf %7, %9 : vector<16x128xf32>
    %c0_11 = arith.constant 0 : index
    %c0_12 = arith.constant 0 : index
    %11 = vector.load %arg7[%c0_11, %c0_12] : memref<16x128xf32, #tpu.memory_space<vmem>>, vector<16x128xf32>
    tpu.vector_store %arg7[%c0_11, %c0_12], %10 {strides = array<i32>} : memref<16x128xf32, #tpu.memory_space<vmem>>, vector<16x128xf32>,
    %12 = tpu.iota {dimensions = array<i32: 1>} : vector<1x128xi32>
    %c16_i32 = arith.constant 16 : i32
    %13 = vector.broadcast %c16_i32 : i32 to vector<1x128xi32>
    %14 = arith.cmpi slt, %12, %13 : vector<1x128xi32>
    %cst_13 = arith.constant 0.000000e+00 : f32
    %cst_14 = arith.constant -1.000000e+30 : f32
    %15 = vector.broadcast %cst_13 : f32 to vector<1x128xf32>
    %16 = vector.broadcast %cst_14 : f32 to vector<1x128xf32>
    %17 = arith.select %14, %15, %16 : vector<1x128xi1>, vector<1x128xf32>
    %cst_15 = arith.constant 0.176776692 : f32
    %c0_i32 = arith.constant 0 : i32
    %c0_16 = arith.constant 0 : index
    %c0_17 = arith.constant 0 : index
    %c0_18 = arith.constant 0 : index
    %18 = vector.load %arg2[%c0_16, %c0_17, %c0_18] : memref<2x32x128xf32, #tpu.memory_space<vmem>>, vector<2x32x128xf32>
    %19 = vector.broadcast %cst_15 : f32 to vector<2x32xf32>
    %20 = arith.mulf %3, %19 : vector<2x32xf32>
    %21 = vector.shape_cast %20 : vector<2x32xf32> to vector<2x32x1xf32>
    %22 = vector.broadcast %21 : vector<2x32x1xf32> to vector<2x32x128xf32>
    %23 = arith.mulf %22, %18 : vector<2x32x128xf32>
    %cst_19 = arith.constant dense<0.000000e+00> : vector<2x128xf32>
    %24 = vector.multi_reduction <add>, %23, %cst_19 [1] : vector<2x32x128xf32> to vector<2x128xf32>
    %25 = vector.broadcast %17 : vector<1x128xf32> to vector<2x128xf32>
    %26 = arith.addf %24, %25 : vector<2x128xf32>
    %cst_20 = arith.constant dense<0xFF800000> : vector<2xf32>
    %27 = vector.multi_reduction <maximumf>, %26, %cst_20 [1] : vector<2x128xf32> to vector<2xf32>
    %28 = vector.shape_cast %27 : vector<2xf32> to vector<2x1xf32>
    %29 = vector.broadcast %28 : vector<2x1xf32> to vector<2x128xf32>
    %30 = arith.subf %26, %29 : vector<2x128xf32>
    %31 = math.exp %30 : vector<2x128xf32>
    %cst_21 = arith.constant dense<0.000000e+00> : vector<2xf32>
    %32 = vector.multi_reduction <add>, %31, %cst_21 [1] : vector<2x128xf32> to vector<2xf32>
    %33 = vector.shape_cast %32 : vector<2xf32> to vector<2x1xf32>
    %34 = tpu.reciprocal %33 {approx = true} : vector<2x1xf32> -> vector<2x1xf32>
    %35 = vector.broadcast %34 : vector<2x1xf32> to vector<2x128xf32>
    %36 = arith.mulf %31, %35 : vector<2x128xf32>
    %37 = vector.shape_cast %36 : vector<2x128xf32> to vector<2x1x128xf32>
    %38 = vector.broadcast %37 : vector<2x1x128xf32> to vector<2x32x128xf32>
    %39 = arith.mulf %18, %38 : vector<2x32x128xf32>
    %cst_22 = arith.constant dense<0.000000e+00> : vector<2x32xf32>
    %40 = vector.multi_reduction <add>, %39, %cst_22 [2] : vector<2x32x128xf32> to vector<2x32xf32>
    %41 = tpu.concatenate %3, %40 in 1 : vector<2x32xf32>, vector<2x32xf32> -> vector<2x64xf32>
    %42 = arith.truncf %41 : vector<2x64xf32> to vector<2x64xbf16>
    %c2_i32 = arith.constant 2 : i32
    %43 = arith.muli %c0_i32, %c2_i32 : i32
    %44 = tpu.assume_multiple %43, 2 : i32
    %45 = arith.index_cast %44 : i32 to index
    %c0_23 = arith.constant 0 : index
    %46 = vector.load %arg7[%45, %c0_23] : memref<16x128xf32, #tpu.memory_space<vmem>>, vector<2x128xf32>
    %c0_24 = arith.constant 0 : index
    %c0_25 = arith.constant 0 : index
    %47 = vector.load %arg4[%c0_24, %c0_25] : memref<64x128xbf16, #tpu.memory_space<vmem>>, vector<64x128xbf16>
    %cst_26 = arith.constant dense<0.000000e+00> : vector<2x128xf32>
    %48 = tpu.matmul %42, %47, %cst_26 {dimension_numbers = #tpu.dot_dimension_numbers<[1], [0], [0], [1], [0, 0, 1, 1], [], []>} : vector<2x64xbf16>, vector<64x128xbf16>, vector<2x128xf32> -> vector<2x128xf32>
    %49 = arith.addf %46, %48 : vector<2x128xf32>
    %50 = vector.extract_strided_slice %49 {offsets = [0, 0], sizes = [2, 96], strides = [1, 1]} : vector<2x128xf32> to vector<2x96xf32>
    %51 = arith.negf %50 : vector<2x96xf32>
    %52 = math.exp %51 : vector<2x96xf32>
    %cst_27 = arith.constant 1.000000e+00 : f32
    %53 = vector.broadcast %cst_27 : f32 to vector<2x96xf32>
    %54 = arith.addf %53, %52 : vector<2x96xf32>
    %55 = arith.divf %53, %54 : vector<2x96xf32>
    %56 = vector.extract_strided_slice %49 {offsets = [0, 96], sizes = [2, 32], strides = [1, 1]} : vector<2x128xf32> to vector<2x32xf32>
    %57 = math.tanh %56 : vector<2x32xf32>
    %58 = vector.extract_strided_slice %55 {offsets = [0, 0], sizes = [2, 32], strides = [1, 1]} : vector<2x96xf32> to vector<2x32xf32>
    %59 = vector.extract_strided_slice %55 {offsets = [0, 32], sizes = [2, 32], strides = [1, 1]} : vector<2x96xf32> to vector<2x32xf32>
    %60 = vector.extract_strided_slice %55 {offsets = [0, 64], sizes = [2, 32], strides = [1, 1]} : vector<2x96xf32> to vector<2x32xf32>
    %61 = arith.mulf %59, %3 : vector<2x32xf32>
    %62 = arith.mulf %58, %57 : vector<2x32xf32>
    %63 = arith.addf %61, %62 : vector<2x32xf32>
    %64 = math.tanh %63 : vector<2x32xf32>
    %65 = arith.mulf %60, %64 : vector<2x32xf32>
    %66 = arith.index_cast %c0_i32 : i32 to index
    %c0_28 = arith.constant 0 : index
    %c0_29 = arith.constant 0 : index
    %67 = vector.load %arg6[%66, %c0_28, %c0_29] : memref<8x2x32xf32, #tpu.memory_space<vmem>>, vector<1x2x32xf32>
    %68 = vector.shape_cast %67 : vector<1x2x32xf32> to vector<2x32xf32>
    %69 = vector.shape_cast %65 : vector<2x32xf32> to vector<1x2x32xf32>
    tpu.vector_store %arg6[%66, %c0_28, %c0_29], %69 {strides = array<i32>} : memref<8x2x32xf32, #tpu.memory_space<vmem>>, vector<1x2x32xf32>,
    %c1_i32 = arith.constant 1 : i32
    %c0_30 = arith.constant 0 : index
    %c0_31 = arith.constant 0 : index
    %c0_32 = arith.constant 0 : index
    %70 = vector.load %arg2[%c0_30, %c0_31, %c0_32] : memref<2x32x128xf32, #tpu.memory_space<vmem>>, vector<2x32x128xf32>
    %71 = vector.broadcast %cst_15 : f32 to vector<2x32xf32>
    %72 = arith.mulf %65, %71 : vector<2x32xf32>
    %73 = vector.shape_cast %72 : vector<2x32xf32> to vector<2x32x1xf32>
    %74 = vector.broadcast %73 : vector<2x32x1xf32> to vector<2x32x128xf32>
    %75 = arith.mulf %74, %70 : vector<2x32x128xf32>
    %cst_33 = arith.constant dense<0.000000e+00> : vector<2x128xf32>
    %76 = vector.multi_reduction <add>, %75, %cst_33 [1] : vector<2x32x128xf32> to vector<2x128xf32>
    %77 = vector.broadcast %17 : vector<1x128xf32> to vector<2x128xf32>
    %78 = arith.addf %76, %77 : vector<2x128xf32>
    %cst_34 = arith.constant dense<0xFF800000> : vector<2xf32>
    %79 = vector.multi_reduction <maximumf>, %78, %cst_34 [1] : vector<2x128xf32> to vector<2xf32>
    %80 = vector.shape_cast %79 : vector<2xf32> to vector<2x1xf32>
    %81 = vector.broadcast %80 : vector<2x1xf32> to vector<2x128xf32>
    %82 = arith.subf %78, %81 : vector<2x128xf32>
    %83 = math.exp %82 : vector<2x128xf32>
    %cst_35 = arith.constant dense<0.000000e+00> : vector<2xf32>
    %84 = vector.multi_reduction <add>, %83, %cst_35 [1] : vector<2x128xf32> to vector<2xf32>
    %85 = vector.shape_cast %84 : vector<2xf32> to vector<2x1xf32>
    %86 = tpu.reciprocal %85 {approx = true} : vector<2x1xf32> -> vector<2x1xf32>
    %87 = vector.broadcast %86 : vector<2x1xf32> to vector<2x128xf32>
    %88 = arith.mulf %83, %87 : vector<2x128xf32>
    %89 = vector.shape_cast %88 : vector<2x128xf32> to vector<2x1x128xf32>
    %90 = vector.broadcast %89 : vector<2x1x128xf32> to vector<2x32x128xf32>
    %91 = arith.mulf %70, %90 : vector<2x32x128xf32>
    %cst_36 = arith.constant dense<0.000000e+00> : vector<2x32xf32>
    %92 = vector.multi_reduction <add>, %91, %cst_36 [2] : vector<2x32x128xf32> to vector<2x32xf32>
    %93 = tpu.concatenate %65, %92 in 1 : vector<2x32xf32>, vector<2x32xf32> -> vector<2x64xf32>
    %94 = arith.truncf %93 : vector<2x64xf32> to vector<2x64xbf16>
    %c2_i32_37 = arith.constant 2 : i32
    %95 = arith.muli %c1_i32, %c2_i32_37 : i32
    %96 = tpu.assume_multiple %95, 2 : i32
    %97 = arith.index_cast %96 : i32 to index
    %c0_38 = arith.constant 0 : index
    %98 = vector.load %arg7[%97, %c0_38] : memref<16x128xf32, #tpu.memory_space<vmem>>, vector<2x128xf32>
    %c0_39 = arith.constant 0 : index
    %c0_40 = arith.constant 0 : index
    %99 = vector.load %arg4[%c0_39, %c0_40] : memref<64x128xbf16, #tpu.memory_space<vmem>>, vector<64x128xbf16>
    %cst_41 = arith.constant dense<0.000000e+00> : vector<2x128xf32>
    %100 = tpu.matmul %94, %99, %cst_41 {dimension_numbers = #tpu.dot_dimension_numbers<[1], [0], [0], [1], [0, 0, 1, 1], [], []>} : vector<2x64xbf16>, vector<64x128xbf16>, vector<2x128xf32> -> vector<2x128xf32>
    %101 = arith.addf %98, %100 : vector<2x128xf32>
    %102 = vector.extract_strided_slice %101 {offsets = [0, 0], sizes = [2, 96], strides = [1, 1]} : vector<2x128xf32> to vector<2x96xf32>
    %103 = arith.negf %102 : vector<2x96xf32>
    %104 = math.exp %103 : vector<2x96xf32>
    %cst_42 = arith.constant 1.000000e+00 : f32
    %105 = vector.broadcast %cst_42 : f32 to vector<2x96xf32>
    %106 = arith.addf %105, %104 : vector<2x96xf32>
    %107 = arith.divf %105, %106 : vector<2x96xf32>
    %108 = vector.extract_strided_slice %101 {offsets = [0, 96], sizes = [2, 32], strides = [1, 1]} : vector<2x128xf32> to vector<2x32xf32>
    %109 = math.tanh %108 : vector<2x32xf32>
    %110 = vector.extract_strided_slice %107 {offsets = [0, 0], sizes = [2, 32], strides = [1, 1]} : vector<2x96xf32> to vector<2x32xf32>
    %111 = vector.extract_strided_slice %107 {offsets = [0, 32], sizes = [2, 32], strides = [1, 1]} : vector<2x96xf32> to vector<2x32xf32>
    %112 = vector.extract_strided_slice %107 {offsets = [0, 64], sizes = [2, 32], strides = [1, 1]} : vector<2x96xf32> to vector<2x32xf32>
    %113 = arith.mulf %111, %63 : vector<2x32xf32>
    %114 = arith.mulf %110, %109 : vector<2x32xf32>
    %115 = arith.addf %113, %114 : vector<2x32xf32>
    %116 = math.tanh %115 : vector<2x32xf32>
    %117 = arith.mulf %112, %116 : vector<2x32xf32>
    %118 = arith.index_cast %c1_i32 : i32 to index
    %c0_43 = arith.constant 0 : index
    %c0_44 = arith.constant 0 : index
    %119 = vector.load %arg6[%118, %c0_43, %c0_44] : memref<8x2x32xf32, #tpu.memory_space<vmem>>, vector<1x2x32xf32>
    %120 = vector.shape_cast %119 : vector<1x2x32xf32> to vector<2x32xf32>
    %121 = vector.shape_cast %117 : vector<2x32xf32> to vector<1x2x32xf32>
    tpu.vector_store %arg6[%118, %c0_43, %c0_44], %121 {strides = array<i32>} : memref<8x2x32xf32, #tpu.memory_space<vmem>>, vector<1x2x32xf32>,
    %c2_i32_45 = arith.constant 2 : i32
    %c0_46 = arith.constant 0 : index
    %c0_47 = arith.constant 0 : index
    %c0_48 = arith.constant 0 : index
    %122 = vector.load %arg2[%c0_46, %c0_47, %c0_48] : memref<2x32x128xf32, #tpu.memory_space<vmem>>, vector<2x32x128xf32>
    %123 = vector.broadcast %cst_15 : f32 to vector<2x32xf32>
    %124 = arith.mulf %117, %123 : vector<2x32xf32>
    %125 = vector.shape_cast %124 : vector<2x32xf32> to vector<2x32x1xf32>
    %126 = vector.broadcast %125 : vector<2x32x1xf32> to vector<2x32x128xf32>
    %127 = arith.mulf %126, %122 : vector<2x32x128xf32>
    %cst_49 = arith.constant dense<0.000000e+00> : vector<2x128xf32>
    %128 = vector.multi_reduction <add>, %127, %cst_49 [1] : vector<2x32x128xf32> to vector<2x128xf32>
    %129 = vector.broadcast %17 : vector<1x128xf32> to vector<2x128xf32>
    %130 = arith.addf %128, %129 : vector<2x128xf32>
    %cst_50 = arith.constant dense<0xFF800000> : vector<2xf32>
    %131 = vector.multi_reduction <maximumf>, %130, %cst_50 [1] : vector<2x128xf32> to vector<2xf32>
    %132 = vector.shape_cast %131 : vector<2xf32> to vector<2x1xf32>
    %133 = vector.broadcast %132 : vector<2x1xf32> to vector<2x128xf32>
    %134 = arith.subf %130, %133 : vector<2x128xf32>
    %135 = math.exp %134 : vector<2x128xf32>
    %cst_51 = arith.constant dense<0.000000e+00> : vector<2xf32>
    %136 = vector.multi_reduction <add>, %135, %cst_51 [1] : vector<2x128xf32> to vector<2xf32>
    %137 = vector.shape_cast %136 : vector<2xf32> to vector<2x1xf32>
    %138 = tpu.reciprocal %137 {approx = true} : vector<2x1xf32> -> vector<2x1xf32>
    %139 = vector.broadcast %138 : vector<2x1xf32> to vector<2x128xf32>
    %140 = arith.mulf %135, %139 : vector<2x128xf32>
    %141 = vector.shape_cast %140 : vector<2x128xf32> to vector<2x1x128xf32>
    %142 = vector.broadcast %141 : vector<2x1x128xf32> to vector<2x32x128xf32>
    %143 = arith.mulf %122, %142 : vector<2x32x128xf32>
    %cst_52 = arith.constant dense<0.000000e+00> : vector<2x32xf32>
    %144 = vector.multi_reduction <add>, %143, %cst_52 [2] : vector<2x32x128xf32> to vector<2x32xf32>
    %145 = tpu.concatenate %117, %144 in 1 : vector<2x32xf32>, vector<2x32xf32> -> vector<2x64xf32>
    %146 = arith.truncf %145 : vector<2x64xf32> to vector<2x64xbf16>
    %c2_i32_53 = arith.constant 2 : i32
    %147 = arith.muli %c2_i32_45, %c2_i32_53 : i32
    %148 = tpu.assume_multiple %147, 2 : i32
    %149 = arith.index_cast %148 : i32 to index
    %c0_54 = arith.constant 0 : index
    %150 = vector.load %arg7[%149, %c0_54] : memref<16x128xf32, #tpu.memory_space<vmem>>, vector<2x128xf32>
    %c0_55 = arith.constant 0 : index
    %c0_56 = arith.constant 0 : index
    %151 = vector.load %arg4[%c0_55, %c0_56] : memref<64x128xbf16, #tpu.memory_space<vmem>>, vector<64x128xbf16>
    %cst_57 = arith.constant dense<0.000000e+00> : vector<2x128xf32>
    %152 = tpu.matmul %146, %151, %cst_57 {dimension_numbers = #tpu.dot_dimension_numbers<[1], [0], [0], [1], [0, 0, 1, 1], [], []>} : vector<2x64xbf16>, vector<64x128xbf16>, vector<2x128xf32> -> vector<2x128xf32>
    %153 = arith.addf %150, %152 : vector<2x128xf32>
    %154 = vector.extract_strided_slice %153 {offsets = [0, 0], sizes = [2, 96], strides = [1, 1]} : vector<2x128xf32> to vector<2x96xf32>
    %155 = arith.negf %154 : vector<2x96xf32>
    %156 = math.exp %155 : vector<2x96xf32>
    %cst_58 = arith.constant 1.000000e+00 : f32
    %157 = vector.broadcast %cst_58 : f32 to vector<2x96xf32>
    %158 = arith.addf %157, %156 : vector<2x96xf32>
    %159 = arith.divf %157, %158 : vector<2x96xf32>
    %160 = vector.extract_strided_slice %153 {offsets = [0, 96], sizes = [2, 32], strides = [1, 1]} : vector<2x128xf32> to vector<2x32xf32>
    %161 = math.tanh %160 : vector<2x32xf32>
    %162 = vector.extract_strided_slice %159 {offsets = [0, 0], sizes = [2, 32], strides = [1, 1]} : vector<2x96xf32> to vector<2x32xf32>
    %163 = vector.extract_strided_slice %159 {offsets = [0, 32], sizes = [2, 32], strides = [1, 1]} : vector<2x96xf32> to vector<2x32xf32>
    %164 = vector.extract_strided_slice %159 {offsets = [0, 64], sizes = [2, 32], strides = [1, 1]} : vector<2x96xf32> to vector<2x32xf32>
    %165 = arith.mulf %163, %115 : vector<2x32xf32>
    %166 = arith.mulf %162, %161 : vector<2x32xf32>
    %167 = arith.addf %165, %166 : vector<2x32xf32>
    %168 = math.tanh %167 : vector<2x32xf32>
    %169 = arith.mulf %164, %168 : vector<2x32xf32>
    %170 = arith.index_cast %c2_i32_45 : i32 to index
    %c0_59 = arith.constant 0 : index
    %c0_60 = arith.constant 0 : index
    %171 = vector.load %arg6[%170, %c0_59, %c0_60] : memref<8x2x32xf32, #tpu.memory_space<vmem>>, vector<1x2x32xf32>
    %172 = vector.shape_cast %171 : vector<1x2x32xf32> to vector<2x32xf32>
    %173 = vector.shape_cast %169 : vector<2x32xf32> to vector<1x2x32xf32>
    tpu.vector_store %arg6[%170, %c0_59, %c0_60], %173 {strides = array<i32>} : memref<8x2x32xf32, #tpu.memory_space<vmem>>, vector<1x2x32xf32>,
    %c3_i32 = arith.constant 3 : i32
    %c0_61 = arith.constant 0 : index
    %c0_62 = arith.constant 0 : index
    %c0_63 = arith.constant 0 : index
    %174 = vector.load %arg2[%c0_61, %c0_62, %c0_63] : memref<2x32x128xf32, #tpu.memory_space<vmem>>, vector<2x32x128xf32>
    %175 = vector.broadcast %cst_15 : f32 to vector<2x32xf32>
    %176 = arith.mulf %169, %175 : vector<2x32xf32>
    %177 = vector.shape_cast %176 : vector<2x32xf32> to vector<2x32x1xf32>
    %178 = vector.broadcast %177 : vector<2x32x1xf32> to vector<2x32x128xf32>
    %179 = arith.mulf %178, %174 : vector<2x32x128xf32>
    %cst_64 = arith.constant dense<0.000000e+00> : vector<2x128xf32>
    %180 = vector.multi_reduction <add>, %179, %cst_64 [1] : vector<2x32x128xf32> to vector<2x128xf32>
    %181 = vector.broadcast %17 : vector<1x128xf32> to vector<2x128xf32>
    %182 = arith.addf %180, %181 : vector<2x128xf32>
    %cst_65 = arith.constant dense<0xFF800000> : vector<2xf32>
    %183 = vector.multi_reduction <maximumf>, %182, %cst_65 [1] : vector<2x128xf32> to vector<2xf32>
    %184 = vector.shape_cast %183 : vector<2xf32> to vector<2x1xf32>
    %185 = vector.broadcast %184 : vector<2x1xf32> to vector<2x128xf32>
    %186 = arith.subf %182, %185 : vector<2x128xf32>
    %187 = math.exp %186 : vector<2x128xf32>
    %cst_66 = arith.constant dense<0.000000e+00> : vector<2xf32>
    %188 = vector.multi_reduction <add>, %187, %cst_66 [1] : vector<2x128xf32> to vector<2xf32>
    %189 = vector.shape_cast %188 : vector<2xf32> to vector<2x1xf32>
    %190 = tpu.reciprocal %189 {approx = true} : vector<2x1xf32> -> vector<2x1xf32>
    %191 = vector.broadcast %190 : vector<2x1xf32> to vector<2x128xf32>
    %192 = arith.mulf %187, %191 : vector<2x128xf32>
    %193 = vector.shape_cast %192 : vector<2x128xf32> to vector<2x1x128xf32>
    %194 = vector.broadcast %193 : vector<2x1x128xf32> to vector<2x32x128xf32>
    %195 = arith.mulf %174, %194 : vector<2x32x128xf32>
    %cst_67 = arith.constant dense<0.000000e+00> : vector<2x32xf32>
    %196 = vector.multi_reduction <add>, %195, %cst_67 [2] : vector<2x32x128xf32> to vector<2x32xf32>
    %197 = tpu.concatenate %169, %196 in 1 : vector<2x32xf32>, vector<2x32xf32> -> vector<2x64xf32>
    %198 = arith.truncf %197 : vector<2x64xf32> to vector<2x64xbf16>
    %c2_i32_68 = arith.constant 2 : i32
    %199 = arith.muli %c3_i32, %c2_i32_68 : i32
    %200 = tpu.assume_multiple %199, 2 : i32
    %201 = arith.index_cast %200 : i32 to index
    %c0_69 = arith.constant 0 : index
    %202 = vector.load %arg7[%201, %c0_69] : memref<16x128xf32, #tpu.memory_space<vmem>>, vector<2x128xf32>
    %c0_70 = arith.constant 0 : index
    %c0_71 = arith.constant 0 : index
    %203 = vector.load %arg4[%c0_70, %c0_71] : memref<64x128xbf16, #tpu.memory_space<vmem>>, vector<64x128xbf16>
    %cst_72 = arith.constant dense<0.000000e+00> : vector<2x128xf32>
    %204 = tpu.matmul %198, %203, %cst_72 {dimension_numbers = #tpu.dot_dimension_numbers<[1], [0], [0], [1], [0, 0, 1, 1], [], []>} : vector<2x64xbf16>, vector<64x128xbf16>, vector<2x128xf32> -> vector<2x128xf32>
    %205 = arith.addf %202, %204 : vector<2x128xf32>
    %206 = vector.extract_strided_slice %205 {offsets = [0, 0], sizes = [2, 96], strides = [1, 1]} : vector<2x128xf32> to vector<2x96xf32>
    %207 = arith.negf %206 : vector<2x96xf32>
    %208 = math.exp %207 : vector<2x96xf32>
    %cst_73 = arith.constant 1.000000e+00 : f32
    %209 = vector.broadcast %cst_73 : f32 to vector<2x96xf32>
    %210 = arith.addf %209, %208 : vector<2x96xf32>
    %211 = arith.divf %209, %210 : vector<2x96xf32>
    %212 = vector.extract_strided_slice %205 {offsets = [0, 96], sizes = [2, 32], strides = [1, 1]} : vector<2x128xf32> to vector<2x32xf32>
    %213 = math.tanh %212 : vector<2x32xf32>
    %214 = vector.extract_strided_slice %211 {offsets = [0, 0], sizes = [2, 32], strides = [1, 1]} : vector<2x96xf32> to vector<2x32xf32>
    %215 = vector.extract_strided_slice %211 {offsets = [0, 32], sizes = [2, 32], strides = [1, 1]} : vector<2x96xf32> to vector<2x32xf32>
    %216 = vector.extract_strided_slice %211 {offsets = [0, 64], sizes = [2, 32], strides = [1, 1]} : vector<2x96xf32> to vector<2x32xf32>
    %217 = arith.mulf %215, %167 : vector<2x32xf32>
    %218 = arith.mulf %214, %213 : vector<2x32xf32>
    %219 = arith.addf %217, %218 : vector<2x32xf32>
    %220 = math.tanh %219 : vector<2x32xf32>
    %221 = arith.mulf %216, %220 : vector<2x32xf32>
    %222 = arith.index_cast %c3_i32 : i32 to index
    %c0_74 = arith.constant 0 : index
    %c0_75 = arith.constant 0 : index
    %223 = vector.load %arg6[%222, %c0_74, %c0_75] : memref<8x2x32xf32, #tpu.memory_space<vmem>>, vector<1x2x32xf32>
    %224 = vector.shape_cast %223 : vector<1x2x32xf32> to vector<2x32xf32>
    %225 = vector.shape_cast %221 : vector<2x32xf32> to vector<1x2x32xf32>
    tpu.vector_store %arg6[%222, %c0_74, %c0_75], %225 {strides = array<i32>} : memref<8x2x32xf32, #tpu.memory_space<vmem>>, vector<1x2x32xf32>,
    %c4_i32 = arith.constant 4 : i32
    %c0_76 = arith.constant 0 : index
    %c0_77 = arith.constant 0 : index
    %c0_78 = arith.constant 0 : index
    %226 = vector.load %arg2[%c0_76, %c0_77, %c0_78] : memref<2x32x128xf32, #tpu.memory_space<vmem>>, vector<2x32x128xf32>
    %227 = vector.broadcast %cst_15 : f32 to vector<2x32xf32>
    %228 = arith.mulf %221, %227 : vector<2x32xf32>
    %229 = vector.shape_cast %228 : vector<2x32xf32> to vector<2x32x1xf32>
    %230 = vector.broadcast %229 : vector<2x32x1xf32> to vector<2x32x128xf32>
    %231 = arith.mulf %230, %226 : vector<2x32x128xf32>
    %cst_79 = arith.constant dense<0.000000e+00> : vector<2x128xf32>
    %232 = vector.multi_reduction <add>, %231, %cst_79 [1] : vector<2x32x128xf32> to vector<2x128xf32>
    %233 = vector.broadcast %17 : vector<1x128xf32> to vector<2x128xf32>
    %234 = arith.addf %232, %233 : vector<2x128xf32>
    %cst_80 = arith.constant dense<0xFF800000> : vector<2xf32>
    %235 = vector.multi_reduction <maximumf>, %234, %cst_80 [1] : vector<2x128xf32> to vector<2xf32>
    %236 = vector.shape_cast %235 : vector<2xf32> to vector<2x1xf32>
    %237 = vector.broadcast %236 : vector<2x1xf32> to vector<2x128xf32>
    %238 = arith.subf %234, %237 : vector<2x128xf32>
    %239 = math.exp %238 : vector<2x128xf32>
    %cst_81 = arith.constant dense<0.000000e+00> : vector<2xf32>
    %240 = vector.multi_reduction <add>, %239, %cst_81 [1] : vector<2x128xf32> to vector<2xf32>
    %241 = vector.shape_cast %240 : vector<2xf32> to vector<2x1xf32>
    %242 = tpu.reciprocal %241 {approx = true} : vector<2x1xf32> -> vector<2x1xf32>
    %243 = vector.broadcast %242 : vector<2x1xf32> to vector<2x128xf32>
    %244 = arith.mulf %239, %243 : vector<2x128xf32>
    %245 = vector.shape_cast %244 : vector<2x128xf32> to vector<2x1x128xf32>
    %246 = vector.broadcast %245 : vector<2x1x128xf32> to vector<2x32x128xf32>
    %247 = arith.mulf %226, %246 : vector<2x32x128xf32>
    %cst_82 = arith.constant dense<0.000000e+00> : vector<2x32xf32>
    %248 = vector.multi_reduction <add>, %247, %cst_82 [2] : vector<2x32x128xf32> to vector<2x32xf32>
    %249 = tpu.concatenate %221, %248 in 1 : vector<2x32xf32>, vector<2x32xf32> -> vector<2x64xf32>
    %250 = arith.truncf %249 : vector<2x64xf32> to vector<2x64xbf16>
    %c2_i32_83 = arith.constant 2 : i32
    %251 = arith.muli %c4_i32, %c2_i32_83 : i32
    %252 = tpu.assume_multiple %251, 2 : i32
    %253 = arith.index_cast %252 : i32 to index
    %c0_84 = arith.constant 0 : index
    %254 = vector.load %arg7[%253, %c0_84] : memref<16x128xf32, #tpu.memory_space<vmem>>, vector<2x128xf32>
    %c0_85 = arith.constant 0 : index
    %c0_86 = arith.constant 0 : index
    %255 = vector.load %arg4[%c0_85, %c0_86] : memref<64x128xbf16, #tpu.memory_space<vmem>>, vector<64x128xbf16>
    %cst_87 = arith.constant dense<0.000000e+00> : vector<2x128xf32>
    %256 = tpu.matmul %250, %255, %cst_87 {dimension_numbers = #tpu.dot_dimension_numbers<[1], [0], [0], [1], [0, 0, 1, 1], [], []>} : vector<2x64xbf16>, vector<64x128xbf16>, vector<2x128xf32> -> vector<2x128xf32>
    %257 = arith.addf %254, %256 : vector<2x128xf32>
    %258 = vector.extract_strided_slice %257 {offsets = [0, 0], sizes = [2, 96], strides = [1, 1]} : vector<2x128xf32> to vector<2x96xf32>
    %259 = arith.negf %258 : vector<2x96xf32>
    %260 = math.exp %259 : vector<2x96xf32>
    %cst_88 = arith.constant 1.000000e+00 : f32
    %261 = vector.broadcast %cst_88 : f32 to vector<2x96xf32>
    %262 = arith.addf %261, %260 : vector<2x96xf32>
    %263 = arith.divf %261, %262 : vector<2x96xf32>
    %264 = vector.extract_strided_slice %257 {offsets = [0, 96], sizes = [2, 32], strides = [1, 1]} : vector<2x128xf32> to vector<2x32xf32>
    %265 = math.tanh %264 : vector<2x32xf32>
    %266 = vector.extract_strided_slice %263 {offsets = [0, 0], sizes = [2, 32], strides = [1, 1]} : vector<2x96xf32> to vector<2x32xf32>
    %267 = vector.extract_strided_slice %263 {offsets = [0, 32], sizes = [2, 32], strides = [1, 1]} : vector<2x96xf32> to vector<2x32xf32>
    %268 = vector.extract_strided_slice %263 {offsets = [0, 64], sizes = [2, 32], strides = [1, 1]} : vector<2x96xf32> to vector<2x32xf32>
    %269 = arith.mulf %267, %219 : vector<2x32xf32>
    %270 = arith.mulf %266, %265 : vector<2x32xf32>
    %271 = arith.addf %269, %270 : vector<2x32xf32>
    %272 = math.tanh %271 : vector<2x32xf32>
    %273 = arith.mulf %268, %272 : vector<2x32xf32>
    %274 = arith.index_cast %c4_i32 : i32 to index
    %c0_89 = arith.constant 0 : index
    %c0_90 = arith.constant 0 : index
    %275 = vector.load %arg6[%274, %c0_89, %c0_90] : memref<8x2x32xf32, #tpu.memory_space<vmem>>, vector<1x2x32xf32>
    %276 = vector.shape_cast %275 : vector<1x2x32xf32> to vector<2x32xf32>
    %277 = vector.shape_cast %273 : vector<2x32xf32> to vector<1x2x32xf32>
    tpu.vector_store %arg6[%274, %c0_89, %c0_90], %277 {strides = array<i32>} : memref<8x2x32xf32, #tpu.memory_space<vmem>>, vector<1x2x32xf32>,
    %c5_i32 = arith.constant 5 : i32
    %c0_91 = arith.constant 0 : index
    %c0_92 = arith.constant 0 : index
    %c0_93 = arith.constant 0 : index
    %278 = vector.load %arg2[%c0_91, %c0_92, %c0_93] : memref<2x32x128xf32, #tpu.memory_space<vmem>>, vector<2x32x128xf32>
    %279 = vector.broadcast %cst_15 : f32 to vector<2x32xf32>
    %280 = arith.mulf %273, %279 : vector<2x32xf32>
    %281 = vector.shape_cast %280 : vector<2x32xf32> to vector<2x32x1xf32>
    %282 = vector.broadcast %281 : vector<2x32x1xf32> to vector<2x32x128xf32>
    %283 = arith.mulf %282, %278 : vector<2x32x128xf32>
    %cst_94 = arith.constant dense<0.000000e+00> : vector<2x128xf32>
    %284 = vector.multi_reduction <add>, %283, %cst_94 [1] : vector<2x32x128xf32> to vector<2x128xf32>
    %285 = vector.broadcast %17 : vector<1x128xf32> to vector<2x128xf32>
    %286 = arith.addf %284, %285 : vector<2x128xf32>
    %cst_95 = arith.constant dense<0xFF800000> : vector<2xf32>
    %287 = vector.multi_reduction <maximumf>, %286, %cst_95 [1] : vector<2x128xf32> to vector<2xf32>
    %288 = vector.shape_cast %287 : vector<2xf32> to vector<2x1xf32>
    %289 = vector.broadcast %288 : vector<2x1xf32> to vector<2x128xf32>
    %290 = arith.subf %286, %289 : vector<2x128xf32>
    %291 = math.exp %290 : vector<2x128xf32>
    %cst_96 = arith.constant dense<0.000000e+00> : vector<2xf32>
    %292 = vector.multi_reduction <add>, %291, %cst_96 [1] : vector<2x128xf32> to vector<2xf32>
    %293 = vector.shape_cast %292 : vector<2xf32> to vector<2x1xf32>
    %294 = tpu.reciprocal %293 {approx = true} : vector<2x1xf32> -> vector<2x1xf32>
    %295 = vector.broadcast %294 : vector<2x1xf32> to vector<2x128xf32>
    %296 = arith.mulf %291, %295 : vector<2x128xf32>
    %297 = vector.shape_cast %296 : vector<2x128xf32> to vector<2x1x128xf32>
    %298 = vector.broadcast %297 : vector<2x1x128xf32> to vector<2x32x128xf32>
    %299 = arith.mulf %278, %298 : vector<2x32x128xf32>
    %cst_97 = arith.constant dense<0.000000e+00> : vector<2x32xf32>
    %300 = vector.multi_reduction <add>, %299, %cst_97 [2] : vector<2x32x128xf32> to vector<2x32xf32>
    %301 = tpu.concatenate %273, %300 in 1 : vector<2x32xf32>, vector<2x32xf32> -> vector<2x64xf32>
    %302 = arith.truncf %301 : vector<2x64xf32> to vector<2x64xbf16>
    %c2_i32_98 = arith.constant 2 : i32
    %303 = arith.muli %c5_i32, %c2_i32_98 : i32
    %304 = tpu.assume_multiple %303, 2 : i32
    %305 = arith.index_cast %304 : i32 to index
    %c0_99 = arith.constant 0 : index
    %306 = vector.load %arg7[%305, %c0_99] : memref<16x128xf32, #tpu.memory_space<vmem>>, vector<2x128xf32>
    %c0_100 = arith.constant 0 : index
    %c0_101 = arith.constant 0 : index
    %307 = vector.load %arg4[%c0_100, %c0_101] : memref<64x128xbf16, #tpu.memory_space<vmem>>, vector<64x128xbf16>
    %cst_102 = arith.constant dense<0.000000e+00> : vector<2x128xf32>
    %308 = tpu.matmul %302, %307, %cst_102 {dimension_numbers = #tpu.dot_dimension_numbers<[1], [0], [0], [1], [0, 0, 1, 1], [], []>} : vector<2x64xbf16>, vector<64x128xbf16>, vector<2x128xf32> -> vector<2x128xf32>
    %309 = arith.addf %306, %308 : vector<2x128xf32>
    %310 = vector.extract_strided_slice %309 {offsets = [0, 0], sizes = [2, 96], strides = [1, 1]} : vector<2x128xf32> to vector<2x96xf32>
    %311 = arith.negf %310 : vector<2x96xf32>
    %312 = math.exp %311 : vector<2x96xf32>
    %cst_103 = arith.constant 1.000000e+00 : f32
    %313 = vector.broadcast %cst_103 : f32 to vector<2x96xf32>
    %314 = arith.addf %313, %312 : vector<2x96xf32>
    %315 = arith.divf %313, %314 : vector<2x96xf32>
    %316 = vector.extract_strided_slice %309 {offsets = [0, 96], sizes = [2, 32], strides = [1, 1]} : vector<2x128xf32> to vector<2x32xf32>
    %317 = math.tanh %316 : vector<2x32xf32>
    %318 = vector.extract_strided_slice %315 {offsets = [0, 0], sizes = [2, 32], strides = [1, 1]} : vector<2x96xf32> to vector<2x32xf32>
    %319 = vector.extract_strided_slice %315 {offsets = [0, 32], sizes = [2, 32], strides = [1, 1]} : vector<2x96xf32> to vector<2x32xf32>
    %320 = vector.extract_strided_slice %315 {offsets = [0, 64], sizes = [2, 32], strides = [1, 1]} : vector<2x96xf32> to vector<2x32xf32>
    %321 = arith.mulf %319, %271 : vector<2x32xf32>
    %322 = arith.mulf %318, %317 : vector<2x32xf32>
    %323 = arith.addf %321, %322 : vector<2x32xf32>
    %324 = math.tanh %323 : vector<2x32xf32>
    %325 = arith.mulf %320, %324 : vector<2x32xf32>
    %326 = arith.index_cast %c5_i32 : i32 to index
    %c0_104 = arith.constant 0 : index
    %c0_105 = arith.constant 0 : index
    %327 = vector.load %arg6[%326, %c0_104, %c0_105] : memref<8x2x32xf32, #tpu.memory_space<vmem>>, vector<1x2x32xf32>
    %328 = vector.shape_cast %327 : vector<1x2x32xf32> to vector<2x32xf32>
    %329 = vector.shape_cast %325 : vector<2x32xf32> to vector<1x2x32xf32>
    tpu.vector_store %arg6[%326, %c0_104, %c0_105], %329 {strides = array<i32>} : memref<8x2x32xf32, #tpu.memory_space<vmem>>, vector<1x2x32xf32>,
    %c6_i32 = arith.constant 6 : i32
    %c0_106 = arith.constant 0 : index
    %c0_107 = arith.constant 0 : index
    %c0_108 = arith.constant 0 : index
    %330 = vector.load %arg2[%c0_106, %c0_107, %c0_108] : memref<2x32x128xf32, #tpu.memory_space<vmem>>, vector<2x32x128xf32>
    %331 = vector.broadcast %cst_15 : f32 to vector<2x32xf32>
    %332 = arith.mulf %325, %331 : vector<2x32xf32>
    %333 = vector.shape_cast %332 : vector<2x32xf32> to vector<2x32x1xf32>
    %334 = vector.broadcast %333 : vector<2x32x1xf32> to vector<2x32x128xf32>
    %335 = arith.mulf %334, %330 : vector<2x32x128xf32>
    %cst_109 = arith.constant dense<0.000000e+00> : vector<2x128xf32>
    %336 = vector.multi_reduction <add>, %335, %cst_109 [1] : vector<2x32x128xf32> to vector<2x128xf32>
    %337 = vector.broadcast %17 : vector<1x128xf32> to vector<2x128xf32>
    %338 = arith.addf %336, %337 : vector<2x128xf32>
    %cst_110 = arith.constant dense<0xFF800000> : vector<2xf32>
    %339 = vector.multi_reduction <maximumf>, %338, %cst_110 [1] : vector<2x128xf32> to vector<2xf32>
    %340 = vector.shape_cast %339 : vector<2xf32> to vector<2x1xf32>
    %341 = vector.broadcast %340 : vector<2x1xf32> to vector<2x128xf32>
    %342 = arith.subf %338, %341 : vector<2x128xf32>
    %343 = math.exp %342 : vector<2x128xf32>
    %cst_111 = arith.constant dense<0.000000e+00> : vector<2xf32>
    %344 = vector.multi_reduction <add>, %343, %cst_111 [1] : vector<2x128xf32> to vector<2xf32>
    %345 = vector.shape_cast %344 : vector<2xf32> to vector<2x1xf32>
    %346 = tpu.reciprocal %345 {approx = true} : vector<2x1xf32> -> vector<2x1xf32>
    %347 = vector.broadcast %346 : vector<2x1xf32> to vector<2x128xf32>
    %348 = arith.mulf %343, %347 : vector<2x128xf32>
    %349 = vector.shape_cast %348 : vector<2x128xf32> to vector<2x1x128xf32>
    %350 = vector.broadcast %349 : vector<2x1x128xf32> to vector<2x32x128xf32>
    %351 = arith.mulf %330, %350 : vector<2x32x128xf32>
    %cst_112 = arith.constant dense<0.000000e+00> : vector<2x32xf32>
    %352 = vector.multi_reduction <add>, %351, %cst_112 [2] : vector<2x32x128xf32> to vector<2x32xf32>
    %353 = tpu.concatenate %325, %352 in 1 : vector<2x32xf32>, vector<2x32xf32> -> vector<2x64xf32>
    %354 = arith.truncf %353 : vector<2x64xf32> to vector<2x64xbf16>
    %c2_i32_113 = arith.constant 2 : i32
    %355 = arith.muli %c6_i32, %c2_i32_113 : i32
    %356 = tpu.assume_multiple %355, 2 : i32
    %357 = arith.index_cast %356 : i32 to index
    %c0_114 = arith.constant 0 : index
    %358 = vector.load %arg7[%357, %c0_114] : memref<16x128xf32, #tpu.memory_space<vmem>>, vector<2x128xf32>
    %c0_115 = arith.constant 0 : index
    %c0_116 = arith.constant 0 : index
    %359 = vector.load %arg4[%c0_115, %c0_116] : memref<64x128xbf16, #tpu.memory_space<vmem>>, vector<64x128xbf16>
    %cst_117 = arith.constant dense<0.000000e+00> : vector<2x128xf32>
    %360 = tpu.matmul %354, %359, %cst_117 {dimension_numbers = #tpu.dot_dimension_numbers<[1], [0], [0], [1], [0, 0, 1, 1], [], []>} : vector<2x64xbf16>, vector<64x128xbf16>, vector<2x128xf32> -> vector<2x128xf32>
    %361 = arith.addf %358, %360 : vector<2x128xf32>
    %362 = vector.extract_strided_slice %361 {offsets = [0, 0], sizes = [2, 96], strides = [1, 1]} : vector<2x128xf32> to vector<2x96xf32>
    %363 = arith.negf %362 : vector<2x96xf32>
    %364 = math.exp %363 : vector<2x96xf32>
    %cst_118 = arith.constant 1.000000e+00 : f32
    %365 = vector.broadcast %cst_118 : f32 to vector<2x96xf32>
    %366 = arith.addf %365, %364 : vector<2x96xf32>
    %367 = arith.divf %365, %366 : vector<2x96xf32>
    %368 = vector.extract_strided_slice %361 {offsets = [0, 96], sizes = [2, 32], strides = [1, 1]} : vector<2x128xf32> to vector<2x32xf32>
    %369 = math.tanh %368 : vector<2x32xf32>
    %370 = vector.extract_strided_slice %367 {offsets = [0, 0], sizes = [2, 32], strides = [1, 1]} : vector<2x96xf32> to vector<2x32xf32>
    %371 = vector.extract_strided_slice %367 {offsets = [0, 32], sizes = [2, 32], strides = [1, 1]} : vector<2x96xf32> to vector<2x32xf32>
    %372 = vector.extract_strided_slice %367 {offsets = [0, 64], sizes = [2, 32], strides = [1, 1]} : vector<2x96xf32> to vector<2x32xf32>
    %373 = arith.mulf %371, %323 : vector<2x32xf32>
    %374 = arith.mulf %370, %369 : vector<2x32xf32>
    %375 = arith.addf %373, %374 : vector<2x32xf32>
    %376 = math.tanh %375 : vector<2x32xf32>
    %377 = arith.mulf %372, %376 : vector<2x32xf32>
    %378 = arith.index_cast %c6_i32 : i32 to index
    %c0_119 = arith.constant 0 : index
    %c0_120 = arith.constant 0 : index
    %379 = vector.load %arg6[%378, %c0_119, %c0_120] : memref<8x2x32xf32, #tpu.memory_space<vmem>>, vector<1x2x32xf32>
    %380 = vector.shape_cast %379 : vector<1x2x32xf32> to vector<2x32xf32>
    %381 = vector.shape_cast %377 : vector<2x32xf32> to vector<1x2x32xf32>
    tpu.vector_store %arg6[%378, %c0_119, %c0_120], %381 {strides = array<i32>} : memref<8x2x32xf32, #tpu.memory_space<vmem>>, vector<1x2x32xf32>,
    %c7_i32 = arith.constant 7 : i32
    %c0_121 = arith.constant 0 : index
    %c0_122 = arith.constant 0 : index
    %c0_123 = arith.constant 0 : index
    %382 = vector.load %arg2[%c0_121, %c0_122, %c0_123] : memref<2x32x128xf32, #tpu.memory_space<vmem>>, vector<2x32x128xf32>
    %383 = vector.broadcast %cst_15 : f32 to vector<2x32xf32>
    %384 = arith.mulf %377, %383 : vector<2x32xf32>
    %385 = vector.shape_cast %384 : vector<2x32xf32> to vector<2x32x1xf32>
    %386 = vector.broadcast %385 : vector<2x32x1xf32> to vector<2x32x128xf32>
    %387 = arith.mulf %386, %382 : vector<2x32x128xf32>
    %cst_124 = arith.constant dense<0.000000e+00> : vector<2x128xf32>
    %388 = vector.multi_reduction <add>, %387, %cst_124 [1] : vector<2x32x128xf32> to vector<2x128xf32>
    %389 = vector.broadcast %17 : vector<1x128xf32> to vector<2x128xf32>
    %390 = arith.addf %388, %389 : vector<2x128xf32>
    %cst_125 = arith.constant dense<0xFF800000> : vector<2xf32>
    %391 = vector.multi_reduction <maximumf>, %390, %cst_125 [1] : vector<2x128xf32> to vector<2xf32>
    %392 = vector.shape_cast %391 : vector<2xf32> to vector<2x1xf32>
    %393 = vector.broadcast %392 : vector<2x1xf32> to vector<2x128xf32>
    %394 = arith.subf %390, %393 : vector<2x128xf32>
    %395 = math.exp %394 : vector<2x128xf32>
    %cst_126 = arith.constant dense<0.000000e+00> : vector<2xf32>
    %396 = vector.multi_reduction <add>, %395, %cst_126 [1] : vector<2x128xf32> to vector<2xf32>
    %397 = vector.shape_cast %396 : vector<2xf32> to vector<2x1xf32>
    %398 = tpu.reciprocal %397 {approx = true} : vector<2x1xf32> -> vector<2x1xf32>
    %399 = vector.broadcast %398 : vector<2x1xf32> to vector<2x128xf32>
    %400 = arith.mulf %395, %399 : vector<2x128xf32>
    %401 = vector.shape_cast %400 : vector<2x128xf32> to vector<2x1x128xf32>
    %402 = vector.broadcast %401 : vector<2x1x128xf32> to vector<2x32x128xf32>
    %403 = arith.mulf %382, %402 : vector<2x32x128xf32>
    %cst_127 = arith.constant dense<0.000000e+00> : vector<2x32xf32>
    %404 = vector.multi_reduction <add>, %403, %cst_127 [2] : vector<2x32x128xf32> to vector<2x32xf32>
    %405 = tpu.concatenate %377, %404 in 1 : vector<2x32xf32>, vector<2x32xf32> -> vector<2x64xf32>
    %406 = arith.truncf %405 : vector<2x64xf32> to vector<2x64xbf16>
    %c2_i32_128 = arith.constant 2 : i32
    %407 = arith.muli %c7_i32, %c2_i32_128 : i32
    %408 = tpu.assume_multiple %407, 2 : i32
    %409 = arith.index_cast %408 : i32 to index
    %c0_129 = arith.constant 0 : index
    %410 = vector.load %arg7[%409, %c0_129] : memref<16x128xf32, #tpu.memory_space<vmem>>, vector<2x128xf32>
    %c0_130 = arith.constant 0 : index
    %c0_131 = arith.constant 0 : index
    %411 = vector.load %arg4[%c0_130, %c0_131] : memref<64x128xbf16, #tpu.memory_space<vmem>>, vector<64x128xbf16>
    %cst_132 = arith.constant dense<0.000000e+00> : vector<2x128xf32>
    %412 = tpu.matmul %406, %411, %cst_132 {dimension_numbers = #tpu.dot_dimension_numbers<[1], [0], [0], [1], [0, 0, 1, 1], [], []>} : vector<2x64xbf16>, vector<64x128xbf16>, vector<2x128xf32> -> vector<2x128xf32>
    %413 = arith.addf %410, %412 : vector<2x128xf32>
    %414 = vector.extract_strided_slice %413 {offsets = [0, 0], sizes = [2, 96], strides = [1, 1]} : vector<2x128xf32> to vector<2x96xf32>
    %415 = arith.negf %414 : vector<2x96xf32>
    %416 = math.exp %415 : vector<2x96xf32>
    %cst_133 = arith.constant 1.000000e+00 : f32
    %417 = vector.broadcast %cst_133 : f32 to vector<2x96xf32>
    %418 = arith.addf %417, %416 : vector<2x96xf32>
    %419 = arith.divf %417, %418 : vector<2x96xf32>
    %420 = vector.extract_strided_slice %413 {offsets = [0, 96], sizes = [2, 32], strides = [1, 1]} : vector<2x128xf32> to vector<2x32xf32>
    %421 = math.tanh %420 : vector<2x32xf32>
    %422 = vector.extract_strided_slice %419 {offsets = [0, 0], sizes = [2, 32], strides = [1, 1]} : vector<2x96xf32> to vector<2x32xf32>
    %423 = vector.extract_strided_slice %419 {offsets = [0, 32], sizes = [2, 32], strides = [1, 1]} : vector<2x96xf32> to vector<2x32xf32>
    %424 = vector.extract_strided_slice %419 {offsets = [0, 64], sizes = [2, 32], strides = [1, 1]} : vector<2x96xf32> to vector<2x32xf32>
    %425 = arith.mulf %423, %375 : vector<2x32xf32>
    %426 = arith.mulf %422, %421 : vector<2x32xf32>
    %427 = arith.addf %425, %426 : vector<2x32xf32>
    %428 = math.tanh %427 : vector<2x32xf32>
    %429 = arith.mulf %424, %428 : vector<2x32xf32>
    %430 = arith.index_cast %c7_i32 : i32 to index
    %c0_134 = arith.constant 0 : index
    %c0_135 = arith.constant 0 : index
    %431 = vector.load %arg6[%430, %c0_134, %c0_135] : memref<8x2x32xf32, #tpu.memory_space<vmem>>, vector<1x2x32xf32>
    %432 = vector.shape_cast %431 : vector<1x2x32xf32> to vector<2x32xf32>
    %433 = vector.shape_cast %429 : vector<2x32xf32> to vector<1x2x32xf32>
    tpu.vector_store %arg6[%430, %c0_134, %c0_135], %433 {strides = array<i32>} : memref<8x2x32xf32, #tpu.memory_space<vmem>>, vector<1x2x32xf32>,
    %c8_i32 = arith.constant 8 : i32
    return
  }
  func.func @transform_0(%arg0: i32) -> (i32, i32, i32) {
    %c0_i32 = arith.constant 0 : i32
    %c0_i32_0 = arith.constant 0 : i32
    %c0_i32_1 = arith.constant 0 : i32
    return %c0_i32, %arg0, %c0_i32_0 : i32, i32, i32
  }
  func.func @transform_1(%arg0: i32) -> (i32, i32, i32) {
    %c0_i32 = arith.constant 0 : i32
    %c0_i32_0 = arith.constant 0 : i32
    %c0_i32_1 = arith.constant 0 : i32
    return %arg0, %c0_i32, %c0_i32_0 : i32, i32, i32
  }
  func.func @transform_2(%arg0: i32) -> (i32, i32) {
    %c0_i32 = arith.constant 0 : i32
    %c0_i32_0 = arith.constant 0 : i32
    %c0_i32_1 = arith.constant 0 : i32
    return %c0_i32, %c0_i32_0 : i32, i32
  }
  func.func @transform_3(%arg0: i32) -> (i32, i32) {
    %c0_i32 = arith.constant 0 : i32
    %c0_i32_0 = arith.constant 0 : i32
    %c0_i32_1 = arith.constant 0 : i32
    return %c0_i32, %c0_i32_0 : i32, i32
  }
  func.func @transform_4(%arg0: i32) -> (i32, i32) {
    %c0_i32 = arith.constant 0 : i32
    %c0_i32_0 = arith.constant 0 : i32
    %c0_i32_1 = arith.constant 0 : i32
    return %c0_i32, %c0_i32_0 : i32, i32
  }
  func.func @transform_5(%arg0: i32) -> (i32, i32, i32) {
    %c0_i32 = arith.constant 0 : i32
    %c0_i32_0 = arith.constant 0 : i32
    %c0_i32_1 = arith.constant 0 : i32
    return %c0_i32, %arg0, %c0_i32_0 : i32, i32, i32
  }
}

</mosaic_0001>

<llo_original>
// kernel: tpu_custom_call.1
$region0: #{tpu_custom_call.1}
  #allocation0 [shape = 'u32[]', space=smem, size = 0x4, offset = 0x4, fixed_abs, tag = 'smem constant byte address 0x4 - core index']
  #allocation1 [shape = 'u32[144,128]{1,0:T(1,128)}', space=vmem, size = 0x12000, scoped, tag = 'internal scratch']
  #allocation2 [shape = 'f32[16,128]{1,0:T(8,128)}', space=vmem, size = 0x2000, scoped, tag = 'scratch operand']
  %s0 = inlined_call_operand.hbm [shape: bf16[8,2,32], index: 0, kind: input, shape index: {}]
  %s1 = inlined_call_operand.hbm [shape: f32[2,32,128], index: 1, kind: input, shape index: {}]
  %s2 = inlined_call_operand.hbm [shape: bf16[32,128], index: 2, kind: input, shape index: {}]
  %s3 = inlined_call_operand.hbm [shape: bf16[64,128], index: 3, kind: input, shape index: {}]
  %s4 = inlined_call_operand.vmem [shape: f32[1,128], index: 4, kind: input, shape index: {}]
  %s5 = inlined_call_operand.hbm [shape: f32[8,2,32], index: 5, kind: output, shape index: {}]
  %s6 = sld [smem:[#allocation0]]
  $region46: #{tpu_custom_call.1} parent=0
    _
  %s8 = ssub.s32 1, %s6
  %s9 = scalar_select 0, %s8, %s6
  $region1: #{tpu_custom_call.1} parent=0
    #allocation3 [shape = 'u8[4096]{0}', space=vmem, size = 0x1000, scoped, tag = 'input window, operand 0, single buffered']
    #allocation4 [shape = 's32[1]{0}', space=sflag, size = 0x4, scoped, tag = 'scoped memory for tpu_custom_call.1']
    #allocation5 [shape = 's32[1]{0}', space=sflag, size = 0x4, scoped, tag = 'scoped memory for tpu_custom_call.1']
    #allocation6 [shape = 'u8[32768]{0}', space=vmem, size = 0x8000, scoped, tag = 'input window, operand 1, single buffered']
    #allocation7 [shape = 's32[1]{0}', space=sflag, size = 0x4, scoped, tag = 'scoped memory for tpu_custom_call.1']
    #allocation8 [shape = 'u8[8192]{0}', space=vmem, size = 0x2000, scoped, tag = 'input window, operand 2, single buffered']
    #allocation9 [shape = 'u8[16384]{0}', space=vmem, size = 0x4000, scoped, tag = 'input window, operand 3, single buffered']
    #allocation10 [shape = 's32[1]{0}', space=sflag, size = 0x4, scoped, tag = 'scoped memory for tpu_custom_call.1']
    #allocation11 [shape = 'u8[8192]{0}', space=vmem, size = 0x2000, scoped, tag = 'output window, operand 0, single buffered']
    %10 = vsyncpa [#allocation4], 0
    %11 = vsyncpa [#allocation7], 0
    %12 = vsyncpa [#allocation10], 0
    %13 = vsyncpa [#allocation5], 0
    // Predicated region
    $region2: #{tpu_custom_call.1} parent=1 // pred_check
      _
    $region3: #{tpu_custom_call.1} parent=1 // pred_check_branch
      %15 = sbr.rel (0) target = $region5
    $region4: #{tpu_custom_call.1} parent=1 // pred_region
      %s17 = ssub.s32 128, 128
      %18 = vsyncadd [#allocation4], %s17
      %s19 = sshll.u32 [#allocation3], 4
      %s20 = int_to_ptr.vmem [resolvable:$true] %s19
      %25 = dma.hbm_to_vmem [thread:$0]  %s0, 128, %s20, [#allocation4], 16, 16, 1
    $region5: #{tpu_custom_call.1} parent=1 // pred_fallthru
      _
    // Predicated region
    $region6: #{tpu_custom_call.1} parent=1 // pred_check
      _
    $region7: #{tpu_custom_call.1} parent=1 // pred_check_branch
      %27 = sbr.rel (0) target = $region9
    $region8: #{tpu_custom_call.1} parent=1 // pred_region
      %s29 = ssub.s32 1024, 1024
      %30 = vsyncadd [#allocation7], %s29
      %s31 = sshll.u32 [#allocation6], 4
      %s32 = int_to_ptr.vmem [resolvable:$true] %s31
      %37 = dma.hbm_to_vmem [thread:$0]  %s1, 1024, %s32, [#allocation7], 128, 128, 8
    $region9: #{tpu_custom_call.1} parent=1 // pred_fallthru
      _
    // Predicated region
    $region10: #{tpu_custom_call.1} parent=1 // pred_check
      _
    $region11: #{tpu_custom_call.1} parent=1 // pred_check_branch
      %39 = sbr.rel (0) target = $region13
    $region12: #{tpu_custom_call.1} parent=1 // pred_region
      %s41 = ssub.s32 256, 256
      %42 = vsyncadd [#allocation7], %s41
      %s43 = sshll.u32 [#allocation8], 4
      %s44 = int_to_ptr.vmem [resolvable:$true] %s43
      %49 = dma.hbm_to_vmem [thread:$0]  %s2, 256, %s44, [#allocation7], 64, 64, 4
    $region13: #{tpu_custom_call.1} parent=1 // pred_fallthru
      _
    // Predicated region
    $region14: #{tpu_custom_call.1} parent=1 // pred_check
      _
    $region15: #{tpu_custom_call.1} parent=1 // pred_check_branch
      %51 = sbr.rel (0) target = $region17
    $region16: #{tpu_custom_call.1} parent=1 // pred_region
      %s53 = ssub.s32 512, 512
      %54 = vsyncadd [#allocation10], %s53
      %s55 = sshll.u32 [#allocation9], 4
      %s56 = int_to_ptr.vmem [resolvable:$true] %s55
      %61 = dma.hbm_to_vmem [thread:$0]  %s3, 512, %s56, [#allocation10], 64, 64, 4
    $region17: #{tpu_custom_call.1} parent=1 // pred_fallthru
      _
    // Predicated region
    $region18: #{tpu_custom_call.1} parent=1 // pred_check
      _
    $region19: #{tpu_custom_call.1} parent=1 // pred_check_branch
      %63 = sbr.rel (0) target = $region21
    $region20: #{tpu_custom_call.1} parent=1 // pred_region
      _
    $region21: #{tpu_custom_call.1} parent=1 // pred_fallthru
      _
    // Predicated region
    $region22: #{tpu_custom_call.1} parent=1 // pred_check
      _
    $region23: #{tpu_custom_call.1} parent=1 // pred_check_branch
      %65 = sbr.rel (0) target = $region25
    $region24: #{tpu_custom_call.1} parent=1 // pred_region
      %66 = dma.done [#allocation4], 128
    $region25: #{tpu_custom_call.1} parent=1 // pred_fallthru
      _
    // Predicated region
    $region26: #{tpu_custom_call.1} parent=1 // pred_check
      _
    $region27: #{tpu_custom_call.1} parent=1 // pred_check_branch
      %68 = sbr.rel (0) target = $region29
    $region28: #{tpu_custom_call.1} parent=1 // pred_region
      %69 = dma.done [#allocation7], 1024
    $region29: #{tpu_custom_call.1} parent=1 // pred_fallthru
      _
    // Predicated region
    $region30: #{tpu_custom_call.1} parent=1 // pred_check
      _
    $region31: #{tpu_custom_call.1} parent=1 // pred_check_branch
      %71 = sbr.rel (0) target = $region33
    $region32: #{tpu_custom_call.1} parent=1 // pred_region
      %72 = dma.done [#allocation7], 256
    $region33: #{tpu_custom_call.1} parent=1 // pred_fallthru
      _
    // Predicated region
    $region34: #{tpu_custom_call.1} parent=1 // pred_check
      _
    $region35: #{tpu_custom_call.1} parent=1 // pred_check_branch
      %74 = sbr.rel (0) target = $region37
    $region36: #{tpu_custom_call.1} parent=1 // pred_region
      %75 = dma.done [#allocation10], 512
    $region37: #{tpu_custom_call.1} parent=1 // pred_fallthru
      _
    %v77 = vld [vmem:[#allocation6] sm:$0xff]
    %v78 = vld [vmem:[#allocation6 + $0x8] sm:$0xff]
    %v79 = vld [vmem:[#allocation6 + $0x10] sm:$0xff]
    %v80 = vld [vmem:[#allocation6 + $0x18] sm:$0xff]
    %v81 = vld [vmem:[#allocation6 + $0x20] sm:$0xff]
    %v82 = vld [vmem:[#allocation6 + $0x28] sm:$0xff]
    %v83 = vld [vmem:[#allocation6 + $0x30] sm:$0xff]
    %v84 = vld [vmem:[#allocation6 + $0x38] sm:$0xff]
    %85 = vadd.xlane.f32.xlu0 %v77
    %v86 = vpop.xlane.xlu0 %85
    %87 = vadd.xlane.f32.xlu0 %v78
    %v88 = vpop.xlane.xlu0 %87
    %89 = vadd.xlane.f32.xlu0 %v79
    %v90 = vpop.xlane.xlu0 %89
    %91 = vadd.xlane.f32.xlu0 %v80
    %v92 = vpop.xlane.xlu0 %91
    %93 = vadd.xlane.f32.xlu0 %v81
    %v94 = vpop.xlane.xlu0 %93
    %95 = vadd.xlane.f32.xlu0 %v82
    %v96 = vpop.xlane.xlu0 %95
    %97 = vadd.xlane.f32.xlu0 %v83
    %v98 = vpop.xlane.xlu0 %97
    %99 = vadd.xlane.f32.xlu0 %v84
    %v100 = vpop.xlane.xlu0 %99
    %v101 = vmul.f32 %v86, 0.0625
    %v102 = vmul.f32 %v88, 0.0625
    %v103 = vmul.f32 %v90, 0.0625
    %v104 = vmul.f32 %v92, 0.0625
    %v105 = vmul.f32 %v94, 0.0625
    %v106 = vmul.f32 %v96, 0.0625
    %v107 = vmul.f32 %v98, 0.0625
    %v108 = vmul.f32 %v100, 0.0625
    %v109 = vld [vmem:[#allocation3] sm:$0x1]
    %v110 = vld [vmem:[#allocation3 + $0x1] sm:$0x1]
    %v111 = vld [vmem:[#allocation3 + $0x2] sm:$0x1]
    %v112 = vld [vmem:[#allocation3 + $0x3] sm:$0x1]
    %v113 = vld [vmem:[#allocation3 + $0x4] sm:$0x1]
    %v114 = vld [vmem:[#allocation3 + $0x5] sm:$0x1]
    %v115 = vld [vmem:[#allocation3 + $0x6] sm:$0x1]
    %v116 = vld [vmem:[#allocation3 + $0x7] sm:$0x1]
    %v117 = vld [vmem:[#allocation8] sm:$0xf]
    %v118 = vld [vmem:[#allocation8 + $0x4] sm:$0xf]
    %v119 = vld [vmem:[#allocation8 + $0x8] sm:$0xf]
    %v120 = vld [vmem:[#allocation8 + $0xc] sm:$0xf]
    %v121 = vld [vmem:[%s4] sm:$0x1]
    %v123 = vlaneseq
    %v124 = vshrl.u32 %v123, 7
    %v125 = vsub.s32 0, %v124
    %v126 = vrot.slane %v121, %v125
    %v136 = vcombine.low %v109, %v110
    %v137 = vcombine.low %v111, %v112
    %v138 = vcombine.low %v113, %v114
    %v139 = vcombine.low %v115, %v116
    %v141 = vunpack.c.l.s4 1966171168
    %v142 = vunpack.c.0.s8 %v141
    %v143 = vlaneseq
    %v144 = vshrl.u32 %v143, 7
    %v145 = vsub.s32 %v142, %v144
    %v146 = vrot.slane %v136, %v145
    %v148 = vunpack.c.l.s4 1966171168
    %v149 = vunpack.c.0.s8 %v148
    %v150 = vlaneseq
    %v151 = vshrl.u32 %v150, 7
    %v152 = vsub.s32 %v149, %v151
    %v153 = vrot.slane %v137, %v152
    %v155 = vunpack.c.l.s4 1966171168
    %v156 = vunpack.c.0.s8 %v155
    %v157 = vlaneseq
    %v158 = vshrl.u32 %v157, 7
    %v159 = vsub.s32 %v156, %v158
    %v160 = vrot.slane %v138, %v159
    %v162 = vunpack.c.l.s4 1966171168
    %v163 = vunpack.c.0.s8 %v162
    %v164 = vlaneseq
    %v165 = vshrl.u32 %v164, 7
    %v166 = vsub.s32 %v163, %v165
    %v167 = vrot.slane %v139, %v166
    %v168 = vcombine.low %v146, %v153
    %v169 = vcombine.low %v160, %v167
    %v171 = vunpack.c.l.s4 1966171168
    %v172 = vunpack.c.0.s8 %v171
    %v173 = vlaneseq
    %v174 = vshrl.u32 %v173, 7
    %v175 = vsub.s32 %v172, %v174
    %v176 = vrot.slane %v168, %v175
    %v178 = vunpack.c.l.s4 1966171168
    %v179 = vunpack.c.0.s8 %v178
    %v180 = vlaneseq
    %v181 = vshrl.u32 %v180, 7
    %v182 = vsub.s32 %v179, %v181
    %v183 = vrot.slane %v169, %v182
    %v184 = vcombine.low %v176, %v183
    %v189 = vunpack.c.l.b16 %v117
    %v190 = vunpack.c.l.b16 %v118
    %v191 = vunpack.c.l.b16 %v119
    %v192 = vunpack.c.l.b16 %v120
    %v193 = vpack.c.b16 %v190, %v189
    %v194 = vpack.c.b16 %v192, %v191
    %vm197 = vcmask 261120
    %v199 = vsel %vm197, %v184, 0
    %201 = vmatprep.subr.bf16.mxu0 0
    %202 = vmatpush1.bf16.msra.mxu0 %v193
    %203 = vmatprep.subr.bf16.mxu0 0
    %204 = vmatpush1.bf16.msra.mxu0 %v194
    %205 = vmatprep.subr.bf16.mxu0 0
    %206 = vmatpush1.bf16.msra.mxu0 0
    %207 = vmatprep.subr.bf16.mxu0 0
    %208 = vmatpush1.bf16.msra.mxu0 0
    %209 = vmatprep.subr.bf16.mxu0 0
    %210 = vmatpush1.bf16.msra.mxu0 0
    %211 = vmatprep.subr.bf16.mxu0 0
    %212 = vmatpush1.bf16.msra.mxu0 0
    %213 = vmatprep.subr.bf16.mxu0 0
    %214 = vmatpush1.bf16.msra.mxu0 0
    %215 = vmatprep.subr.bf16.mxu0 0
    %216 = vmatpush1.bf16.msra.mxu0 0
    %217 = vmatprep.subr.bf16.mxu0 0
    %218 = vmatpush1.bf16.msra.mxu0 0
    %219 = vmatprep.subr.bf16.mxu0 0
    %220 = vmatpush1.bf16.msra.mxu0 0
    %221 = vmatprep.subr.bf16.mxu0 0
    %222 = vmatpush1.bf16.msra.mxu0 0
    %223 = vmatprep.subr.bf16.mxu0 0
    %224 = vmatpush1.bf16.msra.mxu0 0
    %225 = vmatprep.subr.bf16.mxu0 0
    %226 = vmatpush1.bf16.msra.mxu0 0
    %227 = vmatprep.subr.bf16.mxu0 0
    %228 = vmatpush1.bf16.msra.mxu0 0
    %229 = vmatprep.subr.bf16.mxu0 0
    %230 = vmatpush1.bf16.msra.mxu0 0
    %231 = vmatprep.subr.bf16.mxu0 0
    %232 = vmatpush1.bf16.msra.mxu0 0
    %233 = vmatprep.mubr.bf16.mxu0 0
    %234 = vmatmul.mubr.bf16.gmra.mrb[0].mxu0 %v199
    %v235 = vpop.f32.mrb[0].mxu0
    %v236 = vadd.f32 %v126, %v235
    %v237 = vpop.f32.mrb[0].mxu0
    %v238 = vpop.f32.mrb[0].mxu0
    %v239 = vadd.f32 %v126, %v238
    %v240 = vpop.f32.mrb[0].mxu0
    %241 = vdwg.mxu0
    %242 = vst [vmem:[#allocation2] sm:$0xff] %v236
    %243 = vst [vmem:[#allocation2 + $0x8] sm:$0xff] %v239
    %v244 = vlaneseq
    %v245 = vand.u32 %v244, 127
    %vm246 = vcmp.lt.s32.totalorder %v245, 16
    %v247 = vsel %vm246, 0.0, -1e+30
    %v248 = vld [vmem:[#allocation6] sm:$0xff]
    %v249 = vld [vmem:[#allocation6 + $0x8] sm:$0xff]
    %v250 = vld [vmem:[#allocation6 + $0x10] sm:$0xff]
    %v251 = vld [vmem:[#allocation6 + $0x18] sm:$0xff]
    %v252 = vld [vmem:[#allocation6 + $0x20] sm:$0xff]
    %v253 = vld [vmem:[#allocation6 + $0x28] sm:$0xff]
    %v254 = vld [vmem:[#allocation6 + $0x30] sm:$0xff]
    %v255 = vld [vmem:[#allocation6 + $0x38] sm:$0xff]
    %v256 = vmul.f32 %v101, 0.17677669
    %v257 = vmul.f32 %v102, 0.17677669
    %v258 = vmul.f32 %v103, 0.17677669
    %v259 = vmul.f32 %v104, 0.17677669
    %v260 = vmul.f32 %v105, 0.17677669
    %v261 = vmul.f32 %v106, 0.17677669
    %v262 = vmul.f32 %v107, 0.17677669
    %v263 = vmul.f32 %v108, 0.17677669
    %v264 = vmul.f32 %v256, %v248
    %v265 = vmul.f32 %v257, %v249
    %v266 = vmul.f32 %v258, %v250
    %v267 = vmul.f32 %v259, %v251
    %v268 = vmul.f32 %v260, %v252
    %v269 = vmul.f32 %v261, %v253
    %v270 = vmul.f32 %v262, %v254
    %v271 = vmul.f32 %v263, %v255
    %v272 = vadd.f32 %v264, %v265
    %v273 = vadd.f32 %v272, %v266
    %v274 = vadd.f32 %v273, %v267
    %v275 = vrot.slane %v274, 4
    %v276 = vadd.f32 %v274, %v275
    %v277 = vrot.slane %v276, 2
    %v278 = vadd.f32 %v276, %v277
    %v279 = vrot.slane %v278, 1
    %v280 = vadd.f32 %v278, %v279
    %v281 = vadd.f32 %v268, %v269
    %v282 = vadd.f32 %v281, %v270
    %v283 = vadd.f32 %v282, %v271
    %v284 = vrot.slane %v283, 4
    %v285 = vadd.f32 %v283, %v284
    %v286 = vrot.slane %v285, 2
    %v287 = vadd.f32 %v285, %v286
    %v288 = vrot.slane %v287, 1
    %v289 = vadd.f32 %v287, %v288
    %v290 = vadd.f32 %v280, %v247
    %v291 = vadd.f32 %v289, %v247
    %v294 = vrot.slane %v291, 7
    %vm295 = vcmask 1041409
    %v296 = vsel %vm295, %v294, %v290
    %vm298 = vcmask 1041408
    %v299 = vsel %vm298, %v296, -inf
    %300 = vmax.xlane.f32.xlu0 %v299
    %v301 = vpop.xlane.xlu0 %300
    %v303 = vrot.slane %v301, 1
    %v306 = vsub.f32 %v290, %v301
    %v307 = vsub.f32 %v291, %v303
    %v308 = vmul.f32 %v306, 1.442695
    %v309 = vpow.pop %v308
    %v310 = vmul.f32 %v307, 1.442695
    %v311 = vpow.pop %v310
    %v314 = vrot.slane %v311, 7
    %v315 = vsel %vm295, %v314, %v309
    %v317 = vsel %vm298, %v315, 0.0
    %318 = vadd.xlane.f32.xlu0 %v317
    %v319 = vpop.xlane.xlu0 %318
    %v320 = vrcp.pop %v319
    %v322 = vrot.slane %v320, 1
    %v325 = vmul.f32 %v309, %v320
    %v326 = vmul.f32 %v311, %v322
    %v327 = vlaneseq
    %v328 = vshrl.u32 %v327, 7
    %v329 = vsub.s32 0, %v328
    %v330 = vrot.slane %v325, %v329
    %v331 = vlaneseq
    %v332 = vshrl.u32 %v331, 7
    %v333 = vsub.s32 0, %v332
    %v334 = vrot.slane %v326, %v333
    %v335 = vmul.f32 %v248, %v330
    %v336 = vmul.f32 %v249, %v330
    %v337 = vmul.f32 %v250, %v330
    %v338 = vmul.f32 %v251, %v330
    %v339 = vmul.f32 %v252, %v334
    %v340 = vmul.f32 %v253, %v334
    %v341 = vmul.f32 %v254, %v334
    %v342 = vmul.f32 %v255, %v334
    %343 = vadd.xlane.f32.xlu0 %v335
    %v344 = vpop.xlane.xlu0 %343
    %345 = vadd.xlane.f32.xlu0 %v336
    %v346 = vpop.xlane.xlu0 %345
    %347 = vadd.xlane.f32.xlu0 %v337
    %v348 = vpop.xlane.xlu0 %347
    %349 = vadd.xlane.f32.xlu0 %v338
    %v350 = vpop.xlane.xlu0 %349
    %351 = vadd.xlane.f32.xlu0 %v339
    %v352 = vpop.xlane.xlu0 %351
    %353 = vadd.xlane.f32.xlu0 %v340
    %v354 = vpop.xlane.xlu0 %353
    %355 = vadd.xlane.f32.xlu0 %v341
    %v356 = vpop.xlane.xlu0 %355
    %357 = vadd.xlane.f32.xlu0 %v342
    %v358 = vpop.xlane.xlu0 %357
    %v367 = vlaneseq
    %v368 = vshrl.u32 %v367, 7
    %v369 = vsub.s32 %v245, %v368
    %v370 = vrot.slane %v101, %v369
    %v371 = vadd.s32 %v245, 4294967288
    %v372 = vlaneseq
    %v373 = vshrl.u32 %v372, 7
    %v374 = vsub.s32 %v371, %v373
    %v375 = vrot.slane %v102, %v374
    %vm376 = vcmask 130112
    %v377 = vsel %vm376, %v375, %v370
    %v378 = vadd.s32 %v245, 4294967280
    %v379 = vlaneseq
    %v380 = vshrl.u32 %v379, 7
    %v381 = vsub.s32 %v378, %v380
    %v382 = vrot.slane %v103, %v381
    %vm383 = vcmask 195712
    %v384 = vsel %vm383, %v382, %v377
    %v385 = vadd.s32 %v245, 4294967272
    %v386 = vlaneseq
    %v387 = vshrl.u32 %v386, 7
    %v388 = vsub.s32 %v385, %v387
    %v389 = vrot.slane %v104, %v388
    %vm390 = vcmask 261312
    %v391 = vsel %vm390, %v389, %v384
    %v392 = vlaneseq
    %v393 = vshrl.u32 %v392, 7
    %v394 = vsub.s32 %v245, %v393
    %v395 = vrot.slane %v105, %v394
    %v396 = vlaneseq
    %v397 = vshrl.u32 %v396, 7
    %v398 = vsub.s32 %v371, %v397
    %v399 = vrot.slane %v106, %v398
    %v400 = vsel %vm376, %v399, %v395
    %v401 = vlaneseq
    %v402 = vshrl.u32 %v401, 7
    %v403 = vsub.s32 %v378, %v402
    %v404 = vrot.slane %v107, %v403
    %v405 = vsel %vm383, %v404, %v400
    %v406 = vlaneseq
    %v407 = vshrl.u32 %v406, 7
    %v408 = vsub.s32 %v385, %v407
    %v409 = vrot.slane %v108, %v408
    %v410 = vsel %vm390, %v409, %v405
    %v411 = vsel %vm295, %v410, %v391
    %v421 = vadd.s32 %v245, 4294967264
    %v422 = vlaneseq
    %v423 = vshrl.u32 %v422, 7
    %v424 = vsub.s32 %v421, %v423
    %v425 = vrot.slane %v344, %v424
    %v426 = vadd.s32 %v245, 4294967256
    %v427 = vlaneseq
    %v428 = vshrl.u32 %v427, 7
    %v429 = vsub.s32 %v426, %v428
    %v430 = vrot.slane %v346, %v429
    %vm431 = vcmask 392512
    %v432 = vsel %vm431, %v430, %v425
    %v433 = vadd.s32 %v245, 4294967248
    %v434 = vlaneseq
    %v435 = vshrl.u32 %v434, 7
    %v436 = vsub.s32 %v433, %v435
    %v437 = vrot.slane %v348, %v436
    %vm438 = vcmask 458112
    %v439 = vsel %vm438, %v437, %v432
    %v440 = vadd.s32 %v245, 4294967240
    %v441 = vlaneseq
    %v442 = vshrl.u32 %v441, 7
    %v443 = vsub.s32 %v440, %v442
    %v444 = vrot.slane %v350, %v443
    %vm445 = vcmask 523712
    %v446 = vsel %vm445, %v444, %v439
    %v447 = vlaneseq
    %v448 = vshrl.u32 %v447, 7
    %v449 = vsub.s32 %v421, %v448
    %v450 = vrot.slane %v352, %v449
    %v451 = vlaneseq
    %v452 = vshrl.u32 %v451, 7
    %v453 = vsub.s32 %v426, %v452
    %v454 = vrot.slane %v354, %v453
    %v455 = vsel %vm431, %v454, %v450
    %v456 = vlaneseq
    %v457 = vshrl.u32 %v456, 7
    %v458 = vsub.s32 %v433, %v457
    %v459 = vrot.slane %v356, %v458
    %v460 = vsel %vm438, %v459, %v455
    %v461 = vlaneseq
    %v462 = vshrl.u32 %v461, 7
    %v463 = vsub.s32 %v440, %v462
    %v464 = vrot.slane %v358, %v463
    %v465 = vsel %vm445, %v464, %v460
    %v466 = vsel %vm295, %v465, %v446
    %v468 = vsel %vm197, %v411, %v466
    %v469 = vpack.c.bf16 %v468, %v468
    %v470 = vld [vmem:[#allocation2] sm:$0x3]
    %v471 = vld [vmem:[#allocation9] sm:$0xf]
    %v472 = vld [vmem:[#allocation9 + $0x4] sm:$0xf]
    %v473 = vld [vmem:[#allocation9 + $0x8] sm:$0xf]
    %v474 = vld [vmem:[#allocation9 + $0xc] sm:$0xf]
    %v475 = vld [vmem:[#allocation9 + $0x10] sm:$0xf]
    %v476 = vld [vmem:[#allocation9 + $0x14] sm:$0xf]
    %v477 = vld [vmem:[#allocation9 + $0x18] sm:$0xf]
    %v478 = vld [vmem:[#allocation9 + $0x1c] sm:$0xf]
    %v487 = vunpack.c.l.b16 %v471
    %v488 = vunpack.c.l.b16 %v472
    %v489 = vunpack.c.l.b16 %v473
    %v490 = vunpack.c.l.b16 %v474
    %v491 = vunpack.c.l.b16 %v475
    %v492 = vunpack.c.l.b16 %v476
    %v493 = vunpack.c.l.b16 %v477
    %v494 = vunpack.c.l.b16 %v478
    %v495 = vpack.c.b16 %v488, %v487
    %v496 = vpack.c.b16 %v490, %v489
    %v497 = vpack.c.b16 %v492, %v491
    %v498 = vpack.c.b16 %v494, %v493
    %vm503 = vcmask 523264
    %v505 = vsel %vm503, %v469, 0
    %507 = vmatprep.subr.bf16.mxu0 0
    %508 = vmatpush1.bf16.msra.mxu0 %v495
    %509 = vmatprep.subr.bf16.mxu0 0
    %510 = vmatpush1.bf16.msra.mxu0 %v496
    %511 = vmatprep.subr.bf16.mxu0 0
    %512 = vmatpush1.bf16.msra.mxu0 %v497
    %513 = vmatprep.subr.bf16.mxu0 0
    %514 = vmatpush1.bf16.msra.mxu0 %v498
    %515 = vmatprep.subr.bf16.mxu0 0
    %516 = vmatpush1.bf16.msra.mxu0 0
    %517 = vmatprep.subr.bf16.mxu0 0
    %518 = vmatpush1.bf16.msra.mxu0 0
    %519 = vmatprep.subr.bf16.mxu0 0
    %520 = vmatpush1.bf16.msra.mxu0 0
    %521 = vmatprep.subr.bf16.mxu0 0
    %522 = vmatpush1.bf16.msra.mxu0 0
    %523 = vmatprep.subr.bf16.mxu0 0
    %524 = vmatpush1.bf16.msra.mxu0 0
    %525 = vmatprep.subr.bf16.mxu0 0
    %526 = vmatpush1.bf16.msra.mxu0 0
    %527 = vmatprep.subr.bf16.mxu0 0
    %528 = vmatpush1.bf16.msra.mxu0 0
    %529 = vmatprep.subr.bf16.mxu0 0
    %530 = vmatpush1.bf16.msra.mxu0 0
    %531 = vmatprep.subr.bf16.mxu0 0
    %532 = vmatpush1.bf16.msra.mxu0 0
    %533 = vmatprep.subr.bf16.mxu0 0
    %534 = vmatpush1.bf16.msra.mxu0 0
    %535 = vmatprep.subr.bf16.mxu0 0
    %536 = vmatpush1.bf16.msra.mxu0 0
    %537 = vmatprep.subr.bf16.mxu0 0
    %538 = vmatpush1.bf16.msra.mxu0 0
    %539 = vmatprep.mubr.bf16.mxu0 0
    %540 = vmatmul.mubr.bf16.gmra.mrb[0].mxu0 %v505
    %v541 = vpop.f32.mrb[0].mxu0
    %v542 = vadd.f32 0.0, %v541
    %v543 = vpop.f32.mrb[0].mxu0
    %v544 = vpop.f32.mrb[0].mxu0
    %v545 = vpop.f32.mrb[0].mxu0
    %546 = vdwg.mxu0
    %v547 = vadd.f32 %v470, %v542
    %v548 = vxor.u32 %v547, 2147483648
    %v549 = vmul.f32 %v548, 1.442695
    %v550 = vpow.pop %v549
    %v551 = vadd.f32 %v550, 1.0
    %v552 = vrcp.pop %v551
    %v553 = vmul.f32 1.0, %v552
    %v554 = vtanh.pop %v547
    %v555 = vlaneseq
    %v556 = vshrl.u32 %v555, 7
    %v557 = vsub.s32 %v421, %v556
    %v558 = vrot.slane %v101, %v557
    %v559 = vlaneseq
    %v560 = vshrl.u32 %v559, 7
    %v561 = vsub.s32 %v426, %v560
    %v562 = vrot.slane %v102, %v561
    %v563 = vsel %vm431, %v562, %v558
    %v564 = vlaneseq
    %v565 = vshrl.u32 %v564, 7
    %v566 = vsub.s32 %v433, %v565
    %v567 = vrot.slane %v103, %v566
    %v568 = vsel %vm438, %v567, %v563
    %v569 = vlaneseq
    %v570 = vshrl.u32 %v569, 7
    %v571 = vsub.s32 %v440, %v570
    %v572 = vrot.slane %v104, %v571
    %v573 = vsel %vm445, %v572, %v568
    %v574 = vlaneseq
    %v575 = vshrl.u32 %v574, 7
    %v576 = vsub.s32 %v421, %v575
    %v577 = vrot.slane %v105, %v576
    %v578 = vlaneseq
    %v579 = vshrl.u32 %v578, 7
    %v580 = vsub.s32 %v426, %v579
    %v581 = vrot.slane %v106, %v580
    %v582 = vsel %vm431, %v581, %v577
    %v583 = vlaneseq
    %v584 = vshrl.u32 %v583, 7
    %v585 = vsub.s32 %v433, %v584
    %v586 = vrot.slane %v107, %v585
    %v587 = vsel %vm438, %v586, %v582
    %v588 = vlaneseq
    %v589 = vshrl.u32 %v588, 7
    %v590 = vsub.s32 %v440, %v589
    %v591 = vrot.slane %v108, %v590
    %v592 = vsel %vm445, %v591, %v587
    %v593 = vsel %vm295, %v592, %v573
    %v595 = vmul.f32 %v553, %v593
    %597 = vrot.lane.b32.xlu0 %v554, 32
    %v598 = vpop.permute.xlu0 %597
    %v600 = vmul.f32 %v553, %v598
    %602 = vrot.lane.b32.xlu0 %v600, 32
    %v603 = vpop.permute.xlu0 %602
    %v605 = vadd.f32 %v595, %v603
    %v606 = vtanh.pop %v605
    %608 = vrot.lane.b32.xlu0 %v606, 32
    %v609 = vpop.permute.xlu0 %608
    %v611 = vmul.f32 %v553, %v609
    %613 = vrot.lane.b32.xlu0 %v611, 64
    %v614 = vpop.permute.xlu0 %613
    %vm616 = vcmask 254976
    %617 = vst.msk [vmem:[#allocation11] sm:$0x3] %vm616, %v614
    %v618 = vld [vmem:[#allocation6] sm:$0xff]
    %v619 = vld [vmem:[#allocation6 + $0x8] sm:$0xff]
    %v620 = vld [vmem:[#allocation6 + $0x10] sm:$0xff]
    %v621 = vld [vmem:[#allocation6 + $0x18] sm:$0xff]
    %v622 = vld [vmem:[#allocation6 + $0x20] sm:$0xff]
    %v623 = vld [vmem:[#allocation6 + $0x28] sm:$0xff]
    %v624 = vld [vmem:[#allocation6 + $0x30] sm:$0xff]
    %v625 = vld [vmem:[#allocation6 + $0x38] sm:$0xff]
    %v626 = vmul.f32 %v611, 0.17677669
    %v627 = vlaneseq
    %v628 = vshrl.u32 %v627, 7
    %v629 = vsub.s32 0, %v628
    %v630 = vrot.slane %v626, %v629
    %s632 = sor.u32 256, 64
    %633 = vbcast.lane.b32.xlu0 %v630, %s632
    %v634 = vpop.permute.xlu0 %633
    %s636 = sor.u32 256, 72
    %637 = vbcast.lane.b32.xlu0 %v630, %s636
    %v638 = vpop.permute.xlu0 %637
    %s640 = sor.u32 256, 80
    %641 = vbcast.lane.b32.xlu0 %v630, %s640
    %v642 = vpop.permute.xlu0 %641
    %s644 = sor.u32 256, 88
    %645 = vbcast.lane.b32.xlu0 %v630, %s644
    %v646 = vpop.permute.xlu0 %645
    %v647 = vlaneseq
    %v648 = vshrl.u32 %v647, 7
    %v649 = vsub.s32 1, %v648
    %v650 = vrot.slane %v626, %v649
    %s652 = sor.u32 256, 64
    %653 = vbcast.lane.b32.xlu0 %v650, %s652
    %v654 = vpop.permute.xlu0 %653
    %s656 = sor.u32 256, 72
    %657 = vbcast.lane.b32.xlu0 %v650, %s656
    %v658 = vpop.permute.xlu0 %657
    %s660 = sor.u32 256, 80
    %661 = vbcast.lane.b32.xlu0 %v650, %s660
    %v662 = vpop.permute.xlu0 %661
    %s664 = sor.u32 256, 88
    %665 = vbcast.lane.b32.xlu0 %v650, %s664
    %v666 = vpop.permute.xlu0 %665
    %v667 = vmul.f32 %v634, %v618
    %v668 = vmul.f32 %v638, %v619
    %v669 = vmul.f32 %v642, %v620
    %v670 = vmul.f32 %v646, %v621
    %v671 = vmul.f32 %v654, %v622
    %v672 = vmul.f32 %v658, %v623
    %v673 = vmul.f32 %v662, %v624
    %v674 = vmul.f32 %v666, %v625
    %v675 = vadd.f32 %v667, %v668
    %v676 = vadd.f32 %v675, %v669
    %v677 = vadd.f32 %v676, %v670
    %v678 = vrot.slane %v677, 4
    %v679 = vadd.f32 %v677, %v678
    %v680 = vrot.slane %v679, 2
    %v681 = vadd.f32 %v679, %v680
    %v682 = vrot.slane %v681, 1
    %v683 = vadd.f32 %v681, %v682
    %v684 = vadd.f32 %v671, %v672
    %v685 = vadd.f32 %v684, %v673
    %v686 = vadd.f32 %v685, %v674
    %v687 = vrot.slane %v686, 4
    %v688 = vadd.f32 %v686, %v687
    %v689 = vrot.slane %v688, 2
    %v690 = vadd.f32 %v688, %v689
    %v691 = vrot.slane %v690, 1
    %v692 = vadd.f32 %v690, %v691
    %v693 = vadd.f32 %v683, %v247
    %v694 = vadd.f32 %v692, %v247
    %v697 = vrot.slane %v694, 7
    %v698 = vsel %vm295, %v697, %v693
    %v700 = vsel %vm298, %v698, -inf
    %701 = vmax.xlane.f32.xlu0 %v700
    %v702 = vpop.xlane.xlu0 %701
    %v704 = vrot.slane %v702, 1
    %v707 = vsub.f32 %v693, %v702
    %v708 = vsub.f32 %v694, %v704
    %v709 = vmul.f32 %v707, 1.442695
    %v710 = vpow.pop %v709
    %v711 = vmul.f32 %v708, 1.442695
    %v712 = vpow.pop %v711
    %v715 = vrot.slane %v712, 7
    %v716 = vsel %vm295, %v715, %v710
    %v718 = vsel %vm298, %v716, 0.0
    %719 = vadd.xlane.f32.xlu0 %v718
    %v720 = vpop.xlane.xlu0 %719
    %v721 = vrcp.pop %v720
    %v723 = vrot.slane %v721, 1
    %v726 = vmul.f32 %v710, %v721
    %v727 = vmul.f32 %v712, %v723
    %v728 = vlaneseq
    %v729 = vshrl.u32 %v728, 7
    %v730 = vsub.s32 0, %v729
    %v731 = vrot.slane %v726, %v730
    %v732 = vlaneseq
    %v733 = vshrl.u32 %v732, 7
    %v734 = vsub.s32 0, %v733
    %v735 = vrot.slane %v727, %v734
    %v736 = vmul.f32 %v618, %v731
    %v737 = vmul.f32 %v619, %v731
    %v738 = vmul.f32 %v620, %v731
    %v739 = vmul.f32 %v621, %v731
    %v740 = vmul.f32 %v622, %v735
    %v741 = vmul.f32 %v623, %v735
    %v742 = vmul.f32 %v624, %v735
    %v743 = vmul.f32 %v625, %v735
    %744 = vadd.xlane.f32.xlu0 %v736
    %v745 = vpop.xlane.xlu0 %744
    %746 = vadd.xlane.f32.xlu0 %v737
    %v747 = vpop.xlane.xlu0 %746
    %748 = vadd.xlane.f32.xlu0 %v738
    %v749 = vpop.xlane.xlu0 %748
    %750 = vadd.xlane.f32.xlu0 %v739
    %v751 = vpop.xlane.xlu0 %750
    %752 = vadd.xlane.f32.xlu0 %v740
    %v753 = vpop.xlane.xlu0 %752
    %754 = vadd.xlane.f32.xlu0 %v741
    %v755 = vpop.xlane.xlu0 %754
    %756 = vadd.xlane.f32.xlu0 %v742
    %v757 = vpop.xlane.xlu0 %756
    %758 = vadd.xlane.f32.xlu0 %v743
    %v759 = vpop.xlane.xlu0 %758
    %v768 = vlaneseq
    %v769 = vshrl.u32 %v768, 7
    %v770 = vsub.s32 %v421, %v769
    %v771 = vrot.slane %v745, %v770
    %v772 = vlaneseq
    %v773 = vshrl.u32 %v772, 7
    %v774 = vsub.s32 %v426, %v773
    %v775 = vrot.slane %v747, %v774
    %v776 = vsel %vm431, %v775, %v771
    %v777 = vlaneseq
    %v778 = vshrl.u32 %v777, 7
    %v779 = vsub.s32 %v433, %v778
    %v780 = vrot.slane %v749, %v779
    %v781 = vsel %vm438, %v780, %v776
    %v782 = vlaneseq
    %v783 = vshrl.u32 %v782, 7
    %v784 = vsub.s32 %v440, %v783
    %v785 = vrot.slane %v751, %v784
    %v786 = vsel %vm445, %v785, %v781
    %v787 = vlaneseq
    %v788 = vshrl.u32 %v787, 7
    %v789 = vsub.s32 %v421, %v788
    %v790 = vrot.slane %v753, %v789
    %v791 = vlaneseq
    %v792 = vshrl.u32 %v791, 7
    %v793 = vsub.s32 %v426, %v792
    %v794 = vrot.slane %v755, %v793
    %v795 = vsel %vm431, %v794, %v790
    %v796 = vlaneseq
    %v797 = vshrl.u32 %v796, 7
    %v798 = vsub.s32 %v433, %v797
    %v799 = vrot.slane %v757, %v798
    %v800 = vsel %vm438, %v799, %v795
    %v801 = vlaneseq
    %v802 = vshrl.u32 %v801, 7
    %v803 = vsub.s32 %v440, %v802
    %v804 = vrot.slane %v759, %v803
    %v805 = vsel %vm445, %v804, %v800
    %v806 = vsel %vm295, %v805, %v786
    %v808 = vsel %vm197, %v614, %v806
    %v809 = vpack.c.bf16 %v808, %v808
    %s810 = scalar_lea.vmem [#allocation2], 2
    %v811 = vld [vmem:[%s810] sm:$0x3]
    %v812 = vld [vmem:[#allocation9] sm:$0xf]
    %v813 = vld [vmem:[#allocation9 + $0x4] sm:$0xf]
    %v814 = vld [vmem:[#allocation9 + $0x8] sm:$0xf]
    %v815 = vld [vmem:[#allocation9 + $0xc] sm:$0xf]
    %v816 = vld [vmem:[#allocation9 + $0x10] sm:$0xf]
    %v817 = vld [vmem:[#allocation9 + $0x14] sm:$0xf]
    %v818 = vld [vmem:[#allocation9 + $0x18] sm:$0xf]
    %v819 = vld [vmem:[#allocation9 + $0x1c] sm:$0xf]
    %v828 = vunpack.c.l.b16 %v812
    %v829 = vunpack.c.l.b16 %v813
    %v830 = vunpack.c.l.b16 %v814
    %v831 = vunpack.c.l.b16 %v815
    %v832 = vunpack.c.l.b16 %v816
    %v833 = vunpack.c.l.b16 %v817
    %v834 = vunpack.c.l.b16 %v818
    %v835 = vunpack.c.l.b16 %v819
    %v836 = vpack.c.b16 %v829, %v828
    %v837 = vpack.c.b16 %v831, %v830
    %v838 = vpack.c.b16 %v833, %v832
    %v839 = vpack.c.b16 %v835, %v834
    %v845 = vsel %vm503, %v809, 0
    %847 = vmatprep.subr.bf16.mxu0 0
    %848 = vmatpush1.bf16.msra.mxu0 %v836
    %849 = vmatprep.subr.bf16.mxu0 0
    %850 = vmatpush1.bf16.msra.mxu0 %v837
    %851 = vmatprep.subr.bf16.mxu0 0
    %852 = vmatpush1.bf16.msra.mxu0 %v838
    %853 = vmatprep.subr.bf16.mxu0 0
    %854 = vmatpush1.bf16.msra.mxu0 %v839
    %855 = vmatprep.subr.bf16.mxu0 0
    %856 = vmatpush1.bf16.msra.mxu0 0
    %857 = vmatprep.subr.bf16.mxu0 0
    %858 = vmatpush1.bf16.msra.mxu0 0
    %859 = vmatprep.subr.bf16.mxu0 0
    %860 = vmatpush1.bf16.msra.mxu0 0
    %861 = vmatprep.subr.bf16.mxu0 0
    %862 = vmatpush1.bf16.msra.mxu0 0
    %863 = vmatprep.subr.bf16.mxu0 0
    %864 = vmatpush1.bf16.msra.mxu0 0
    %865 = vmatprep.subr.bf16.mxu0 0
    %866 = vmatpush1.bf16.msra.mxu0 0
    %867 = vmatprep.subr.bf16.mxu0 0
    %868 = vmatpush1.bf16.msra.mxu0 0
    %869 = vmatprep.subr.bf16.mxu0 0
    %870 = vmatpush1.bf16.msra.mxu0 0
    %871 = vmatprep.subr.bf16.mxu0 0
    %872 = vmatpush1.bf16.msra.mxu0 0
    %873 = vmatprep.subr.bf16.mxu0 0
    %874 = vmatpush1.bf16.msra.mxu0 0
    %875 = vmatprep.subr.bf16.mxu0 0
    %876 = vmatpush1.bf16.msra.mxu0 0
    %877 = vmatprep.subr.bf16.mxu0 0
    %878 = vmatpush1.bf16.msra.mxu0 0
    %879 = vmatprep.mubr.bf16.mxu0 0
    %880 = vmatmul.mubr.bf16.gmra.mrb[0].mxu0 %v845
    %v881 = vpop.f32.mrb[0].mxu0
    %v882 = vadd.f32 0.0, %v881
    %v883 = vpop.f32.mrb[0].mxu0
    %v884 = vpop.f32.mrb[0].mxu0
    %v885 = vpop.f32.mrb[0].mxu0
    %886 = vdwg.mxu0
    %v887 = vadd.f32 %v811, %v882
    %v888 = vxor.u32 %v887, 2147483648
    %v889 = vmul.f32 %v888, 1.442695
    %v890 = vpow.pop %v889
    %v891 = vadd.f32 %v890, 1.0
    %v892 = vrcp.pop %v891
    %v893 = vmul.f32 1.0, %v892
    %v894 = vtanh.pop %v887
    %v895 = vmul.f32 %v893, %v605
    %897 = vrot.lane.b32.xlu0 %v894, 32
    %v898 = vpop.permute.xlu0 %897
    %v900 = vmul.f32 %v893, %v898
    %902 = vrot.lane.b32.xlu0 %v900, 32
    %v903 = vpop.permute.xlu0 %902
    %v905 = vadd.f32 %v895, %v903
    %v906 = vtanh.pop %v905
    %908 = vrot.lane.b32.xlu0 %v906, 32
    %v909 = vpop.permute.xlu0 %908
    %v911 = vmul.f32 %v893, %v909
    %913 = vrot.lane.b32.xlu0 %v911, 64
    %v914 = vpop.permute.xlu0 %913
    %s916 = scalar_lea.vmem [#allocation11], 2
    %917 = vst.msk [vmem:[%s916] sm:$0x3] %vm616, %v914
    %v918 = vld [vmem:[#allocation6] sm:$0xff]
    %v919 = vld [vmem:[#allocation6 + $0x8] sm:$0xff]
    %v920 = vld [vmem:[#allocation6 + $0x10] sm:$0xff]
    %v921 = vld [vmem:[#allocation6 + $0x18] sm:$0xff]
    %v922 = vld [vmem:[#allocation6 + $0x20] sm:$0xff]
    %v923 = vld [vmem:[#allocation6 + $0x28] sm:$0xff]
    %v924 = vld [vmem:[#allocation6 + $0x30] sm:$0xff]
    %v925 = vld [vmem:[#allocation6 + $0x38] sm:$0xff]
    %v926 = vmul.f32 %v911, 0.17677669
    %v927 = vlaneseq
    %v928 = vshrl.u32 %v927, 7
    %v929 = vsub.s32 0, %v928
    %v930 = vrot.slane %v926, %v929
    %s932 = sor.u32 256, 64
    %933 = vbcast.lane.b32.xlu0 %v930, %s932
    %v934 = vpop.permute.xlu0 %933
    %s936 = sor.u32 256, 72
    %937 = vbcast.lane.b32.xlu0 %v930, %s936
    %v938 = vpop.permute.xlu0 %937
    %s940 = sor.u32 256, 80
    %941 = vbcast.lane.b32.xlu0 %v930, %s940
    %v942 = vpop.permute.xlu0 %941
    %s944 = sor.u32 256, 88
    %945 = vbcast.lane.b32.xlu0 %v930, %s944
    %v946 = vpop.permute.xlu0 %945
    %v947 = vlaneseq
    %v948 = vshrl.u32 %v947, 7
    %v949 = vsub.s32 1, %v948
    %v950 = vrot.slane %v926, %v949
    %s952 = sor.u32 256, 64
    %953 = vbcast.lane.b32.xlu0 %v950, %s952
    %v954 = vpop.permute.xlu0 %953
    %s956 = sor.u32 256, 72
    %957 = vbcast.lane.b32.xlu0 %v950, %s956
    %v958 = vpop.permute.xlu0 %957
    %s960 = sor.u32 256, 80
    %961 = vbcast.lane.b32.xlu0 %v950, %s960
    %v962 = vpop.permute.xlu0 %961
    %s964 = sor.u32 256, 88
    %965 = vbcast.lane.b32.xlu0 %v950, %s964
    %v966 = vpop.permute.xlu0 %965
    %v967 = vmul.f32 %v934, %v918
    %v968 = vmul.f32 %v938, %v919
    %v969 = vmul.f32 %v942, %v920
    %v970 = vmul.f32 %v946, %v921
    %v971 = vmul.f32 %v954, %v922
    %v972 = vmul.f32 %v958, %v923
    %v973 = vmul.f32 %v962, %v924
    %v974 = vmul.f32 %v966, %v925
    %v975 = vadd.f32 %v967, %v968
    %v976 = vadd.f32 %v975, %v969
    %v977 = vadd.f32 %v976, %v970
    %v978 = vrot.slane %v977, 4
    %v979 = vadd.f32 %v977, %v978
    %v980 = vrot.slane %v979, 2
    %v981 = vadd.f32 %v979, %v980
    %v982 = vrot.slane %v981, 1
    %v983 = vadd.f32 %v981, %v982
    %v984 = vadd.f32 %v971, %v972
    %v985 = vadd.f32 %v984, %v973
    %v986 = vadd.f32 %v985, %v974
    %v987 = vrot.slane %v986, 4
    %v988 = vadd.f32 %v986, %v987
    %v989 = vrot.slane %v988, 2
    %v990 = vadd.f32 %v988, %v989
    %v991 = vrot.slane %v990, 1
    %v992 = vadd.f32 %v990, %v991
    %v993 = vadd.f32 %v983, %v247
    %v994 = vadd.f32 %v992, %v247
    %v997 = vrot.slane %v994, 7
    %v998 = vsel %vm295, %v997, %v993
    %v1000 = vsel %vm298, %v998, -inf
    %1001 = vmax.xlane.f32.xlu0 %v1000
    %v1002 = vpop.xlane.xlu0 %1001
    %v1004 = vrot.slane %v1002, 1
    %v1007 = vsub.f32 %v993, %v1002
    %v1008 = vsub.f32 %v994, %v1004
    %v1009 = vmul.f32 %v1007, 1.442695
    %v1010 = vpow.pop %v1009
    %v1011 = vmul.f32 %v1008, 1.442695
    %v1012 = vpow.pop %v1011
    %v1015 = vrot.slane %v1012, 7
    %v1016 = vsel %vm295, %v1015, %v1010
    %v1018 = vsel %vm298, %v1016, 0.0
    %1019 = vadd.xlane.f32.xlu0 %v1018
    %v1020 = vpop.xlane.xlu0 %1019
    %v1021 = vrcp.pop %v1020
    %v1023 = vrot.slane %v1021, 1
    %v1026 = vmul.f32 %v1010, %v1021
    %v1027 = vmul.f32 %v1012, %v1023
    %v1028 = vlaneseq
    %v1029 = vshrl.u32 %v1028, 7
    %v1030 = vsub.s32 0, %v1029
    %v1031 = vrot.slane %v1026, %v1030
    %v1032 = vlaneseq
    %v1033 = vshrl.u32 %v1032, 7
    %v1034 = vsub.s32 0, %v1033
    %v1035 = vrot.slane %v1027, %v1034
    %v1036 = vmul.f32 %v918, %v1031
    %v1037 = vmul.f32 %v919, %v1031
    %v1038 = vmul.f32 %v920, %v1031
    %v1039 = vmul.f32 %v921, %v1031
    %v1040 = vmul.f32 %v922, %v1035
    %v1041 = vmul.f32 %v923, %v1035
    %v1042 = vmul.f32 %v924, %v1035
    %v1043 = vmul.f32 %v925, %v1035
    %1044 = vadd.xlane.f32.xlu0 %v1036
    %v1045 = vpop.xlane.xlu0 %1044
    %1046 = vadd.xlane.f32.xlu0 %v1037
    %v1047 = vpop.xlane.xlu0 %1046
    %1048 = vadd.xlane.f32.xlu0 %v1038
    %v1049 = vpop.xlane.xlu0 %1048
    %1050 = vadd.xlane.f32.xlu0 %v1039
    %v1051 = vpop.xlane.xlu0 %1050
    %1052 = vadd.xlane.f32.xlu0 %v1040
    %v1053 = vpop.xlane.xlu0 %1052
    %1054 = vadd.xlane.f32.xlu0 %v1041
    %v1055 = vpop.xlane.xlu0 %1054
    %1056 = vadd.xlane.f32.xlu0 %v1042
    %v1057 = vpop.xlane.xlu0 %1056
    %1058 = vadd.xlane.f32.xlu0 %v1043
    %v1059 = vpop.xlane.xlu0 %1058
    %v1068 = vlaneseq
    %v1069 = vshrl.u32 %v1068, 7
    %v1070 = vsub.s32 %v421, %v1069
    %v1071 = vrot.slane %v1045, %v1070
    %v1072 = vlaneseq
    %v1073 = vshrl.u32 %v1072, 7
    %v1074 = vsub.s32 %v426, %v1073
    %v1075 = vrot.slane %v1047, %v1074
    %v1076 = vsel %vm431, %v1075, %v1071
    %v1077 = vlaneseq
    %v1078 = vshrl.u32 %v1077, 7
    %v1079 = vsub.s32 %v433, %v1078
    %v1080 = vrot.slane %v1049, %v1079
    %v1081 = vsel %vm438, %v1080, %v1076
    %v1082 = vlaneseq
    %v1083 = vshrl.u32 %v1082, 7
    %v1084 = vsub.s32 %v440, %v1083
    %v1085 = vrot.slane %v1051, %v1084
    %v1086 = vsel %vm445, %v1085, %v1081
    %v1087 = vlaneseq
    %v1088 = vshrl.u32 %v1087, 7
    %v1089 = vsub.s32 %v421, %v1088
    %v1090 = vrot.slane %v1053, %v1089
    %v1091 = vlaneseq
    %v1092 = vshrl.u32 %v1091, 7
    %v1093 = vsub.s32 %v426, %v1092
    %v1094 = vrot.slane %v1055, %v1093
    %v1095 = vsel %vm431, %v1094, %v1090
    %v1096 = vlaneseq
    %v1097 = vshrl.u32 %v1096, 7
    %v1098 = vsub.s32 %v433, %v1097
    %v1099 = vrot.slane %v1057, %v1098
    %v1100 = vsel %vm438, %v1099, %v1095
    %v1101 = vlaneseq
    %v1102 = vshrl.u32 %v1101, 7
    %v1103 = vsub.s32 %v440, %v1102
    %v1104 = vrot.slane %v1059, %v1103
    %v1105 = vsel %vm445, %v1104, %v1100
    %v1106 = vsel %vm295, %v1105, %v1086
    %v1108 = vsel %vm197, %v914, %v1106
    %v1109 = vpack.c.bf16 %v1108, %v1108
    %s1110 = scalar_lea.vmem [#allocation2], 4
    %v1111 = vld [vmem:[%s1110] sm:$0x3]
    %v1112 = vld [vmem:[#allocation9] sm:$0xf]
    %v1113 = vld [vmem:[#allocation9 + $0x4] sm:$0xf]
    %v1114 = vld [vmem:[#allocation9 + $0x8] sm:$0xf]
    %v1115 = vld [vmem:[#allocation9 + $0xc] sm:$0xf]
    %v1116 = vld [vmem:[#allocation9 + $0x10] sm:$0xf]
    %v1117 = vld [vmem:[#allocation9 + $0x14] sm:$0xf]
    %v1118 = vld [vmem:[#allocation9 + $0x18] sm:$0xf]
    %v1119 = vld [vmem:[#allocation9 + $0x1c] sm:$0xf]
    %v1128 = vunpack.c.l.b16 %v1112
    %v1129 = vunpack.c.l.b16 %v1113
    %v1130 = vunpack.c.l.b16 %v1114
    %v1131 = vunpack.c.l.b16 %v1115
    %v1132 = vunpack.c.l.b16 %v1116
    %v1133 = vunpack.c.l.b16 %v1117
    %v1134 = vunpack.c.l.b16 %v1118
    %v1135 = vunpack.c.l.b16 %v1119
    %v1136 = vpack.c.b16 %v1129, %v1128
    %v1137 = vpack.c.b16 %v1131, %v1130
    %v1138 = vpack.c.b16 %v1133, %v1132
    %v1139 = vpack.c.b16 %v1135, %v1134
    %v1145 = vsel %vm503, %v1109, 0
    %1147 = vmatprep.subr.bf16.mxu0 0
    %1148 = vmatpush1.bf16.msra.mxu0 %v1136
    %1149 = vmatprep.subr.bf16.mxu0 0
    %1150 = vmatpush1.bf16.msra.mxu0 %v1137
    %1151 = vmatprep.subr.bf16.mxu0 0
    %1152 = vmatpush1.bf16.msra.mxu0 %v1138
    %1153 = vmatprep.subr.bf16.mxu0 0
    %1154 = vmatpush1.bf16.msra.mxu0 %v1139
    %1155 = vmatprep.subr.bf16.mxu0 0
    %1156 = vmatpush1.bf16.msra.mxu0 0
    %1157 = vmatprep.subr.bf16.mxu0 0
    %1158 = vmatpush1.bf16.msra.mxu0 0
    %1159 = vmatprep.subr.bf16.mxu0 0
    %1160 = vmatpush1.bf16.msra.mxu0 0
    %1161 = vmatprep.subr.bf16.mxu0 0
    %1162 = vmatpush1.bf16.msra.mxu0 0
    %1163 = vmatprep.subr.bf16.mxu0 0
    %1164 = vmatpush1.bf16.msra.mxu0 0
    %1165 = vmatprep.subr.bf16.mxu0 0
    %1166 = vmatpush1.bf16.msra.mxu0 0
    %1167 = vmatprep.subr.bf16.mxu0 0
    %1168 = vmatpush1.bf16.msra.mxu0 0
    %1169 = vmatprep.subr.bf16.mxu0 0
    %1170 = vmatpush1.bf16.msra.mxu0 0
    %1171 = vmatprep.subr.bf16.mxu0 0
    %1172 = vmatpush1.bf16.msra.mxu0 0
    %1173 = vmatprep.subr.bf16.mxu0 0
    %1174 = vmatpush1.bf16.msra.mxu0 0
    %1175 = vmatprep.subr.bf16.mxu0 0
    %1176 = vmatpush1.bf16.msra.mxu0 0
    %1177 = vmatprep.subr.bf16.mxu0 0
    %1178 = vmatpush1.bf16.msra.mxu0 0
    %1179 = vmatprep.mubr.bf16.mxu0 0
    %1180 = vmatmul.mubr.bf16.gmra.mrb[0].mxu0 %v1145
    %v1181 = vpop.f32.mrb[0].mxu0
    %v1182 = vadd.f32 0.0, %v1181
    %v1183 = vpop.f32.mrb[0].mxu0
    %v1184 = vpop.f32.mrb[0].mxu0
    %v1185 = vpop.f32.mrb[0].mxu0
    %1186 = vdwg.mxu0
    %v1187 = vadd.f32 %v1111, %v1182
    %v1188 = vxor.u32 %v1187, 2147483648
    %v1189 = vmul.f32 %v1188, 1.442695
    %v1190 = vpow.pop %v1189
    %v1191 = vadd.f32 %v1190, 1.0
    %v1192 = vrcp.pop %v1191
    %v1193 = vmul.f32 1.0, %v1192
    %v1194 = vtanh.pop %v1187
    %v1195 = vmul.f32 %v1193, %v905
    %1197 = vrot.lane.b32.xlu0 %v1194, 32
    %v1198 = vpop.permute.xlu0 %1197
    %v1200 = vmul.f32 %v1193, %v1198
    %1202 = vrot.lane.b32.xlu0 %v1200, 32
    %v1203 = vpop.permute.xlu0 %1202
    %v1205 = vadd.f32 %v1195, %v1203
    %v1206 = vtanh.pop %v1205
    %1208 = vrot.lane.b32.xlu0 %v1206, 32
    %v1209 = vpop.permute.xlu0 %1208
    %v1211 = vmul.f32 %v1193, %v1209
    %1213 = vrot.lane.b32.xlu0 %v1211, 64
    %v1214 = vpop.permute.xlu0 %1213
    %s1216 = scalar_lea.vmem [#allocation11], 4
    %1217 = vst.msk [vmem:[%s1216] sm:$0x3] %vm616, %v1214
    %v1218 = vld [vmem:[#allocation6] sm:$0xff]
    %v1219 = vld [vmem:[#allocation6 + $0x8] sm:$0xff]
    %v1220 = vld [vmem:[#allocation6 + $0x10] sm:$0xff]
    %v1221 = vld [vmem:[#allocation6 + $0x18] sm:$0xff]
    %v1222 = vld [vmem:[#allocation6 + $0x20] sm:$0xff]
    %v1223 = vld [vmem:[#allocation6 + $0x28] sm:$0xff]
    %v1224 = vld [vmem:[#allocation6 + $0x30] sm:$0xff]
    %v1225 = vld [vmem:[#allocation6 + $0x38] sm:$0xff]
    %v1226 = vmul.f32 %v1211, 0.17677669
    %v1227 = vlaneseq
    %v1228 = vshrl.u32 %v1227, 7
    %v1229 = vsub.s32 0, %v1228
    %v1230 = vrot.slane %v1226, %v1229
    %s1232 = sor.u32 256, 64
    %1233 = vbcast.lane.b32.xlu0 %v1230, %s1232
    %v1234 = vpop.permute.xlu0 %1233
    %s1236 = sor.u32 256, 72
    %1237 = vbcast.lane.b32.xlu0 %v1230, %s1236
    %v1238 = vpop.permute.xlu0 %1237
    %s1240 = sor.u32 256, 80
    %1241 = vbcast.lane.b32.xlu0 %v1230, %s1240
    %v1242 = vpop.permute.xlu0 %1241
    %s1244 = sor.u32 256, 88
    %1245 = vbcast.lane.b32.xlu0 %v1230, %s1244
    %v1246 = vpop.permute.xlu0 %1245
    %v1247 = vlaneseq
    %v1248 = vshrl.u32 %v1247, 7
    %v1249 = vsub.s32 1, %v1248
    %v1250 = vrot.slane %v1226, %v1249
    %s1252 = sor.u32 256, 64
    %1253 = vbcast.lane.b32.xlu0 %v1250, %s1252
    %v1254 = vpop.permute.xlu0 %1253
    %s1256 = sor.u32 256, 72
    %1257 = vbcast.lane.b32.xlu0 %v1250, %s1256
    %v1258 = vpop.permute.xlu0 %1257
    %s1260 = sor.u32 256, 80
    %1261 = vbcast.lane.b32.xlu0 %v1250, %s1260
    %v1262 = vpop.permute.xlu0 %1261
    %s1264 = sor.u32 256, 88
    %1265 = vbcast.lane.b32.xlu0 %v1250, %s1264
    %v1266 = vpop.permute.xlu0 %1265
    %v1267 = vmul.f32 %v1234, %v1218
    %v1268 = vmul.f32 %v1238, %v1219
    %v1269 = vmul.f32 %v1242, %v1220
    %v1270 = vmul.f32 %v1246, %v1221
    %v1271 = vmul.f32 %v1254, %v1222
    %v1272 = vmul.f32 %v1258, %v1223
    %v1273 = vmul.f32 %v1262, %v1224
    %v1274 = vmul.f32 %v1266, %v1225
    %v1275 = vadd.f32 %v1267, %v1268
    %v1276 = vadd.f32 %v1275, %v1269
    %v1277 = vadd.f32 %v1276, %v1270
    %v1278 = vrot.slane %v1277, 4
    %v1279 = vadd.f32 %v1277, %v1278
    %v1280 = vrot.slane %v1279, 2
    %v1281 = vadd.f32 %v1279, %v1280
    %v1282 = vrot.slane %v1281, 1
    %v1283 = vadd.f32 %v1281, %v1282
    %v1284 = vadd.f32 %v1271, %v1272
    %v1285 = vadd.f32 %v1284, %v1273
    %v1286 = vadd.f32 %v1285, %v1274
    %v1287 = vrot.slane %v1286, 4
    %v1288 = vadd.f32 %v1286, %v1287
    %v1289 = vrot.slane %v1288, 2
    %v1290 = vadd.f32 %v1288, %v1289
    %v1291 = vrot.slane %v1290, 1
    %v1292 = vadd.f32 %v1290, %v1291
    %v1293 = vadd.f32 %v1283, %v247
    %v1294 = vadd.f32 %v1292, %v247
    %v1297 = vrot.slane %v1294, 7
    %v1298 = vsel %vm295, %v1297, %v1293
    %v1300 = vsel %vm298, %v1298, -inf
    %1301 = vmax.xlane.f32.xlu0 %v1300
    %v1302 = vpop.xlane.xlu0 %1301
    %v1304 = vrot.slane %v1302, 1
    %v1307 = vsub.f32 %v1293, %v1302
    %v1308 = vsub.f32 %v1294, %v1304
    %v1309 = vmul.f32 %v1307, 1.442695
    %v1310 = vpow.pop %v1309
    %v1311 = vmul.f32 %v1308, 1.442695
    %v1312 = vpow.pop %v1311
    %v1315 = vrot.slane %v1312, 7
    %v1316 = vsel %vm295, %v1315, %v1310
    %v1318 = vsel %vm298, %v1316, 0.0
    %1319 = vadd.xlane.f32.xlu0 %v1318
    %v1320 = vpop.xlane.xlu0 %1319
    %v1321 = vrcp.pop %v1320
    %v1323 = vrot.slane %v1321, 1
    %v1326 = vmul.f32 %v1310, %v1321
    %v1327 = vmul.f32 %v1312, %v1323
    %v1328 = vlaneseq
    %v1329 = vshrl.u32 %v1328, 7
    %v1330 = vsub.s32 0, %v1329
    %v1331 = vrot.slane %v1326, %v1330
    %v1332 = vlaneseq
    %v1333 = vshrl.u32 %v1332, 7
    %v1334 = vsub.s32 0, %v1333
    %v1335 = vrot.slane %v1327, %v1334
    %v1336 = vmul.f32 %v1218, %v1331
    %v1337 = vmul.f32 %v1219, %v1331
    %v1338 = vmul.f32 %v1220, %v1331
    %v1339 = vmul.f32 %v1221, %v1331
    %v1340 = vmul.f32 %v1222, %v1335
    %v1341 = vmul.f32 %v1223, %v1335
    %v1342 = vmul.f32 %v1224, %v1335
    %v1343 = vmul.f32 %v1225, %v1335
    %1344 = vadd.xlane.f32.xlu0 %v1336
    %v1345 = vpop.xlane.xlu0 %1344
    %1346 = vadd.xlane.f32.xlu0 %v1337
    %v1347 = vpop.xlane.xlu0 %1346
    %1348 = vadd.xlane.f32.xlu0 %v1338
    %v1349 = vpop.xlane.xlu0 %1348
    %1350 = vadd.xlane.f32.xlu0 %v1339
    %v1351 = vpop.xlane.xlu0 %1350
    %1352 = vadd.xlane.f32.xlu0 %v1340
    %v1353 = vpop.xlane.xlu0 %1352
    %1354 = vadd.xlane.f32.xlu0 %v1341
    %v1355 = vpop.xlane.xlu0 %1354
    %1356 = vadd.xlane.f32.xlu0 %v1342
    %v1357 = vpop.xlane.xlu0 %1356
    %1358 = vadd.xlane.f32.xlu0 %v1343
    %v1359 = vpop.xlane.xlu0 %1358
    %v1368 = vlaneseq
    %v1369 = vshrl.u32 %v1368, 7
    %v1370 = vsub.s32 %v421, %v1369
    %v1371 = vrot.slane %v1345, %v1370
    %v1372 = vlaneseq
    %v1373 = vshrl.u32 %v1372, 7
    %v1374 = vsub.s32 %v426, %v1373
    %v1375 = vrot.slane %v1347, %v1374
    %v1376 = vsel %vm431, %v1375, %v1371
    %v1377 = vlaneseq
    %v1378 = vshrl.u32 %v1377, 7
    %v1379 = vsub.s32 %v433, %v1378
    %v1380 = vrot.slane %v1349, %v1379
    %v1381 = vsel %vm438, %v1380, %v1376
    %v1382 = vlaneseq
    %v1383 = vshrl.u32 %v1382, 7
    %v1384 = vsub.s32 %v440, %v1383
    %v1385 = vrot.slane %v1351, %v1384
    %v1386 = vsel %vm445, %v1385, %v1381
    %v1387 = vlaneseq
    %v1388 = vshrl.u32 %v1387, 7
    %v1389 = vsub.s32 %v421, %v1388
    %v1390 = vrot.slane %v1353, %v1389
    %v1391 = vlaneseq
    %v1392 = vshrl.u32 %v1391, 7
    %v1393 = vsub.s32 %v426, %v1392
    %v1394 = vrot.slane %v1355, %v1393
    %v1395 = vsel %vm431, %v1394, %v1390
    %v1396 = vlaneseq
    %v1397 = vshrl.u32 %v1396, 7
    %v1398 = vsub.s32 %v433, %v1397
    %v1399 = vrot.slane %v1357, %v1398
    %v1400 = vsel %vm438, %v1399, %v1395
    %v1401 = vlaneseq
    %v1402 = vshrl.u32 %v1401, 7
    %v1403 = vsub.s32 %v440, %v1402
    %v1404 = vrot.slane %v1359, %v1403
    %v1405 = vsel %vm445, %v1404, %v1400
    %v1406 = vsel %vm295, %v1405, %v1386
    %v1408 = vsel %vm197, %v1214, %v1406
    %v1409 = vpack.c.bf16 %v1408, %v1408
    %s1410 = scalar_lea.vmem [#allocation2], 6
    %v1411 = vld [vmem:[%s1410] sm:$0x3]
    %v1412 = vld [vmem:[#allocation9] sm:$0xf]
    %v1413 = vld [vmem:[#allocation9 + $0x4] sm:$0xf]
    %v1414 = vld [vmem:[#allocation9 + $0x8] sm:$0xf]
    %v1415 = vld [vmem:[#allocation9 + $0xc] sm:$0xf]
    %v1416 = vld [vmem:[#allocation9 + $0x10] sm:$0xf]
    %v1417 = vld [vmem:[#allocation9 + $0x14] sm:$0xf]
    %v1418 = vld [vmem:[#allocation9 + $0x18] sm:$0xf]
    %v1419 = vld [vmem:[#allocation9 + $0x1c] sm:$0xf]
    %v1428 = vunpack.c.l.b16 %v1412
    %v1429 = vunpack.c.l.b16 %v1413
    %v1430 = vunpack.c.l.b16 %v1414
    %v1431 = vunpack.c.l.b16 %v1415
    %v1432 = vunpack.c.l.b16 %v1416
    %v1433 = vunpack.c.l.b16 %v1417
    %v1434 = vunpack.c.l.b16 %v1418
    %v1435 = vunpack.c.l.b16 %v1419
    %v1436 = vpack.c.b16 %v1429, %v1428
    %v1437 = vpack.c.b16 %v1431, %v1430
    %v1438 = vpack.c.b16 %v1433, %v1432
    %v1439 = vpack.c.b16 %v1435, %v1434
    %v1445 = vsel %vm503, %v1409, 0
    %1447 = vmatprep.subr.bf16.mxu0 0
    %1448 = vmatpush1.bf16.msra.mxu0 %v1436
    %1449 = vmatprep.subr.bf16.mxu0 0
    %1450 = vmatpush1.bf16.msra.mxu0 %v1437
    %1451 = vmatprep.subr.bf16.mxu0 0
    %1452 = vmatpush1.bf16.msra.mxu0 %v1438
    %1453 = vmatprep.subr.bf16.mxu0 0
    %1454 = vmatpush1.bf16.msra.mxu0 %v1439
    %1455 = vmatprep.subr.bf16.mxu0 0
    %1456 = vmatpush1.bf16.msra.mxu0 0
    %1457 = vmatprep.subr.bf16.mxu0 0
    %1458 = vmatpush1.bf16.msra.mxu0 0
    %1459 = vmatprep.subr.bf16.mxu0 0
    %1460 = vmatpush1.bf16.msra.mxu0 0
    %1461 = vmatprep.subr.bf16.mxu0 0
    %1462 = vmatpush1.bf16.msra.mxu0 0
    %1463 = vmatprep.subr.bf16.mxu0 0
    %1464 = vmatpush1.bf16.msra.mxu0 0
    %1465 = vmatprep.subr.bf16.mxu0 0
    %1466 = vmatpush1.bf16.msra.mxu0 0
    %1467 = vmatprep.subr.bf16.mxu0 0
    %1468 = vmatpush1.bf16.msra.mxu0 0
    %1469 = vmatprep.subr.bf16.mxu0 0
    %1470 = vmatpush1.bf16.msra.mxu0 0
    %1471 = vmatprep.subr.bf16.mxu0 0
    %1472 = vmatpush1.bf16.msra.mxu0 0
    %1473 = vmatprep.subr.bf16.mxu0 0
    %1474 = vmatpush1.bf16.msra.mxu0 0
    %1475 = vmatprep.subr.bf16.mxu0 0
    %1476 = vmatpush1.bf16.msra.mxu0 0
    %1477 = vmatprep.subr.bf16.mxu0 0
    %1478 = vmatpush1.bf16.msra.mxu0 0
    %1479 = vmatprep.mubr.bf16.mxu0 0
    %1480 = vmatmul.mubr.bf16.gmra.mrb[0].mxu0 %v1445
    %v1481 = vpop.f32.mrb[0].mxu0
    %v1482 = vadd.f32 0.0, %v1481
    %v1483 = vpop.f32.mrb[0].mxu0
    %v1484 = vpop.f32.mrb[0].mxu0
    %v1485 = vpop.f32.mrb[0].mxu0
    %1486 = vdwg.mxu0
    %v1487 = vadd.f32 %v1411, %v1482
    %v1488 = vxor.u32 %v1487, 2147483648
    %v1489 = vmul.f32 %v1488, 1.442695
    %v1490 = vpow.pop %v1489
    %v1491 = vadd.f32 %v1490, 1.0
    %v1492 = vrcp.pop %v1491
    %v1493 = vmul.f32 1.0, %v1492
    %v1494 = vtanh.pop %v1487
    %v1495 = vmul.f32 %v1493, %v1205
    %1497 = vrot.lane.b32.xlu0 %v1494, 32
    %v1498 = vpop.permute.xlu0 %1497
    %v1500 = vmul.f32 %v1493, %v1498
    %1502 = vrot.lane.b32.xlu0 %v1500, 32
    %v1503 = vpop.permute.xlu0 %1502
    %v1505 = vadd.f32 %v1495, %v1503
    %v1506 = vtanh.pop %v1505
    %1508 = vrot.lane.b32.xlu0 %v1506, 32
    %v1509 = vpop.permute.xlu0 %1508
    %v1511 = vmul.f32 %v1493, %v1509
    %1513 = vrot.lane.b32.xlu0 %v1511, 64
    %v1514 = vpop.permute.xlu0 %1513
    %s1516 = scalar_lea.vmem [#allocation11], 6
    %1517 = vst.msk [vmem:[%s1516] sm:$0x3] %vm616, %v1514
    %v1518 = vld [vmem:[#allocation6] sm:$0xff]
    %v1519 = vld [vmem:[#allocation6 + $0x8] sm:$0xff]
    %v1520 = vld [vmem:[#allocation6 + $0x10] sm:$0xff]
    %v1521 = vld [vmem:[#allocation6 + $0x18] sm:$0xff]
    %v1522 = vld [vmem:[#allocation6 + $0x20] sm:$0xff]
    %v1523 = vld [vmem:[#allocation6 + $0x28] sm:$0xff]
    %v1524 = vld [vmem:[#allocation6 + $0x30] sm:$0xff]
    %v1525 = vld [vmem:[#allocation6 + $0x38] sm:$0xff]
    %v1526 = vmul.f32 %v1511, 0.17677669
    %v1527 = vlaneseq
    %v1528 = vshrl.u32 %v1527, 7
    %v1529 = vsub.s32 0, %v1528
    %v1530 = vrot.slane %v1526, %v1529
    %s1532 = sor.u32 256, 64
    %1533 = vbcast.lane.b32.xlu0 %v1530, %s1532
    %v1534 = vpop.permute.xlu0 %1533
    %s1536 = sor.u32 256, 72
    %1537 = vbcast.lane.b32.xlu0 %v1530, %s1536
    %v1538 = vpop.permute.xlu0 %1537
    %s1540 = sor.u32 256, 80
    %1541 = vbcast.lane.b32.xlu0 %v1530, %s1540
    %v1542 = vpop.permute.xlu0 %1541
    %s1544 = sor.u32 256, 88
    %1545 = vbcast.lane.b32.xlu0 %v1530, %s1544
    %v1546 = vpop.permute.xlu0 %1545
    %v1547 = vlaneseq
    %v1548 = vshrl.u32 %v1547, 7
    %v1549 = vsub.s32 1, %v1548
    %v1550 = vrot.slane %v1526, %v1549
    %s1552 = sor.u32 256, 64
    %1553 = vbcast.lane.b32.xlu0 %v1550, %s1552
    %v1554 = vpop.permute.xlu0 %1553
    %s1556 = sor.u32 256, 72
    %1557 = vbcast.lane.b32.xlu0 %v1550, %s1556
    %v1558 = vpop.permute.xlu0 %1557
    %s1560 = sor.u32 256, 80
    %1561 = vbcast.lane.b32.xlu0 %v1550, %s1560
    %v1562 = vpop.permute.xlu0 %1561
    %s1564 = sor.u32 256, 88
    %1565 = vbcast.lane.b32.xlu0 %v1550, %s1564
    %v1566 = vpop.permute.xlu0 %1565
    %v1567 = vmul.f32 %v1534, %v1518
    %v1568 = vmul.f32 %v1538, %v1519
    %v1569 = vmul.f32 %v1542, %v1520
    %v1570 = vmul.f32 %v1546, %v1521
    %v1571 = vmul.f32 %v1554, %v1522
    %v1572 = vmul.f32 %v1558, %v1523
    %v1573 = vmul.f32 %v1562, %v1524
    %v1574 = vmul.f32 %v1566, %v1525
    %v1575 = vadd.f32 %v1567, %v1568
    %v1576 = vadd.f32 %v1575, %v1569
    %v1577 = vadd.f32 %v1576, %v1570
    %v1578 = vrot.slane %v1577, 4
    %v1579 = vadd.f32 %v1577, %v1578
    %v1580 = vrot.slane %v1579, 2
    %v1581 = vadd.f32 %v1579, %v1580
    %v1582 = vrot.slane %v1581, 1
    %v1583 = vadd.f32 %v1581, %v1582
    %v1584 = vadd.f32 %v1571, %v1572
    %v1585 = vadd.f32 %v1584, %v1573
    %v1586 = vadd.f32 %v1585, %v1574
    %v1587 = vrot.slane %v1586, 4
    %v1588 = vadd.f32 %v1586, %v1587
    %v1589 = vrot.slane %v1588, 2
    %v1590 = vadd.f32 %v1588, %v1589
    %v1591 = vrot.slane %v1590, 1
    %v1592 = vadd.f32 %v1590, %v1591
    %v1593 = vadd.f32 %v1583, %v247
    %v1594 = vadd.f32 %v1592, %v247
    %v1597 = vrot.slane %v1594, 7
    %v1598 = vsel %vm295, %v1597, %v1593
    %v1600 = vsel %vm298, %v1598, -inf
    %1601 = vmax.xlane.f32.xlu0 %v1600
    %v1602 = vpop.xlane.xlu0 %1601
    %v1604 = vrot.slane %v1602, 1
    %v1607 = vsub.f32 %v1593, %v1602
    %v1608 = vsub.f32 %v1594, %v1604
    %v1609 = vmul.f32 %v1607, 1.442695
    %v1610 = vpow.pop %v1609
    %v1611 = vmul.f32 %v1608, 1.442695
    %v1612 = vpow.pop %v1611
    %v1615 = vrot.slane %v1612, 7
    %v1616 = vsel %vm295, %v1615, %v1610
    %v1618 = vsel %vm298, %v1616, 0.0
    %1619 = vadd.xlane.f32.xlu0 %v1618
    %v1620 = vpop.xlane.xlu0 %1619
    %v1621 = vrcp.pop %v1620
    %v1623 = vrot.slane %v1621, 1
    %v1626 = vmul.f32 %v1610, %v1621
    %v1627 = vmul.f32 %v1612, %v1623
    %v1628 = vlaneseq
    %v1629 = vshrl.u32 %v1628, 7
    %v1630 = vsub.s32 0, %v1629
    %v1631 = vrot.slane %v1626, %v1630
    %v1632 = vlaneseq
    %v1633 = vshrl.u32 %v1632, 7
    %v1634 = vsub.s32 0, %v1633
    %v1635 = vrot.slane %v1627, %v1634
    %v1636 = vmul.f32 %v1518, %v1631
    %v1637 = vmul.f32 %v1519, %v1631
    %v1638 = vmul.f32 %v1520, %v1631
    %v1639 = vmul.f32 %v1521, %v1631
    %v1640 = vmul.f32 %v1522, %v1635
    %v1641 = vmul.f32 %v1523, %v1635
    %v1642 = vmul.f32 %v1524, %v1635
    %v1643 = vmul.f32 %v1525, %v1635
    %1644 = vadd.xlane.f32.xlu0 %v1636
    %v1645 = vpop.xlane.xlu0 %1644
    %1646 = vadd.xlane.f32.xlu0 %v1637
    %v1647 = vpop.xlane.xlu0 %1646
    %1648 = vadd.xlane.f32.xlu0 %v1638
    %v1649 = vpop.xlane.xlu0 %1648
    %1650 = vadd.xlane.f32.xlu0 %v1639
    %v1651 = vpop.xlane.xlu0 %1650
    %1652 = vadd.xlane.f32.xlu0 %v1640
    %v1653 = vpop.xlane.xlu0 %1652
    %1654 = vadd.xlane.f32.xlu0 %v1641
    %v1655 = vpop.xlane.xlu0 %1654
    %1656 = vadd.xlane.f32.xlu0 %v1642
    %v1657 = vpop.xlane.xlu0 %1656
    %1658 = vadd.xlane.f32.xlu0 %v1643
    %v1659 = vpop.xlane.xlu0 %1658
    %v1668 = vlaneseq
    %v1669 = vshrl.u32 %v1668, 7
    %v1670 = vsub.s32 %v421, %v1669
    %v1671 = vrot.slane %v1645, %v1670
    %v1672 = vlaneseq
    %v1673 = vshrl.u32 %v1672, 7
    %v1674 = vsub.s32 %v426, %v1673
    %v1675 = vrot.slane %v1647, %v1674
    %v1676 = vsel %vm431, %v1675, %v1671
    %v1677 = vlaneseq
    %v1678 = vshrl.u32 %v1677, 7
    %v1679 = vsub.s32 %v433, %v1678
    %v1680 = vrot.slane %v1649, %v1679
    %v1681 = vsel %vm438, %v1680, %v1676
    %v1682 = vlaneseq
    %v1683 = vshrl.u32 %v1682, 7
    %v1684 = vsub.s32 %v440, %v1683
    %v1685 = vrot.slane %v1651, %v1684
    %v1686 = vsel %vm445, %v1685, %v1681
    %v1687 = vlaneseq
    %v1688 = vshrl.u32 %v1687, 7
    %v1689 = vsub.s32 %v421, %v1688
    %v1690 = vrot.slane %v1653, %v1689
    %v1691 = vlaneseq
    %v1692 = vshrl.u32 %v1691, 7
    %v1693 = vsub.s32 %v426, %v1692
    %v1694 = vrot.slane %v1655, %v1693
    %v1695 = vsel %vm431, %v1694, %v1690
    %v1696 = vlaneseq
    %v1697 = vshrl.u32 %v1696, 7
    %v1698 = vsub.s32 %v433, %v1697
    %v1699 = vrot.slane %v1657, %v1698
    %v1700 = vsel %vm438, %v1699, %v1695
    %v1701 = vlaneseq
    %v1702 = vshrl.u32 %v1701, 7
    %v1703 = vsub.s32 %v440, %v1702
    %v1704 = vrot.slane %v1659, %v1703
    %v1705 = vsel %vm445, %v1704, %v1700
    %v1706 = vsel %vm295, %v1705, %v1686
    %v1708 = vsel %vm197, %v1514, %v1706
    %v1709 = vpack.c.bf16 %v1708, %v1708
    %s1710 = scalar_lea.vmem [#allocation2], 8
    %v1711 = vld [vmem:[%s1710] sm:$0x3]
    %v1712 = vld [vmem:[#allocation9] sm:$0xf]
    %v1713 = vld [vmem:[#allocation9 + $0x4] sm:$0xf]
    %v1714 = vld [vmem:[#allocation9 + $0x8] sm:$0xf]
    %v1715 = vld [vmem:[#allocation9 + $0xc] sm:$0xf]
    %v1716 = vld [vmem:[#allocation9 + $0x10] sm:$0xf]
    %v1717 = vld [vmem:[#allocation9 + $0x14] sm:$0xf]
    %v1718 = vld [vmem:[#allocation9 + $0x18] sm:$0xf]
    %v1719 = vld [vmem:[#allocation9 + $0x1c] sm:$0xf]
    %v1728 = vunpack.c.l.b16 %v1712
    %v1729 = vunpack.c.l.b16 %v1713
    %v1730 = vunpack.c.l.b16 %v1714
    %v1731 = vunpack.c.l.b16 %v1715
    %v1732 = vunpack.c.l.b16 %v1716
    %v1733 = vunpack.c.l.b16 %v1717
    %v1734 = vunpack.c.l.b16 %v1718
    %v1735 = vunpack.c.l.b16 %v1719
    %v1736 = vpack.c.b16 %v1729, %v1728
    %v1737 = vpack.c.b16 %v1731, %v1730
    %v1738 = vpack.c.b16 %v1733, %v1732
    %v1739 = vpack.c.b16 %v1735, %v1734
    %v1745 = vsel %vm503, %v1709, 0
    %1747 = vmatprep.subr.bf16.mxu0 0
    %1748 = vmatpush1.bf16.msra.mxu0 %v1736
    %1749 = vmatprep.subr.bf16.mxu0 0
    %1750 = vmatpush1.bf16.msra.mxu0 %v1737
    %1751 = vmatprep.subr.bf16.mxu0 0
    %1752 = vmatpush1.bf16.msra.mxu0 %v1738
    %1753 = vmatprep.subr.bf16.mxu0 0
    %1754 = vmatpush1.bf16.msra.mxu0 %v1739
    %1755 = vmatprep.subr.bf16.mxu0 0
    %1756 = vmatpush1.bf16.msra.mxu0 0
    %1757 = vmatprep.subr.bf16.mxu0 0
    %1758 = vmatpush1.bf16.msra.mxu0 0
    %1759 = vmatprep.subr.bf16.mxu0 0
    %1760 = vmatpush1.bf16.msra.mxu0 0
    %1761 = vmatprep.subr.bf16.mxu0 0
    %1762 = vmatpush1.bf16.msra.mxu0 0
    %1763 = vmatprep.subr.bf16.mxu0 0
    %1764 = vmatpush1.bf16.msra.mxu0 0
    %1765 = vmatprep.subr.bf16.mxu0 0
    %1766 = vmatpush1.bf16.msra.mxu0 0
    %1767 = vmatprep.subr.bf16.mxu0 0
    %1768 = vmatpush1.bf16.msra.mxu0 0
    %1769 = vmatprep.subr.bf16.mxu0 0
    %1770 = vmatpush1.bf16.msra.mxu0 0
    %1771 = vmatprep.subr.bf16.mxu0 0
    %1772 = vmatpush1.bf16.msra.mxu0 0
    %1773 = vmatprep.subr.bf16.mxu0 0
    %1774 = vmatpush1.bf16.msra.mxu0 0
    %1775 = vmatprep.subr.bf16.mxu0 0
    %1776 = vmatpush1.bf16.msra.mxu0 0
    %1777 = vmatprep.subr.bf16.mxu0 0
    %1778 = vmatpush1.bf16.msra.mxu0 0
    %1779 = vmatprep.mubr.bf16.mxu0 0
    %1780 = vmatmul.mubr.bf16.gmra.mrb[0].mxu0 %v1745
    %v1781 = vpop.f32.mrb[0].mxu0
    %v1782 = vadd.f32 0.0, %v1781
    %v1783 = vpop.f32.mrb[0].mxu0
    %v1784 = vpop.f32.mrb[0].mxu0
    %v1785 = vpop.f32.mrb[0].mxu0
    %1786 = vdwg.mxu0
    %v1787 = vadd.f32 %v1711, %v1782
    %v1788 = vxor.u32 %v1787, 2147483648
    %v1789 = vmul.f32 %v1788, 1.442695
    %v1790 = vpow.pop %v1789
    %v1791 = vadd.f32 %v1790, 1.0
    %v1792 = vrcp.pop %v1791
    %v1793 = vmul.f32 1.0, %v1792
    %v1794 = vtanh.pop %v1787
    %v1795 = vmul.f32 %v1793, %v1505
    %1797 = vrot.lane.b32.xlu0 %v1794, 32
    %v1798 = vpop.permute.xlu0 %1797
    %v1800 = vmul.f32 %v1793, %v1798
    %1802 = vrot.lane.b32.xlu0 %v1800, 32
    %v1803 = vpop.permute.xlu0 %1802
    %v1805 = vadd.f32 %v1795, %v1803
    %v1806 = vtanh.pop %v1805
    %1808 = vrot.lane.b32.xlu0 %v1806, 32
    %v1809 = vpop.permute.xlu0 %1808
    %v1811 = vmul.f32 %v1793, %v1809
    %1813 = vrot.lane.b32.xlu0 %v1811, 64
    %v1814 = vpop.permute.xlu0 %1813
    %s1816 = scalar_lea.vmem [#allocation11], 8
    %1817 = vst.msk [vmem:[%s1816] sm:$0x3] %vm616, %v1814
    %v1818 = vld [vmem:[#allocation6] sm:$0xff]
    %v1819 = vld [vmem:[#allocation6 + $0x8] sm:$0xff]
    %v1820 = vld [vmem:[#allocation6 + $0x10] sm:$0xff]
    %v1821 = vld [vmem:[#allocation6 + $0x18] sm:$0xff]
    %v1822 = vld [vmem:[#allocation6 + $0x20] sm:$0xff]
    %v1823 = vld [vmem:[#allocation6 + $0x28] sm:$0xff]
    %v1824 = vld [vmem:[#allocation6 + $0x30] sm:$0xff]
    %v1825 = vld [vmem:[#allocation6 + $0x38] sm:$0xff]
    %v1826 = vmul.f32 %v1811, 0.17677669
    %v1827 = vlaneseq
    %v1828 = vshrl.u32 %v1827, 7
    %v1829 = vsub.s32 0, %v1828
    %v1830 = vrot.slane %v1826, %v1829
    %s1832 = sor.u32 256, 64
    %1833 = vbcast.lane.b32.xlu0 %v1830, %s1832
    %v1834 = vpop.permute.xlu0 %1833
    %s1836 = sor.u32 256, 72
    %1837 = vbcast.lane.b32.xlu0 %v1830, %s1836
    %v1838 = vpop.permute.xlu0 %1837
    %s1840 = sor.u32 256, 80
    %1841 = vbcast.lane.b32.xlu0 %v1830, %s1840
    %v1842 = vpop.permute.xlu0 %1841
    %s1844 = sor.u32 256, 88
    %1845 = vbcast.lane.b32.xlu0 %v1830, %s1844
    %v1846 = vpop.permute.xlu0 %1845
    %v1847 = vlaneseq
    %v1848 = vshrl.u32 %v1847, 7
    %v1849 = vsub.s32 1, %v1848
    %v1850 = vrot.slane %v1826, %v1849
    %s1852 = sor.u32 256, 64
    %1853 = vbcast.lane.b32.xlu0 %v1850, %s1852
    %v1854 = vpop.permute.xlu0 %1853
    %s1856 = sor.u32 256, 72
    %1857 = vbcast.lane.b32.xlu0 %v1850, %s1856
    %v1858 = vpop.permute.xlu0 %1857
    %s1860 = sor.u32 256, 80
    %1861 = vbcast.lane.b32.xlu0 %v1850, %s1860
    %v1862 = vpop.permute.xlu0 %1861
    %s1864 = sor.u32 256, 88
    %1865 = vbcast.lane.b32.xlu0 %v1850, %s1864
    %v1866 = vpop.permute.xlu0 %1865
    %v1867 = vmul.f32 %v1834, %v1818
    %v1868 = vmul.f32 %v1838, %v1819
    %v1869 = vmul.f32 %v1842, %v1820
    %v1870 = vmul.f32 %v1846, %v1821
    %v1871 = vmul.f32 %v1854, %v1822
    %v1872 = vmul.f32 %v1858, %v1823
    %v1873 = vmul.f32 %v1862, %v1824
    %v1874 = vmul.f32 %v1866, %v1825
    %v1875 = vadd.f32 %v1867, %v1868
    %v1876 = vadd.f32 %v1875, %v1869
    %v1877 = vadd.f32 %v1876, %v1870
    %v1878 = vrot.slane %v1877, 4
    %v1879 = vadd.f32 %v1877, %v1878
    %v1880 = vrot.slane %v1879, 2
    %v1881 = vadd.f32 %v1879, %v1880
    %v1882 = vrot.slane %v1881, 1
    %v1883 = vadd.f32 %v1881, %v1882
    %v1884 = vadd.f32 %v1871, %v1872
    %v1885 = vadd.f32 %v1884, %v1873
    %v1886 = vadd.f32 %v1885, %v1874
    %v1887 = vrot.slane %v1886, 4
    %v1888 = vadd.f32 %v1886, %v1887
    %v1889 = vrot.slane %v1888, 2
    %v1890 = vadd.f32 %v1888, %v1889
    %v1891 = vrot.slane %v1890, 1
    %v1892 = vadd.f32 %v1890, %v1891
    %v1893 = vadd.f32 %v1883, %v247
    %v1894 = vadd.f32 %v1892, %v247
    %v1897 = vrot.slane %v1894, 7
    %v1898 = vsel %vm295, %v1897, %v1893
    %v1900 = vsel %vm298, %v1898, -inf
    %1901 = vmax.xlane.f32.xlu0 %v1900
    %v1902 = vpop.xlane.xlu0 %1901
    %v1904 = vrot.slane %v1902, 1
    %v1907 = vsub.f32 %v1893, %v1902
    %v1908 = vsub.f32 %v1894, %v1904
    %v1909 = vmul.f32 %v1907, 1.442695
    %v1910 = vpow.pop %v1909
    %v1911 = vmul.f32 %v1908, 1.442695
    %v1912 = vpow.pop %v1911
    %v1915 = vrot.slane %v1912, 7
    %v1916 = vsel %vm295, %v1915, %v1910
    %v1918 = vsel %vm298, %v1916, 0.0
    %1919 = vadd.xlane.f32.xlu0 %v1918
    %v1920 = vpop.xlane.xlu0 %1919
    %v1921 = vrcp.pop %v1920
    %v1923 = vrot.slane %v1921, 1
    %v1926 = vmul.f32 %v1910, %v1921
    %v1927 = vmul.f32 %v1912, %v1923
    %v1928 = vlaneseq
    %v1929 = vshrl.u32 %v1928, 7
    %v1930 = vsub.s32 0, %v1929
    %v1931 = vrot.slane %v1926, %v1930
    %v1932 = vlaneseq
    %v1933 = vshrl.u32 %v1932, 7
    %v1934 = vsub.s32 0, %v1933
    %v1935 = vrot.slane %v1927, %v1934
    %v1936 = vmul.f32 %v1818, %v1931
    %v1937 = vmul.f32 %v1819, %v1931
    %v1938 = vmul.f32 %v1820, %v1931
    %v1939 = vmul.f32 %v1821, %v1931
    %v1940 = vmul.f32 %v1822, %v1935
    %v1941 = vmul.f32 %v1823, %v1935
    %v1942 = vmul.f32 %v1824, %v1935
    %v1943 = vmul.f32 %v1825, %v1935
    %1944 = vadd.xlane.f32.xlu0 %v1936
    %v1945 = vpop.xlane.xlu0 %1944
    %1946 = vadd.xlane.f32.xlu0 %v1937
    %v1947 = vpop.xlane.xlu0 %1946
    %1948 = vadd.xlane.f32.xlu0 %v1938
    %v1949 = vpop.xlane.xlu0 %1948
    %1950 = vadd.xlane.f32.xlu0 %v1939
    %v1951 = vpop.xlane.xlu0 %1950
    %1952 = vadd.xlane.f32.xlu0 %v1940
    %v1953 = vpop.xlane.xlu0 %1952
    %1954 = vadd.xlane.f32.xlu0 %v1941
    %v1955 = vpop.xlane.xlu0 %1954
    %1956 = vadd.xlane.f32.xlu0 %v1942
    %v1957 = vpop.xlane.xlu0 %1956
    %1958 = vadd.xlane.f32.xlu0 %v1943
    %v1959 = vpop.xlane.xlu0 %1958
    %v1968 = vlaneseq
    %v1969 = vshrl.u32 %v1968, 7
    %v1970 = vsub.s32 %v421, %v1969
    %v1971 = vrot.slane %v1945, %v1970
    %v1972 = vlaneseq
    %v1973 = vshrl.u32 %v1972, 7
    %v1974 = vsub.s32 %v426, %v1973
    %v1975 = vrot.slane %v1947, %v1974
    %v1976 = vsel %vm431, %v1975, %v1971
    %v1977 = vlaneseq
    %v1978 = vshrl.u32 %v1977, 7
    %v1979 = vsub.s32 %v433, %v1978
    %v1980 = vrot.slane %v1949, %v1979
    %v1981 = vsel %vm438, %v1980, %v1976
    %v1982 = vlaneseq
    %v1983 = vshrl.u32 %v1982, 7
    %v1984 = vsub.s32 %v440, %v1983
    %v1985 = vrot.slane %v1951, %v1984
    %v1986 = vsel %vm445, %v1985, %v1981
    %v1987 = vlaneseq
    %v1988 = vshrl.u32 %v1987, 7
    %v1989 = vsub.s32 %v421, %v1988
    %v1990 = vrot.slane %v1953, %v1989
    %v1991 = vlaneseq
    %v1992 = vshrl.u32 %v1991, 7
    %v1993 = vsub.s32 %v426, %v1992
    %v1994 = vrot.slane %v1955, %v1993
    %v1995 = vsel %vm431, %v1994, %v1990
    %v1996 = vlaneseq
    %v1997 = vshrl.u32 %v1996, 7
    %v1998 = vsub.s32 %v433, %v1997
    %v1999 = vrot.slane %v1957, %v1998
    %v2000 = vsel %vm438, %v1999, %v1995
    %v2001 = vlaneseq
    %v2002 = vshrl.u32 %v2001, 7
    %v2003 = vsub.s32 %v440, %v2002
    %v2004 = vrot.slane %v1959, %v2003
    %v2005 = vsel %vm445, %v2004, %v2000
    %v2006 = vsel %vm295, %v2005, %v1986
    %v2008 = vsel %vm197, %v1814, %v2006
    %v2009 = vpack.c.bf16 %v2008, %v2008
    %s2010 = scalar_lea.vmem [#allocation2], 10
    %v2011 = vld [vmem:[%s2010] sm:$0x3]
    %v2012 = vld [vmem:[#allocation9] sm:$0xf]
    %v2013 = vld [vmem:[#allocation9 + $0x4] sm:$0xf]
    %v2014 = vld [vmem:[#allocation9 + $0x8] sm:$0xf]
    %v2015 = vld [vmem:[#allocation9 + $0xc] sm:$0xf]
    %v2016 = vld [vmem:[#allocation9 + $0x10] sm:$0xf]
    %v2017 = vld [vmem:[#allocation9 + $0x14] sm:$0xf]
    %v2018 = vld [vmem:[#allocation9 + $0x18] sm:$0xf]
    %v2019 = vld [vmem:[#allocation9 + $0x1c] sm:$0xf]
    %v2028 = vunpack.c.l.b16 %v2012
    %v2029 = vunpack.c.l.b16 %v2013
    %v2030 = vunpack.c.l.b16 %v2014
    %v2031 = vunpack.c.l.b16 %v2015
    %v2032 = vunpack.c.l.b16 %v2016
    %v2033 = vunpack.c.l.b16 %v2017
    %v2034 = vunpack.c.l.b16 %v2018
    %v2035 = vunpack.c.l.b16 %v2019
    %v2036 = vpack.c.b16 %v2029, %v2028
    %v2037 = vpack.c.b16 %v2031, %v2030
    %v2038 = vpack.c.b16 %v2033, %v2032
    %v2039 = vpack.c.b16 %v2035, %v2034
    %v2045 = vsel %vm503, %v2009, 0
    %2047 = vmatprep.subr.bf16.mxu0 0
    %2048 = vmatpush1.bf16.msra.mxu0 %v2036
    %2049 = vmatprep.subr.bf16.mxu0 0
    %2050 = vmatpush1.bf16.msra.mxu0 %v2037
    %2051 = vmatprep.subr.bf16.mxu0 0
    %2052 = vmatpush1.bf16.msra.mxu0 %v2038
    %2053 = vmatprep.subr.bf16.mxu0 0
    %2054 = vmatpush1.bf16.msra.mxu0 %v2039
    %2055 = vmatprep.subr.bf16.mxu0 0
    %2056 = vmatpush1.bf16.msra.mxu0 0
    %2057 = vmatprep.subr.bf16.mxu0 0
    %2058 = vmatpush1.bf16.msra.mxu0 0
    %2059 = vmatprep.subr.bf16.mxu0 0
    %2060 = vmatpush1.bf16.msra.mxu0 0
    %2061 = vmatprep.subr.bf16.mxu0 0
    %2062 = vmatpush1.bf16.msra.mxu0 0
    %2063 = vmatprep.subr.bf16.mxu0 0
    %2064 = vmatpush1.bf16.msra.mxu0 0
    %2065 = vmatprep.subr.bf16.mxu0 0
    %2066 = vmatpush1.bf16.msra.mxu0 0
    %2067 = vmatprep.subr.bf16.mxu0 0
    %2068 = vmatpush1.bf16.msra.mxu0 0
    %2069 = vmatprep.subr.bf16.mxu0 0
    %2070 = vmatpush1.bf16.msra.mxu0 0
    %2071 = vmatprep.subr.bf16.mxu0 0
    %2072 = vmatpush1.bf16.msra.mxu0 0
    %2073 = vmatprep.subr.bf16.mxu0 0
    %2074 = vmatpush1.bf16.msra.mxu0 0
    %2075 = vmatprep.subr.bf16.mxu0 0
    %2076 = vmatpush1.bf16.msra.mxu0 0
    %2077 = vmatprep.subr.bf16.mxu0 0
    %2078 = vmatpush1.bf16.msra.mxu0 0
    %2079 = vmatprep.mubr.bf16.mxu0 0
    %2080 = vmatmul.mubr.bf16.gmra.mrb[0].mxu0 %v2045
    %v2081 = vpop.f32.mrb[0].mxu0
    %v2082 = vadd.f32 0.0, %v2081
    %v2083 = vpop.f32.mrb[0].mxu0
    %v2084 = vpop.f32.mrb[0].mxu0
    %v2085 = vpop.f32.mrb[0].mxu0
    %2086 = vdwg.mxu0
    %v2087 = vadd.f32 %v2011, %v2082
    %v2088 = vxor.u32 %v2087, 2147483648
    %v2089 = vmul.f32 %v2088, 1.442695
    %v2090 = vpow.pop %v2089
    %v2091 = vadd.f32 %v2090, 1.0
    %v2092 = vrcp.pop %v2091
    %v2093 = vmul.f32 1.0, %v2092
    %v2094 = vtanh.pop %v2087
    %v2095 = vmul.f32 %v2093, %v1805
    %2097 = vrot.lane.b32.xlu0 %v2094, 32
    %v2098 = vpop.permute.xlu0 %2097
    %v2100 = vmul.f32 %v2093, %v2098
    %2102 = vrot.lane.b32.xlu0 %v2100, 32
    %v2103 = vpop.permute.xlu0 %2102
    %v2105 = vadd.f32 %v2095, %v2103
    %v2106 = vtanh.pop %v2105
    %2108 = vrot.lane.b32.xlu0 %v2106, 32
    %v2109 = vpop.permute.xlu0 %2108
    %v2111 = vmul.f32 %v2093, %v2109
    %2113 = vrot.lane.b32.xlu0 %v2111, 64
    %v2114 = vpop.permute.xlu0 %2113
    %s2116 = scalar_lea.vmem [#allocation11], 10
    %2117 = vst.msk [vmem:[%s2116] sm:$0x3] %vm616, %v2114
    %v2118 = vld [vmem:[#allocation6] sm:$0xff]
    %v2119 = vld [vmem:[#allocation6 + $0x8] sm:$0xff]
    %v2120 = vld [vmem:[#allocation6 + $0x10] sm:$0xff]
    %v2121 = vld [vmem:[#allocation6 + $0x18] sm:$0xff]
    %v2122 = vld [vmem:[#allocation6 + $0x20] sm:$0xff]
    %v2123 = vld [vmem:[#allocation6 + $0x28] sm:$0xff]
    %v2124 = vld [vmem:[#allocation6 + $0x30] sm:$0xff]
    %v2125 = vld [vmem:[#allocation6 + $0x38] sm:$0xff]
    %v2126 = vmul.f32 %v2111, 0.17677669
    %v2127 = vlaneseq
    %v2128 = vshrl.u32 %v2127, 7
    %v2129 = vsub.s32 0, %v2128
    %v2130 = vrot.slane %v2126, %v2129
    %s2132 = sor.u32 256, 64
    %2133 = vbcast.lane.b32.xlu0 %v2130, %s2132
    %v2134 = vpop.permute.xlu0 %2133
    %s2136 = sor.u32 256, 72
    %2137 = vbcast.lane.b32.xlu0 %v2130, %s2136
    %v2138 = vpop.permute.xlu0 %2137
    %s2140 = sor.u32 256, 80
    %2141 = vbcast.lane.b32.xlu0 %v2130, %s2140
    %v2142 = vpop.permute.xlu0 %2141
    %s2144 = sor.u32 256, 88
    %2145 = vbcast.lane.b32.xlu0 %v2130, %s2144
    %v2146 = vpop.permute.xlu0 %2145
    %v2147 = vlaneseq
    %v2148 = vshrl.u32 %v2147, 7
    %v2149 = vsub.s32 1, %v2148
    %v2150 = vrot.slane %v2126, %v2149
    %s2152 = sor.u32 256, 64
    %2153 = vbcast.lane.b32.xlu0 %v2150, %s2152
    %v2154 = vpop.permute.xlu0 %2153
    %s2156 = sor.u32 256, 72
    %2157 = vbcast.lane.b32.xlu0 %v2150, %s2156
    %v2158 = vpop.permute.xlu0 %2157
    %s2160 = sor.u32 256, 80
    %2161 = vbcast.lane.b32.xlu0 %v2150, %s2160
    %v2162 = vpop.permute.xlu0 %2161
    %s2164 = sor.u32 256, 88
    %2165 = vbcast.lane.b32.xlu0 %v2150, %s2164
    %v2166 = vpop.permute.xlu0 %2165
    %v2167 = vmul.f32 %v2134, %v2118
    %v2168 = vmul.f32 %v2138, %v2119
    %v2169 = vmul.f32 %v2142, %v2120
    %v2170 = vmul.f32 %v2146, %v2121
    %v2171 = vmul.f32 %v2154, %v2122
    %v2172 = vmul.f32 %v2158, %v2123
    %v2173 = vmul.f32 %v2162, %v2124
    %v2174 = vmul.f32 %v2166, %v2125
    %v2175 = vadd.f32 %v2167, %v2168
    %v2176 = vadd.f32 %v2175, %v2169
    %v2177 = vadd.f32 %v2176, %v2170
    %v2178 = vrot.slane %v2177, 4
    %v2179 = vadd.f32 %v2177, %v2178
    %v2180 = vrot.slane %v2179, 2
    %v2181 = vadd.f32 %v2179, %v2180
    %v2182 = vrot.slane %v2181, 1
    %v2183 = vadd.f32 %v2181, %v2182
    %v2184 = vadd.f32 %v2171, %v2172
    %v2185 = vadd.f32 %v2184, %v2173
    %v2186 = vadd.f32 %v2185, %v2174
    %v2187 = vrot.slane %v2186, 4
    %v2188 = vadd.f32 %v2186, %v2187
    %v2189 = vrot.slane %v2188, 2
    %v2190 = vadd.f32 %v2188, %v2189
    %v2191 = vrot.slane %v2190, 1
    %v2192 = vadd.f32 %v2190, %v2191
    %v2193 = vadd.f32 %v2183, %v247
    %v2194 = vadd.f32 %v2192, %v247
    %v2197 = vrot.slane %v2194, 7
    %v2198 = vsel %vm295, %v2197, %v2193
    %v2200 = vsel %vm298, %v2198, -inf
    %2201 = vmax.xlane.f32.xlu0 %v2200
    %v2202 = vpop.xlane.xlu0 %2201
    %v2204 = vrot.slane %v2202, 1
    %v2207 = vsub.f32 %v2193, %v2202
    %v2208 = vsub.f32 %v2194, %v2204
    %v2209 = vmul.f32 %v2207, 1.442695
    %v2210 = vpow.pop %v2209
    %v2211 = vmul.f32 %v2208, 1.442695
    %v2212 = vpow.pop %v2211
    %v2215 = vrot.slane %v2212, 7
    %v2216 = vsel %vm295, %v2215, %v2210
    %v2218 = vsel %vm298, %v2216, 0.0
    %2219 = vadd.xlane.f32.xlu0 %v2218
    %v2220 = vpop.xlane.xlu0 %2219
    %v2221 = vrcp.pop %v2220
    %v2223 = vrot.slane %v2221, 1
    %v2226 = vmul.f32 %v2210, %v2221
    %v2227 = vmul.f32 %v2212, %v2223
    %v2228 = vlaneseq
    %v2229 = vshrl.u32 %v2228, 7
    %v2230 = vsub.s32 0, %v2229
    %v2231 = vrot.slane %v2226, %v2230
    %v2232 = vlaneseq
    %v2233 = vshrl.u32 %v2232, 7
    %v2234 = vsub.s32 0, %v2233
    %v2235 = vrot.slane %v2227, %v2234
    %v2236 = vmul.f32 %v2118, %v2231
    %v2237 = vmul.f32 %v2119, %v2231
    %v2238 = vmul.f32 %v2120, %v2231
    %v2239 = vmul.f32 %v2121, %v2231
    %v2240 = vmul.f32 %v2122, %v2235
    %v2241 = vmul.f32 %v2123, %v2235
    %v2242 = vmul.f32 %v2124, %v2235
    %v2243 = vmul.f32 %v2125, %v2235
    %2244 = vadd.xlane.f32.xlu0 %v2236
    %v2245 = vpop.xlane.xlu0 %2244
    %2246 = vadd.xlane.f32.xlu0 %v2237
    %v2247 = vpop.xlane.xlu0 %2246
    %2248 = vadd.xlane.f32.xlu0 %v2238
    %v2249 = vpop.xlane.xlu0 %2248
    %2250 = vadd.xlane.f32.xlu0 %v2239
    %v2251 = vpop.xlane.xlu0 %2250
    %2252 = vadd.xlane.f32.xlu0 %v2240
    %v2253 = vpop.xlane.xlu0 %2252
    %2254 = vadd.xlane.f32.xlu0 %v2241
    %v2255 = vpop.xlane.xlu0 %2254
    %2256 = vadd.xlane.f32.xlu0 %v2242
    %v2257 = vpop.xlane.xlu0 %2256
    %2258 = vadd.xlane.f32.xlu0 %v2243
    %v2259 = vpop.xlane.xlu0 %2258
    %v2268 = vlaneseq
    %v2269 = vshrl.u32 %v2268, 7
    %v2270 = vsub.s32 %v421, %v2269
    %v2271 = vrot.slane %v2245, %v2270
    %v2272 = vlaneseq
    %v2273 = vshrl.u32 %v2272, 7
    %v2274 = vsub.s32 %v426, %v2273
    %v2275 = vrot.slane %v2247, %v2274
    %v2276 = vsel %vm431, %v2275, %v2271
    %v2277 = vlaneseq
    %v2278 = vshrl.u32 %v2277, 7
    %v2279 = vsub.s32 %v433, %v2278
    %v2280 = vrot.slane %v2249, %v2279
    %v2281 = vsel %vm438, %v2280, %v2276
    %v2282 = vlaneseq
    %v2283 = vshrl.u32 %v2282, 7
    %v2284 = vsub.s32 %v440, %v2283
    %v2285 = vrot.slane %v2251, %v2284
    %v2286 = vsel %vm445, %v2285, %v2281
    %v2287 = vlaneseq
    %v2288 = vshrl.u32 %v2287, 7
    %v2289 = vsub.s32 %v421, %v2288
    %v2290 = vrot.slane %v2253, %v2289
    %v2291 = vlaneseq
    %v2292 = vshrl.u32 %v2291, 7
    %v2293 = vsub.s32 %v426, %v2292
    %v2294 = vrot.slane %v2255, %v2293
    %v2295 = vsel %vm431, %v2294, %v2290
    %v2296 = vlaneseq
    %v2297 = vshrl.u32 %v2296, 7
    %v2298 = vsub.s32 %v433, %v2297
    %v2299 = vrot.slane %v2257, %v2298
    %v2300 = vsel %vm438, %v2299, %v2295
    %v2301 = vlaneseq
    %v2302 = vshrl.u32 %v2301, 7
    %v2303 = vsub.s32 %v440, %v2302
    %v2304 = vrot.slane %v2259, %v2303
    %v2305 = vsel %vm445, %v2304, %v2300
    %v2306 = vsel %vm295, %v2305, %v2286
    %v2308 = vsel %vm197, %v2114, %v2306
    %v2309 = vpack.c.bf16 %v2308, %v2308
    %s2310 = scalar_lea.vmem [#allocation2], 12
    %v2311 = vld [vmem:[%s2310] sm:$0x3]
    %v2312 = vld [vmem:[#allocation9] sm:$0xf]
    %v2313 = vld [vmem:[#allocation9 + $0x4] sm:$0xf]
    %v2314 = vld [vmem:[#allocation9 + $0x8] sm:$0xf]
    %v2315 = vld [vmem:[#allocation9 + $0xc] sm:$0xf]
    %v2316 = vld [vmem:[#allocation9 + $0x10] sm:$0xf]
    %v2317 = vld [vmem:[#allocation9 + $0x14] sm:$0xf]
    %v2318 = vld [vmem:[#allocation9 + $0x18] sm:$0xf]
    %v2319 = vld [vmem:[#allocation9 + $0x1c] sm:$0xf]
    %v2328 = vunpack.c.l.b16 %v2312
    %v2329 = vunpack.c.l.b16 %v2313
    %v2330 = vunpack.c.l.b16 %v2314
    %v2331 = vunpack.c.l.b16 %v2315
    %v2332 = vunpack.c.l.b16 %v2316
    %v2333 = vunpack.c.l.b16 %v2317
    %v2334 = vunpack.c.l.b16 %v2318
    %v2335 = vunpack.c.l.b16 %v2319
    %v2336 = vpack.c.b16 %v2329, %v2328
    %v2337 = vpack.c.b16 %v2331, %v2330
    %v2338 = vpack.c.b16 %v2333, %v2332
    %v2339 = vpack.c.b16 %v2335, %v2334
    %v2345 = vsel %vm503, %v2309, 0
    %2347 = vmatprep.subr.bf16.mxu0 0
    %2348 = vmatpush1.bf16.msra.mxu0 %v2336
    %2349 = vmatprep.subr.bf16.mxu0 0
    %2350 = vmatpush1.bf16.msra.mxu0 %v2337
    %2351 = vmatprep.subr.bf16.mxu0 0
    %2352 = vmatpush1.bf16.msra.mxu0 %v2338
    %2353 = vmatprep.subr.bf16.mxu0 0
    %2354 = vmatpush1.bf16.msra.mxu0 %v2339
    %2355 = vmatprep.subr.bf16.mxu0 0
    %2356 = vmatpush1.bf16.msra.mxu0 0
    %2357 = vmatprep.subr.bf16.mxu0 0
    %2358 = vmatpush1.bf16.msra.mxu0 0
    %2359 = vmatprep.subr.bf16.mxu0 0
    %2360 = vmatpush1.bf16.msra.mxu0 0
    %2361 = vmatprep.subr.bf16.mxu0 0
    %2362 = vmatpush1.bf16.msra.mxu0 0
    %2363 = vmatprep.subr.bf16.mxu0 0
    %2364 = vmatpush1.bf16.msra.mxu0 0
    %2365 = vmatprep.subr.bf16.mxu0 0
    %2366 = vmatpush1.bf16.msra.mxu0 0
    %2367 = vmatprep.subr.bf16.mxu0 0
    %2368 = vmatpush1.bf16.msra.mxu0 0
    %2369 = vmatprep.subr.bf16.mxu0 0
    %2370 = vmatpush1.bf16.msra.mxu0 0
    %2371 = vmatprep.subr.bf16.mxu0 0
    %2372 = vmatpush1.bf16.msra.mxu0 0
    %2373 = vmatprep.subr.bf16.mxu0 0
    %2374 = vmatpush1.bf16.msra.mxu0 0
    %2375 = vmatprep.subr.bf16.mxu0 0
    %2376 = vmatpush1.bf16.msra.mxu0 0
    %2377 = vmatprep.subr.bf16.mxu0 0
    %2378 = vmatpush1.bf16.msra.mxu0 0
    %2379 = vmatprep.mubr.bf16.mxu0 0
    %2380 = vmatmul.mubr.bf16.gmra.mrb[0].mxu0 %v2345
    %v2381 = vpop.f32.mrb[0].mxu0
    %v2382 = vadd.f32 0.0, %v2381
    %v2383 = vpop.f32.mrb[0].mxu0
    %v2384 = vpop.f32.mrb[0].mxu0
    %v2385 = vpop.f32.mrb[0].mxu0
    %2386 = vdwg.mxu0
    %v2387 = vadd.f32 %v2311, %v2382
    %v2388 = vxor.u32 %v2387, 2147483648
    %v2389 = vmul.f32 %v2388, 1.442695
    %v2390 = vpow.pop %v2389
    %v2391 = vadd.f32 %v2390, 1.0
    %v2392 = vrcp.pop %v2391
    %v2393 = vmul.f32 1.0, %v2392
    %v2394 = vtanh.pop %v2387
    %v2395 = vmul.f32 %v2393, %v2105
    %2397 = vrot.lane.b32.xlu0 %v2394, 32
    %v2398 = vpop.permute.xlu0 %2397
    %v2400 = vmul.f32 %v2393, %v2398
    %2402 = vrot.lane.b32.xlu0 %v2400, 32
    %v2403 = vpop.permute.xlu0 %2402
    %v2405 = vadd.f32 %v2395, %v2403
    %v2406 = vtanh.pop %v2405
    %2408 = vrot.lane.b32.xlu0 %v2406, 32
    %v2409 = vpop.permute.xlu0 %2408
    %v2411 = vmul.f32 %v2393, %v2409
    %2413 = vrot.lane.b32.xlu0 %v2411, 64
    %v2414 = vpop.permute.xlu0 %2413
    %s2416 = scalar_lea.vmem [#allocation11], 12
    %2417 = vst.msk [vmem:[%s2416] sm:$0x3] %vm616, %v2414
    %v2418 = vld [vmem:[#allocation6] sm:$0xff]
    %v2419 = vld [vmem:[#allocation6 + $0x8] sm:$0xff]
    %v2420 = vld [vmem:[#allocation6 + $0x10] sm:$0xff]
    %v2421 = vld [vmem:[#allocation6 + $0x18] sm:$0xff]
    %v2422 = vld [vmem:[#allocation6 + $0x20] sm:$0xff]
    %v2423 = vld [vmem:[#allocation6 + $0x28] sm:$0xff]
    %v2424 = vld [vmem:[#allocation6 + $0x30] sm:$0xff]
    %v2425 = vld [vmem:[#allocation6 + $0x38] sm:$0xff]
    %v2426 = vmul.f32 %v2411, 0.17677669
    %v2427 = vlaneseq
    %v2428 = vshrl.u32 %v2427, 7
    %v2429 = vsub.s32 0, %v2428
    %v2430 = vrot.slane %v2426, %v2429
    %s2432 = sor.u32 256, 64
    %2433 = vbcast.lane.b32.xlu0 %v2430, %s2432
    %v2434 = vpop.permute.xlu0 %2433
    %s2436 = sor.u32 256, 72
    %2437 = vbcast.lane.b32.xlu0 %v2430, %s2436
    %v2438 = vpop.permute.xlu0 %2437
    %s2440 = sor.u32 256, 80
    %2441 = vbcast.lane.b32.xlu0 %v2430, %s2440
    %v2442 = vpop.permute.xlu0 %2441
    %s2444 = sor.u32 256, 88
    %2445 = vbcast.lane.b32.xlu0 %v2430, %s2444
    %v2446 = vpop.permute.xlu0 %2445
    %v2447 = vlaneseq
    %v2448 = vshrl.u32 %v2447, 7
    %v2449 = vsub.s32 1, %v2448
    %v2450 = vrot.slane %v2426, %v2449
    %s2452 = sor.u32 256, 64
    %2453 = vbcast.lane.b32.xlu0 %v2450, %s2452
    %v2454 = vpop.permute.xlu0 %2453
    %s2456 = sor.u32 256, 72
    %2457 = vbcast.lane.b32.xlu0 %v2450, %s2456
    %v2458 = vpop.permute.xlu0 %2457
    %s2460 = sor.u32 256, 80
    %2461 = vbcast.lane.b32.xlu0 %v2450, %s2460
    %v2462 = vpop.permute.xlu0 %2461
    %s2464 = sor.u32 256, 88
    %2465 = vbcast.lane.b32.xlu0 %v2450, %s2464
    %v2466 = vpop.permute.xlu0 %2465
    %v2467 = vmul.f32 %v2434, %v2418
    %v2468 = vmul.f32 %v2438, %v2419
    %v2469 = vmul.f32 %v2442, %v2420
    %v2470 = vmul.f32 %v2446, %v2421
    %v2471 = vmul.f32 %v2454, %v2422
    %v2472 = vmul.f32 %v2458, %v2423
    %v2473 = vmul.f32 %v2462, %v2424
    %v2474 = vmul.f32 %v2466, %v2425
    %v2475 = vadd.f32 %v2467, %v2468
    %v2476 = vadd.f32 %v2475, %v2469
    %v2477 = vadd.f32 %v2476, %v2470
    %v2478 = vrot.slane %v2477, 4
    %v2479 = vadd.f32 %v2477, %v2478
    %v2480 = vrot.slane %v2479, 2
    %v2481 = vadd.f32 %v2479, %v2480
    %v2482 = vrot.slane %v2481, 1
    %v2483 = vadd.f32 %v2481, %v2482
    %v2484 = vadd.f32 %v2471, %v2472
    %v2485 = vadd.f32 %v2484, %v2473
    %v2486 = vadd.f32 %v2485, %v2474
    %v2487 = vrot.slane %v2486, 4
    %v2488 = vadd.f32 %v2486, %v2487
    %v2489 = vrot.slane %v2488, 2
    %v2490 = vadd.f32 %v2488, %v2489
    %v2491 = vrot.slane %v2490, 1
    %v2492 = vadd.f32 %v2490, %v2491
    %v2493 = vadd.f32 %v2483, %v247
    %v2494 = vadd.f32 %v2492, %v247
    %v2497 = vrot.slane %v2494, 7
    %v2498 = vsel %vm295, %v2497, %v2493
    %v2500 = vsel %vm298, %v2498, -inf
    %2501 = vmax.xlane.f32.xlu0 %v2500
    %v2502 = vpop.xlane.xlu0 %2501
    %v2504 = vrot.slane %v2502, 1
    %v2507 = vsub.f32 %v2493, %v2502
    %v2508 = vsub.f32 %v2494, %v2504
    %v2509 = vmul.f32 %v2507, 1.442695
    %v2510 = vpow.pop %v2509
    %v2511 = vmul.f32 %v2508, 1.442695
    %v2512 = vpow.pop %v2511
    %v2515 = vrot.slane %v2512, 7
    %v2516 = vsel %vm295, %v2515, %v2510
    %v2518 = vsel %vm298, %v2516, 0.0
    %2519 = vadd.xlane.f32.xlu0 %v2518
    %v2520 = vpop.xlane.xlu0 %2519
    %v2521 = vrcp.pop %v2520
    %v2523 = vrot.slane %v2521, 1
    %v2526 = vmul.f32 %v2510, %v2521
    %v2527 = vmul.f32 %v2512, %v2523
    %v2528 = vlaneseq
    %v2529 = vshrl.u32 %v2528, 7
    %v2530 = vsub.s32 0, %v2529
    %v2531 = vrot.slane %v2526, %v2530
    %v2532 = vlaneseq
    %v2533 = vshrl.u32 %v2532, 7
    %v2534 = vsub.s32 0, %v2533
    %v2535 = vrot.slane %v2527, %v2534
    %v2536 = vmul.f32 %v2418, %v2531
    %v2537 = vmul.f32 %v2419, %v2531
    %v2538 = vmul.f32 %v2420, %v2531
    %v2539 = vmul.f32 %v2421, %v2531
    %v2540 = vmul.f32 %v2422, %v2535
    %v2541 = vmul.f32 %v2423, %v2535
    %v2542 = vmul.f32 %v2424, %v2535
    %v2543 = vmul.f32 %v2425, %v2535
    %2544 = vadd.xlane.f32.xlu0 %v2536
    %v2545 = vpop.xlane.xlu0 %2544
    %2546 = vadd.xlane.f32.xlu0 %v2537
    %v2547 = vpop.xlane.xlu0 %2546
    %2548 = vadd.xlane.f32.xlu0 %v2538
    %v2549 = vpop.xlane.xlu0 %2548
    %2550 = vadd.xlane.f32.xlu0 %v2539
    %v2551 = vpop.xlane.xlu0 %2550
    %2552 = vadd.xlane.f32.xlu0 %v2540
    %v2553 = vpop.xlane.xlu0 %2552
    %2554 = vadd.xlane.f32.xlu0 %v2541
    %v2555 = vpop.xlane.xlu0 %2554
    %2556 = vadd.xlane.f32.xlu0 %v2542
    %v2557 = vpop.xlane.xlu0 %2556
    %2558 = vadd.xlane.f32.xlu0 %v2543
    %v2559 = vpop.xlane.xlu0 %2558
    %v2568 = vlaneseq
    %v2569 = vshrl.u32 %v2568, 7
    %v2570 = vsub.s32 %v421, %v2569
    %v2571 = vrot.slane %v2545, %v2570
    %v2572 = vlaneseq
    %v2573 = vshrl.u32 %v2572, 7
    %v2574 = vsub.s32 %v426, %v2573
    %v2575 = vrot.slane %v2547, %v2574
    %v2576 = vsel %vm431, %v2575, %v2571
    %v2577 = vlaneseq
    %v2578 = vshrl.u32 %v2577, 7
    %v2579 = vsub.s32 %v433, %v2578
    %v2580 = vrot.slane %v2549, %v2579
    %v2581 = vsel %vm438, %v2580, %v2576
    %v2582 = vlaneseq
    %v2583 = vshrl.u32 %v2582, 7
    %v2584 = vsub.s32 %v440, %v2583
    %v2585 = vrot.slane %v2551, %v2584
    %v2586 = vsel %vm445, %v2585, %v2581
    %v2587 = vlaneseq
    %v2588 = vshrl.u32 %v2587, 7
    %v2589 = vsub.s32 %v421, %v2588
    %v2590 = vrot.slane %v2553, %v2589
    %v2591 = vlaneseq
    %v2592 = vshrl.u32 %v2591, 7
    %v2593 = vsub.s32 %v426, %v2592
    %v2594 = vrot.slane %v2555, %v2593
    %v2595 = vsel %vm431, %v2594, %v2590
    %v2596 = vlaneseq
    %v2597 = vshrl.u32 %v2596, 7
    %v2598 = vsub.s32 %v433, %v2597
    %v2599 = vrot.slane %v2557, %v2598
    %v2600 = vsel %vm438, %v2599, %v2595
    %v2601 = vlaneseq
    %v2602 = vshrl.u32 %v2601, 7
    %v2603 = vsub.s32 %v440, %v2602
    %v2604 = vrot.slane %v2559, %v2603
    %v2605 = vsel %vm445, %v2604, %v2600
    %v2606 = vsel %vm295, %v2605, %v2586
    %v2608 = vsel %vm197, %v2414, %v2606
    %v2609 = vpack.c.bf16 %v2608, %v2608
    %s2610 = scalar_lea.vmem [#allocation2], 14
    %v2611 = vld [vmem:[%s2610] sm:$0x3]
    %v2612 = vld [vmem:[#allocation9] sm:$0xf]
    %v2613 = vld [vmem:[#allocation9 + $0x4] sm:$0xf]
    %v2614 = vld [vmem:[#allocation9 + $0x8] sm:$0xf]
    %v2615 = vld [vmem:[#allocation9 + $0xc] sm:$0xf]
    %v2616 = vld [vmem:[#allocation9 + $0x10] sm:$0xf]
    %v2617 = vld [vmem:[#allocation9 + $0x14] sm:$0xf]
    %v2618 = vld [vmem:[#allocation9 + $0x18] sm:$0xf]
    %v2619 = vld [vmem:[#allocation9 + $0x1c] sm:$0xf]
    %v2628 = vunpack.c.l.b16 %v2612
    %v2629 = vunpack.c.l.b16 %v2613
    %v2630 = vunpack.c.l.b16 %v2614
    %v2631 = vunpack.c.l.b16 %v2615
    %v2632 = vunpack.c.l.b16 %v2616
    %v2633 = vunpack.c.l.b16 %v2617
    %v2634 = vunpack.c.l.b16 %v2618
    %v2635 = vunpack.c.l.b16 %v2619
    %v2636 = vpack.c.b16 %v2629, %v2628
    %v2637 = vpack.c.b16 %v2631, %v2630
    %v2638 = vpack.c.b16 %v2633, %v2632
    %v2639 = vpack.c.b16 %v2635, %v2634
    %v2645 = vsel %vm503, %v2609, 0
    %2647 = vmatprep.subr.bf16.mxu0 0
    %2648 = vmatpush1.bf16.msra.mxu0 %v2636
    %2649 = vmatprep.subr.bf16.mxu0 0
    %2650 = vmatpush1.bf16.msra.mxu0 %v2637
    %2651 = vmatprep.subr.bf16.mxu0 0
    %2652 = vmatpush1.bf16.msra.mxu0 %v2638
    %2653 = vmatprep.subr.bf16.mxu0 0
    %2654 = vmatpush1.bf16.msra.mxu0 %v2639
    %2655 = vmatprep.subr.bf16.mxu0 0
    %2656 = vmatpush1.bf16.msra.mxu0 0
    %2657 = vmatprep.subr.bf16.mxu0 0
    %2658 = vmatpush1.bf16.msra.mxu0 0
    %2659 = vmatprep.subr.bf16.mxu0 0
    %2660 = vmatpush1.bf16.msra.mxu0 0
    %2661 = vmatprep.subr.bf16.mxu0 0
    %2662 = vmatpush1.bf16.msra.mxu0 0
    %2663 = vmatprep.subr.bf16.mxu0 0
    %2664 = vmatpush1.bf16.msra.mxu0 0
    %2665 = vmatprep.subr.bf16.mxu0 0
    %2666 = vmatpush1.bf16.msra.mxu0 0
    %2667 = vmatprep.subr.bf16.mxu0 0
    %2668 = vmatpush1.bf16.msra.mxu0 0
    %2669 = vmatprep.subr.bf16.mxu0 0
    %2670 = vmatpush1.bf16.msra.mxu0 0
    %2671 = vmatprep.subr.bf16.mxu0 0
    %2672 = vmatpush1.bf16.msra.mxu0 0
    %2673 = vmatprep.subr.bf16.mxu0 0
    %2674 = vmatpush1.bf16.msra.mxu0 0
    %2675 = vmatprep.subr.bf16.mxu0 0
    %2676 = vmatpush1.bf16.msra.mxu0 0
    %2677 = vmatprep.subr.bf16.mxu0 0
    %2678 = vmatpush1.bf16.msra.mxu0 0
    %2679 = vmatprep.mubr.bf16.mxu0 0
    %2680 = vmatmul.mubr.bf16.gmra.mrb[0].mxu0 %v2645
    %v2681 = vpop.f32.mrb[0].mxu0
    %v2682 = vadd.f32 0.0, %v2681
    %v2683 = vpop.f32.mrb[0].mxu0
    %v2684 = vpop.f32.mrb[0].mxu0
    %v2685 = vpop.f32.mrb[0].mxu0
    %2686 = vdwg.mxu0
    %v2687 = vadd.f32 %v2611, %v2682
    %v2688 = vxor.u32 %v2687, 2147483648
    %v2689 = vmul.f32 %v2688, 1.442695
    %v2690 = vpow.pop %v2689
    %v2691 = vadd.f32 %v2690, 1.0
    %v2692 = vrcp.pop %v2691
    %v2693 = vmul.f32 1.0, %v2692
    %v2694 = vtanh.pop %v2687
    %v2695 = vmul.f32 %v2693, %v2405
    %2697 = vrot.lane.b32.xlu0 %v2694, 32
    %v2698 = vpop.permute.xlu0 %2697
    %v2700 = vmul.f32 %v2693, %v2698
    %2702 = vrot.lane.b32.xlu0 %v2700, 32
    %v2703 = vpop.permute.xlu0 %2702
    %v2705 = vadd.f32 %v2695, %v2703
    %v2706 = vtanh.pop %v2705
    %2708 = vrot.lane.b32.xlu0 %v2706, 32
    %v2709 = vpop.permute.xlu0 %2708
    %v2711 = vmul.f32 %v2693, %v2709
    %2713 = vrot.lane.b32.xlu0 %v2711, 64
    %v2714 = vpop.permute.xlu0 %2713
    %s2716 = scalar_lea.vmem [#allocation11], 14
    %2717 = vst.msk [vmem:[%s2716] sm:$0x3] %vm616, %v2714
    // Predicated region
    $region38: #{tpu_custom_call.1} parent=1 // pred_check
      _
    $region39: #{tpu_custom_call.1} parent=1 // pred_check_branch
      %2719 = sbr.rel (0) target = $region41
    $region40: #{tpu_custom_call.1} parent=1 // pred_region
      %s2721 = ssub.s32 256, 256
      %2722 = vsyncadd [#allocation5], %s2721
      %s2723 = sshll.u32 [#allocation11], 4
      %s2724 = int_to_ptr.vmem [resolvable:$true] %s2723
      %2729 = dma.vmem_to_hbm [thread:$0]  %s2724, 256, %s5, [#allocation5], 32, 32, 2
    $region41: #{tpu_custom_call.1} parent=1 // pred_fallthru
      _
    // Predicated region
    $region42: #{tpu_custom_call.1} parent=1 // pred_check
      _
    $region43: #{tpu_custom_call.1} parent=1 // pred_check_branch
      %2731 = sbr.rel (0) target = $region45
    $region44: #{tpu_custom_call.1} parent=1 // pred_region
      %2732 = dma.done [#allocation5], 256
    $region45: #{tpu_custom_call.1} parent=1 // pred_fallthru
      _
    %2733 = vsyncpa [#allocation4], 1
    %2734 = vsyncpa [#allocation7], 1
    %2735 = vsyncpa [#allocation10], 1
    %2736 = vsyncpa [#allocation5], 1

</llo_original>
